<compile_context>
chip_gen: v5e
topology: v5e:2x2
jax: 0.10.0
libtpu: 0.0.40
codegen_flags: <defaults>
</compile_context>

<pallas_src>
import jax
import jax.numpy as jnp
from jax import lax
from jax.experimental import pallas as pl
from jax.experimental.pallas import tpu as pltpu

EMBED = 384
NUM_HEADS = 4
HEAD_SIZE = EMBED // NUM_HEADS   # 96
HEAD_PAD = 128                   # per-head lanes after zero-padding (128-aligned)


# ---------------------------------------------------------------------------
# Fused kernel factory. grid = (batch_blocks, query_tiles)
#   x_ref     : (Bblk, T, C)        bf16 input rows for this batch block
#   wq_ref    : (C, H*HP)           bf16, scale-folded, zero-padded Q weights
#   wkv_ref   : (C, 2*H*HP)         bf16, zero-padded K|V weights
#   wproj_ref : (H*HP, C)           bf16, row-zero-padded output projection
#   b_ref     : (1, C)              f32 output-projection bias
#   o_ref     : (Bblk, TQ, C)       f32 output tile
#   kv_ref    : (Bblk, T, 2*H*HP)   bf16 VMEM scratch, K|V for the whole sequence
# ---------------------------------------------------------------------------
def _make_kernel(H, HP, TQ, TKV):
    def kernel(x_ref, wq_ref, wkv_ref, wproj_ref, b_ref, o_ref, kv_ref):
        qi = pl.program_id(1)

        # --- K/V projection for the full sequence, once per batch block ---
        @pl.when(qi == 0)
        def _():
            xb = x_ref[...]                                       # (Bblk, T, C) bf16
            kv = jnp.einsum('btc,ch->bth', xb, wkv_ref[...],
                            preferred_element_type=jnp.float32)
            kv_ref[...] = kv.astype(jnp.bfloat16)

        # --- Q projection for this query tile (1/sqrt(hs) already folded in) ---
        q_start = pl.multiple_of(qi * TQ, TQ)
        xq = x_ref[:, pl.ds(q_start, TQ), :]                      # (Bblk, TQ, C) bf16
        q = jnp.einsum('btc,ch->bth', xq, wq_ref[...],
                       preferred_element_type=jnp.float32).astype(jnp.bfloat16)

        # Causal mask for this tile (global query row vs key column), shared by heads.
        row = qi * TQ + lax.broadcasted_iota(jnp.int32, (TQ, TKV), 0)
        col = lax.broadcasted_iota(jnp.int32, (TQ, TKV), 1)
        causal = (col <= row)[None]                               # (1, TQ, TKV)

        bblk = xq.shape[0]
        C = o_ref.shape[-1]
        acc = jnp.zeros((bblk, TQ, C), jnp.float32)

        for h in range(H):                                        # static unroll, H = 4
            qh = q[:, :, h * HP:(h + 1) * HP]                     # (Bblk, TQ, HP)
            kh = kv_ref[:, :, h * HP:(h + 1) * HP]                # (Bblk, T,  HP)
            vh = kv_ref[:, :, (H + h) * HP:(H + h + 1) * HP]      # (Bblk, T,  HP)

            s = jnp.einsum('bqh,bkh->bqk', qh, kh,
                           preferred_element_type=jnp.float32)    # (Bblk, TQ, T)
            s = jnp.where(causal, s, jnp.float32(-1e30))
            s = s - jnp.max(s, axis=-1, keepdims=True)
            p = jnp.exp(s)
            inv = pl.reciprocal(jnp.sum(p, axis=-1, keepdims=True), approx=True)
            p = (p * inv).astype(jnp.bfloat16)

            ho = jnp.einsum('bqk,bkh->bqh', p, vh,
                            preferred_element_type=jnp.float32).astype(jnp.bfloat16)
            # Per-head output-projection accumulation (no concat of 96-wide pieces).
            acc = acc + jnp.einsum('bqh,hc->bqc', ho,
                                   wproj_ref[h * HP:(h + 1) * HP, :],
                                   preferred_element_type=jnp.float32)

        o_ref[...] = (acc + b_ref[...]).astype(o_ref.dtype)

    return kernel


@jax.jit
def multi_head_attention(x, wq, wk, wv, w_proj, b_proj):
    """x: (B, T, C). wq/wk/wv: (H, hs, C) (PyTorch Linear, y = x @ W.T).
    w_proj: (C, H*hs). b_proj: (C,)."""
    B, T, C = x.shape
    H, hs, _ = wq.shape
    HP = HEAD_PAD
    out_dtype = x.dtype

    # ---- tile choices ----
    if T <= 256:
        TQ = T
    else:
        assert T % 256 == 0, "for T > 256 this kernel expects T % 256 == 0"
        TQ = 256
    # Pack batch rows per grid step at small T (amortize per-step overhead).
    limit = max(1, 256 // T)
    bblk = 1
    for d in range(1, B + 1):
        if B % d == 0 and d <= limit:
            bblk = d

    # ---- one-time weight layout prep (XLA side, outside the kernel) ----
    scale = jnp.float32(hs) ** -0.5

    def pad_heads_cols(w):                         # (H, hs, C) -> (C, H*HP), zero-padded
        wt = jnp.transpose(w, (2, 0, 1))           # (C, H, hs)
        wt = jnp.pad(wt, ((0, 0), (0, 0), (0, HP - hs)))
        return wt.reshape(C, H * HP)

    w_q = (pad_heads_cols(wq) * scale).astype(jnp.bfloat16)                 # (C, H*HP)
    w_kv = jnp.concatenate([pad_heads_cols(wk), pad_heads_cols(wv)],
                           axis=1).astype(jnp.bfloat16)                      # (C, 2*H*HP)

    wp = w_proj.T.reshape(H, hs, C)                                          # (H, hs, C)
    wp = jnp.pad(wp, ((0, 0), (0, HP - hs), (0, 0)))
    w_proj_pad = wp.reshape(H * HP, C).astype(jnp.bfloat16)                  # (H*HP, C)
    bias = b_proj.reshape(1, C).astype(jnp.float32)

    x_bf = x.astype(jnp.bfloat16)

    kernel = _make_kernel(H, HP, TQ, T)
    grid = (B // bblk, T // TQ)

    return pl.pallas_call(
        kernel,
        out_shape=jax.ShapeDtypeStruct((B, T, C), out_dtype),
        grid_spec=pltpu.PrefetchScalarGridSpec(
            num_scalar_prefetch=0,
            grid=grid,
            in_specs=[
                pl.BlockSpec((bblk, T, C), lambda bi, qi: (bi, 0, 0)),
                # Grid-invariant weights/bias: single-buffered to save VMEM.
                pl.BlockSpec((C, H * HP), lambda bi, qi: (0, 0),
                             pipeline_mode=pl.Buffered(1)),
                pl.BlockSpec((C, 2 * H * HP), lambda bi, qi: (0, 0),
                             pipeline_mode=pl.Buffered(1)),
                pl.BlockSpec((H * HP, C), lambda bi, qi: (0, 0),
                             pipeline_mode=pl.Buffered(1)),
                pl.BlockSpec((1, C), lambda bi, qi: (0, 0),
                             pipeline_mode=pl.Buffered(1)),
            ],
            out_specs=pl.BlockSpec((bblk, TQ, C), lambda bi, qi: (bi, qi, 0)),
            scratch_shapes=[pltpu.VMEM((bblk, T, 2 * H * HP), jnp.bfloat16)],
        ),
        compiler_params=pltpu.CompilerParams(
            dimension_semantics=("parallel", "arbitrary"),
            vmem_limit_bytes=48 * 1024 * 1024,
        ),
    )(x_bf, w_q, w_kv, w_proj_pad, bias)


# ---------------------------------------------------------------------------
# Pure-JAX f32 reference (mirrors the PyTorch forward, dropout = identity)
# ---------------------------------------------------------------------------
def reference(x, wq, wk, wv, w_proj, b_proj):
    B, T, C = x.shape
    heads = []
    for h in range(wq.shape[0]):
        q = x @ wq[h].T
        k = x @ wk[h].T
        v = x @ wv[h].T
        wei = (q @ jnp.swapaxes(k, -2, -1)) * (k.shape[-1] ** -0.5)
        mask = jnp.tril(jnp.ones((T, T), dtype=bool))
        wei = jnp.where(mask, wei, -jnp.inf)
        wei = jax.nn.softmax(wei, axis=-1)
        heads.append(wei @ v)
    cat = jnp.concatenate(heads, axis=-1)
    return cat @ w_proj.T + b_proj


if __name__ == "__main__":
    key = jax.random.PRNGKey(0)
    B, T = 2, 8
    C, H, hs = EMBED, NUM_HEADS, HEAD_SIZE

    k0, k1, k2, k3, k4, kx = jax.random.split(key, 6)
    scale_in = 1.0 / jnp.sqrt(jnp.float32(C))
    wq = jax.random.normal(k0, (H, hs, C), jnp.float32) * scale_in
    wk = jax.random.normal(k1, (H, hs, C), jnp.float32) * scale_in
    wv = jax.random.normal(k2, (H, hs, C), jnp.float32) * scale_in
    w_proj = jax.random.normal(k3, (C, H * hs), jnp.float32) * (1.0 / jnp.sqrt(jnp.float32(H * hs)))
    b_proj = jax.random.normal(k4, (C,), jnp.float32) * 0.01
    x = jax.random.normal(kx, (B, T, C), jnp.float32)

    out = jax.block_until_ready(multi_head_attention(x, wq, wk, wv, w_proj, b_proj))
    ref = reference(x, wq, wk, wv, w_proj, b_proj)

    assert out.shape == (B, T, C), out.shape
    # Tolerance accommodates bf16 MXU operands (f32 accumulation) and the EUP
    # approximate reciprocal in the softmax; structural bugs would show O(1) error.
    max_err = float(jnp.max(jnp.abs(out - ref)))
    assert jnp.allclose(out, ref, atol=6e-2, rtol=6e-2), max_err
    print("KERNEL_OK")
</pallas_src>

<mosaic_0001>
module attributes {stable_mosaic.version = 11 : i64} {
  func.func @kernel(%arg0: i32, %arg1: i32, %arg2: memref<2x8x384xbf16, #tpu.memory_space<vmem>>, %arg3: memref<384x512xbf16, #tpu.memory_space<vmem>>, %arg4: memref<384x1024xbf16, #tpu.memory_space<vmem>>, %arg5: memref<512x384xbf16, #tpu.memory_space<vmem>>, %arg6: memref<1x384xf32, #tpu.memory_space<vmem>>, %arg7: memref<2x8x384xf32, #tpu.memory_space<vmem>>, %arg8: memref<2x8x1024xbf16, #tpu.memory_space<vmem>>) attributes {dimension_semantics = [#tpu.dimension_semantics<parallel>, #tpu.dimension_semantics<arbitrary>], iteration_bounds = array<i64: 1, 1>, scalar_prefetch = 0 : i64, scratch_operands = 1 : i64, tpu.core_type = #tpu.core_type<tc>, window_params = [{transform_indices = @transform_0, window_bounds = array<i64: 2, 8, 384>}, {pipeline_mode = #tpu.pipeline_mode<synchronous>, transform_indices = @transform_1, window_bounds = array<i64: 384, 512>}, {pipeline_mode = #tpu.pipeline_mode<synchronous>, transform_indices = @transform_2, window_bounds = array<i64: 384, 1024>}, {pipeline_mode = #tpu.pipeline_mode<synchronous>, transform_indices = @transform_3, window_bounds = array<i64: 512, 384>}, {pipeline_mode = #tpu.pipeline_mode<synchronous>, transform_indices = @transform_4, window_bounds = array<i64: 1, 384>}, {transform_indices = @transform_5, window_bounds = array<i64: 2, 8, 384>}]} {
    %c0_i32 = arith.constant 0 : i32
    %0 = arith.cmpi eq, %arg1, %c0_i32 : i32
    %1 = arith.extui %0 : i1 to i32
    %c0_i32_0 = arith.constant 0 : i32
    %2 = arith.cmpi ne, %1, %c0_i32_0 : i32
    scf.if %2 {
      %c0_60 = arith.constant 0 : index
      %c0_61 = arith.constant 0 : index
      %c0_62 = arith.constant 0 : index
      %119 = vector.load %arg2[%c0_60, %c0_61, %c0_62] : memref<2x8x384xbf16, #tpu.memory_space<vmem>>, vector<2x8x384xbf16>
      %c0_63 = arith.constant 0 : index
      %c0_64 = arith.constant 0 : index
      %120 = vector.load %arg4[%c0_63, %c0_64] : memref<384x1024xbf16, #tpu.memory_space<vmem>>, vector<384x1024xbf16>
      "tpu.trace_start"() <{level = 10 : i32, message = "btc,ch->bth"}> : () -> ()
      %cst_65 = arith.constant dense<0.000000e+00> : vector<2x8x1024xf32>
      %121 = tpu.matmul %119, %120, %cst_65 {dimension_numbers = #tpu.dot_dimension_numbers<[2], [0], [0, 1], [1], [0, 0, 0, 1, 1, 1], [], []>} : vector<2x8x384xbf16>, vector<384x1024xbf16>, vector<2x8x1024xf32> -> vector<2x8x1024xf32>
      "tpu.trace_stop"() : () -> ()
      %122 = arith.truncf %121 : vector<2x8x1024xf32> to vector<2x8x1024xbf16>
      %c0_66 = arith.constant 0 : index
      %c0_67 = arith.constant 0 : index
      %c0_68 = arith.constant 0 : index
      %123 = vector.load %arg8[%c0_66, %c0_67, %c0_68] : memref<2x8x1024xbf16, #tpu.memory_space<vmem>>, vector<2x8x1024xbf16>
      tpu.vector_store %arg8[%c0_66, %c0_67, %c0_68], %122 {strides = array<i32>} : memref<2x8x1024xbf16, #tpu.memory_space<vmem>>, vector<2x8x1024xbf16>,
    } else {
    }
    %c8_i32 = arith.constant 8 : i32
    %3 = arith.muli %arg1, %c8_i32 : i32
    %4 = tpu.assume_multiple %3, 8 : i32
    %c0 = arith.constant 0 : index
    %5 = arith.index_cast %4 : i32 to index
    %c0_1 = arith.constant 0 : index
    %6 = vector.load %arg2[%c0, %5, %c0_1] : memref<2x8x384xbf16, #tpu.memory_space<vmem>>, vector<2x8x384xbf16>
    %c0_2 = arith.constant 0 : index
    %c0_3 = arith.constant 0 : index
    %7 = vector.load %arg3[%c0_2, %c0_3] : memref<384x512xbf16, #tpu.memory_space<vmem>>, vector<384x512xbf16>
    "tpu.trace_start"() <{level = 10 : i32, message = "btc,ch->bth"}> : () -> ()
    %cst = arith.constant dense<0.000000e+00> : vector<2x8x512xf32>
    %8 = tpu.matmul %6, %7, %cst {dimension_numbers = #tpu.dot_dimension_numbers<[2], [0], [0, 1], [1], [0, 0, 0, 1, 1, 1], [], []>} : vector<2x8x384xbf16>, vector<384x512xbf16>, vector<2x8x512xf32> -> vector<2x8x512xf32>
    "tpu.trace_stop"() : () -> ()
    %9 = arith.truncf %8 : vector<2x8x512xf32> to vector<2x8x512xbf16>
    %c8_i32_4 = arith.constant 8 : i32
    %10 = arith.muli %arg1, %c8_i32_4 : i32
    %11 = tpu.iota {dimensions = array<i32: 0>} : vector<8x8xi32>
    %12 = vector.broadcast %10 : i32 to vector<8x8xi32>
    %13 = arith.addi %12, %11 : vector<8x8xi32>
    %14 = tpu.iota {dimensions = array<i32: 1>} : vector<8x8xi32>
    %15 = arith.cmpi sle, %14, %13 : vector<8x8xi32>
    %16 = vector.shape_cast %15 : vector<8x8xi1> to vector<1x8x8xi1>
    %cst_5 = arith.constant 0.000000e+00 : f32
    %17 = vector.broadcast %cst_5 : f32 to vector<2x8x384xf32>
    %18 = vector.extract_strided_slice %9 {offsets = [0, 0, 0], sizes = [2, 8, 128], strides = [1, 1, 1]} : vector<2x8x512xbf16> to vector<2x8x128xbf16>
    %c0_6 = arith.constant 0 : index
    %c0_7 = arith.constant 0 : index
    %c0_8 = arith.constant 0 : index
    %19 = vector.load %arg8[%c0_6, %c0_7, %c0_8] : memref<2x8x1024xbf16, #tpu.memory_space<vmem>>, vector<2x8x128xbf16>
    %c0_9 = arith.constant 0 : index
    %c0_10 = arith.constant 0 : index
    %c512 = arith.constant 512 : index
    %20 = vector.load %arg8[%c0_9, %c0_10, %c512] : memref<2x8x1024xbf16, #tpu.memory_space<vmem>>, vector<2x8x128xbf16>
    "tpu.trace_start"() <{level = 10 : i32, message = "bqh,bkh->bqk"}> : () -> ()
    %cst_11 = arith.constant dense<0.000000e+00> : vector<2x8x8xf32>
    %21 = tpu.matmul %18, %19, %cst_11 {dimension_numbers = #tpu.dot_dimension_numbers<[2], [2], [1], [1], [0, 0, 0, 1, 1, 1], [0], [0]>} : vector<2x8x128xbf16>, vector<2x8x128xbf16>, vector<2x8x8xf32> -> vector<2x8x8xf32>
    %cst_12 = arith.constant -1.000000e+30 : f32
    "tpu.trace_stop"() : () -> ()
    %22 = vector.shape_cast %16 : vector<1x8x8xi1> to vector<1x8x8xi1>
    %23 = vector.broadcast %22 : vector<1x8x8xi1> to vector<2x8x8xi1>
    %24 = vector.broadcast %cst_12 : f32 to vector<2x8x8xf32>
    %25 = arith.select %23, %21, %24 : vector<2x8x8xi1>, vector<2x8x8xf32>
    %cst_13 = arith.constant dense<0xFF800000> : vector<2x8xf32>
    %26 = vector.multi_reduction <maximumf>, %25, %cst_13 [2] : vector<2x8x8xf32> to vector<2x8xf32>
    %27 = vector.shape_cast %26 : vector<2x8xf32> to vector<2x8x1xf32>
    %28 = vector.broadcast %27 : vector<2x8x1xf32> to vector<2x8x8xf32>
    %29 = arith.subf %25, %28 : vector<2x8x8xf32>
    %30 = math.exp %29 : vector<2x8x8xf32>
    %cst_14 = arith.constant dense<0.000000e+00> : vector<2x8xf32>
    %31 = vector.multi_reduction <add>, %30, %cst_14 [2] : vector<2x8x8xf32> to vector<2x8xf32>
    %32 = vector.shape_cast %31 : vector<2x8xf32> to vector<2x8x1xf32>
    %33 = tpu.reciprocal %32 {approx = true} : vector<2x8x1xf32> -> vector<2x8x1xf32>
    %34 = vector.broadcast %33 : vector<2x8x1xf32> to vector<2x8x8xf32>
    %35 = arith.mulf %30, %34 : vector<2x8x8xf32>
    %36 = arith.truncf %35 : vector<2x8x8xf32> to vector<2x8x8xbf16>
    "tpu.trace_start"() <{level = 10 : i32, message = "bqk,bkh->bqh"}> : () -> ()
    %cst_15 = arith.constant dense<0.000000e+00> : vector<2x8x128xf32>
    %37 = tpu.matmul %36, %20, %cst_15 {dimension_numbers = #tpu.dot_dimension_numbers<[2], [1], [1], [2], [0, 0, 0, 1, 1, 2], [0], [0]>} : vector<2x8x8xbf16>, vector<2x8x128xbf16>, vector<2x8x128xf32> -> vector<2x8x128xf32>
    "tpu.trace_stop"() : () -> ()
    %38 = arith.truncf %37 : vector<2x8x128xf32> to vector<2x8x128xbf16>
    %c0_16 = arith.constant 0 : index
    %c0_17 = arith.constant 0 : index
    %39 = vector.load %arg5[%c0_16, %c0_17] : memref<512x384xbf16, #tpu.memory_space<vmem>>, vector<128x384xbf16>
    "tpu.trace_start"() <{level = 10 : i32, message = "bqh,hc->bqc"}> : () -> ()
    %cst_18 = arith.constant dense<0.000000e+00> : vector<2x8x384xf32>
    %40 = tpu.matmul %38, %39, %cst_18 {dimension_numbers = #tpu.dot_dimension_numbers<[2], [0], [0, 1], [1], [0, 0, 0, 1, 1, 1], [], []>} : vector<2x8x128xbf16>, vector<128x384xbf16>, vector<2x8x384xf32> -> vector<2x8x384xf32>
    "tpu.trace_stop"() : () -> ()
    %41 = arith.addf %17, %40 : vector<2x8x384xf32>
    %42 = vector.extract_strided_slice %9 {offsets = [0, 0, 128], sizes = [2, 8, 128], strides = [1, 1, 1]} : vector<2x8x512xbf16> to vector<2x8x128xbf16>
    %c0_19 = arith.constant 0 : index
    %c0_20 = arith.constant 0 : index
    %c128 = arith.constant 128 : index
    %43 = vector.load %arg8[%c0_19, %c0_20, %c128] : memref<2x8x1024xbf16, #tpu.memory_space<vmem>>, vector<2x8x128xbf16>
    %c0_21 = arith.constant 0 : index
    %c0_22 = arith.constant 0 : index
    %c640 = arith.constant 640 : index
    %44 = vector.load %arg8[%c0_21, %c0_22, %c640] : memref<2x8x1024xbf16, #tpu.memory_space<vmem>>, vector<2x8x128xbf16>
    "tpu.trace_start"() <{level = 10 : i32, message = "bqh,bkh->bqk"}> : () -> ()
    %cst_23 = arith.constant dense<0.000000e+00> : vector<2x8x8xf32>
    %45 = tpu.matmul %42, %43, %cst_23 {dimension_numbers = #tpu.dot_dimension_numbers<[2], [2], [1], [1], [0, 0, 0, 1, 1, 1], [0], [0]>} : vector<2x8x128xbf16>, vector<2x8x128xbf16>, vector<2x8x8xf32> -> vector<2x8x8xf32>
    %cst_24 = arith.constant -1.000000e+30 : f32
    "tpu.trace_stop"() : () -> ()
    %46 = vector.shape_cast %16 : vector<1x8x8xi1> to vector<1x8x8xi1>
    %47 = vector.broadcast %46 : vector<1x8x8xi1> to vector<2x8x8xi1>
    %48 = vector.broadcast %cst_24 : f32 to vector<2x8x8xf32>
    %49 = arith.select %47, %45, %48 : vector<2x8x8xi1>, vector<2x8x8xf32>
    %cst_25 = arith.constant dense<0xFF800000> : vector<2x8xf32>
    %50 = vector.multi_reduction <maximumf>, %49, %cst_25 [2] : vector<2x8x8xf32> to vector<2x8xf32>
    %51 = vector.shape_cast %50 : vector<2x8xf32> to vector<2x8x1xf32>
    %52 = vector.broadcast %51 : vector<2x8x1xf32> to vector<2x8x8xf32>
    %53 = arith.subf %49, %52 : vector<2x8x8xf32>
    %54 = math.exp %53 : vector<2x8x8xf32>
    %cst_26 = arith.constant dense<0.000000e+00> : vector<2x8xf32>
    %55 = vector.multi_reduction <add>, %54, %cst_26 [2] : vector<2x8x8xf32> to vector<2x8xf32>
    %56 = vector.shape_cast %55 : vector<2x8xf32> to vector<2x8x1xf32>
    %57 = tpu.reciprocal %56 {approx = true} : vector<2x8x1xf32> -> vector<2x8x1xf32>
    %58 = vector.broadcast %57 : vector<2x8x1xf32> to vector<2x8x8xf32>
    %59 = arith.mulf %54, %58 : vector<2x8x8xf32>
    %60 = arith.truncf %59 : vector<2x8x8xf32> to vector<2x8x8xbf16>
    "tpu.trace_start"() <{level = 10 : i32, message = "bqk,bkh->bqh"}> : () -> ()
    %cst_27 = arith.constant dense<0.000000e+00> : vector<2x8x128xf32>
    %61 = tpu.matmul %60, %44, %cst_27 {dimension_numbers = #tpu.dot_dimension_numbers<[2], [1], [1], [2], [0, 0, 0, 1, 1, 2], [0], [0]>} : vector<2x8x8xbf16>, vector<2x8x128xbf16>, vector<2x8x128xf32> -> vector<2x8x128xf32>
    "tpu.trace_stop"() : () -> ()
    %62 = arith.truncf %61 : vector<2x8x128xf32> to vector<2x8x128xbf16>
    %c128_28 = arith.constant 128 : index
    %c0_29 = arith.constant 0 : index
    %63 = vector.load %arg5[%c128_28, %c0_29] : memref<512x384xbf16, #tpu.memory_space<vmem>>, vector<128x384xbf16>
    "tpu.trace_start"() <{level = 10 : i32, message = "bqh,hc->bqc"}> : () -> ()
    %cst_30 = arith.constant dense<0.000000e+00> : vector<2x8x384xf32>
    %64 = tpu.matmul %62, %63, %cst_30 {dimension_numbers = #tpu.dot_dimension_numbers<[2], [0], [0, 1], [1], [0, 0, 0, 1, 1, 1], [], []>} : vector<2x8x128xbf16>, vector<128x384xbf16>, vector<2x8x384xf32> -> vector<2x8x384xf32>
    "tpu.trace_stop"() : () -> ()
    %65 = arith.addf %41, %64 : vector<2x8x384xf32>
    %66 = vector.extract_strided_slice %9 {offsets = [0, 0, 256], sizes = [2, 8, 128], strides = [1, 1, 1]} : vector<2x8x512xbf16> to vector<2x8x128xbf16>
    %c0_31 = arith.constant 0 : index
    %c0_32 = arith.constant 0 : index
    %c256 = arith.constant 256 : index
    %67 = vector.load %arg8[%c0_31, %c0_32, %c256] : memref<2x8x1024xbf16, #tpu.memory_space<vmem>>, vector<2x8x128xbf16>
    %c0_33 = arith.constant 0 : index
    %c0_34 = arith.constant 0 : index
    %c768 = arith.constant 768 : index
    %68 = vector.load %arg8[%c0_33, %c0_34, %c768] : memref<2x8x1024xbf16, #tpu.memory_space<vmem>>, vector<2x8x128xbf16>
    "tpu.trace_start"() <{level = 10 : i32, message = "bqh,bkh->bqk"}> : () -> ()
    %cst_35 = arith.constant dense<0.000000e+00> : vector<2x8x8xf32>
    %69 = tpu.matmul %66, %67, %cst_35 {dimension_numbers = #tpu.dot_dimension_numbers<[2], [2], [1], [1], [0, 0, 0, 1, 1, 1], [0], [0]>} : vector<2x8x128xbf16>, vector<2x8x128xbf16>, vector<2x8x8xf32> -> vector<2x8x8xf32>
    %cst_36 = arith.constant -1.000000e+30 : f32
    "tpu.trace_stop"() : () -> ()
    %70 = vector.shape_cast %16 : vector<1x8x8xi1> to vector<1x8x8xi1>
    %71 = vector.broadcast %70 : vector<1x8x8xi1> to vector<2x8x8xi1>
    %72 = vector.broadcast %cst_36 : f32 to vector<2x8x8xf32>
    %73 = arith.select %71, %69, %72 : vector<2x8x8xi1>, vector<2x8x8xf32>
    %cst_37 = arith.constant dense<0xFF800000> : vector<2x8xf32>
    %74 = vector.multi_reduction <maximumf>, %73, %cst_37 [2] : vector<2x8x8xf32> to vector<2x8xf32>
    %75 = vector.shape_cast %74 : vector<2x8xf32> to vector<2x8x1xf32>
    %76 = vector.broadcast %75 : vector<2x8x1xf32> to vector<2x8x8xf32>
    %77 = arith.subf %73, %76 : vector<2x8x8xf32>
    %78 = math.exp %77 : vector<2x8x8xf32>
    %cst_38 = arith.constant dense<0.000000e+00> : vector<2x8xf32>
    %79 = vector.multi_reduction <add>, %78, %cst_38 [2] : vector<2x8x8xf32> to vector<2x8xf32>
    %80 = vector.shape_cast %79 : vector<2x8xf32> to vector<2x8x1xf32>
    %81 = tpu.reciprocal %80 {approx = true} : vector<2x8x1xf32> -> vector<2x8x1xf32>
    %82 = vector.broadcast %81 : vector<2x8x1xf32> to vector<2x8x8xf32>
    %83 = arith.mulf %78, %82 : vector<2x8x8xf32>
    %84 = arith.truncf %83 : vector<2x8x8xf32> to vector<2x8x8xbf16>
    "tpu.trace_start"() <{level = 10 : i32, message = "bqk,bkh->bqh"}> : () -> ()
    %cst_39 = arith.constant dense<0.000000e+00> : vector<2x8x128xf32>
    %85 = tpu.matmul %84, %68, %cst_39 {dimension_numbers = #tpu.dot_dimension_numbers<[2], [1], [1], [2], [0, 0, 0, 1, 1, 2], [0], [0]>} : vector<2x8x8xbf16>, vector<2x8x128xbf16>, vector<2x8x128xf32> -> vector<2x8x128xf32>
    "tpu.trace_stop"() : () -> ()
    %86 = arith.truncf %85 : vector<2x8x128xf32> to vector<2x8x128xbf16>
    %c256_40 = arith.constant 256 : index
    %c0_41 = arith.constant 0 : index
    %87 = vector.load %arg5[%c256_40, %c0_41] : memref<512x384xbf16, #tpu.memory_space<vmem>>, vector<128x384xbf16>
    "tpu.trace_start"() <{level = 10 : i32, message = "bqh,hc->bqc"}> : () -> ()
    %cst_42 = arith.constant dense<0.000000e+00> : vector<2x8x384xf32>
    %88 = tpu.matmul %86, %87, %cst_42 {dimension_numbers = #tpu.dot_dimension_numbers<[2], [0], [0, 1], [1], [0, 0, 0, 1, 1, 1], [], []>} : vector<2x8x128xbf16>, vector<128x384xbf16>, vector<2x8x384xf32> -> vector<2x8x384xf32>
    "tpu.trace_stop"() : () -> ()
    %89 = arith.addf %65, %88 : vector<2x8x384xf32>
    %90 = vector.extract_strided_slice %9 {offsets = [0, 0, 384], sizes = [2, 8, 128], strides = [1, 1, 1]} : vector<2x8x512xbf16> to vector<2x8x128xbf16>
    %c0_43 = arith.constant 0 : index
    %c0_44 = arith.constant 0 : index
    %c384 = arith.constant 384 : index
    %91 = vector.load %arg8[%c0_43, %c0_44, %c384] : memref<2x8x1024xbf16, #tpu.memory_space<vmem>>, vector<2x8x128xbf16>
    %c0_45 = arith.constant 0 : index
    %c0_46 = arith.constant 0 : index
    %c896 = arith.constant 896 : index
    %92 = vector.load %arg8[%c0_45, %c0_46, %c896] : memref<2x8x1024xbf16, #tpu.memory_space<vmem>>, vector<2x8x128xbf16>
    "tpu.trace_start"() <{level = 10 : i32, message = "bqh,bkh->bqk"}> : () -> ()
    %cst_47 = arith.constant dense<0.000000e+00> : vector<2x8x8xf32>
    %93 = tpu.matmul %90, %91, %cst_47 {dimension_numbers = #tpu.dot_dimension_numbers<[2], [2], [1], [1], [0, 0, 0, 1, 1, 1], [0], [0]>} : vector<2x8x128xbf16>, vector<2x8x128xbf16>, vector<2x8x8xf32> -> vector<2x8x8xf32>
    %cst_48 = arith.constant -1.000000e+30 : f32
    "tpu.trace_stop"() : () -> ()
    %94 = vector.shape_cast %16 : vector<1x8x8xi1> to vector<1x8x8xi1>
    %95 = vector.broadcast %94 : vector<1x8x8xi1> to vector<2x8x8xi1>
    %96 = vector.broadcast %cst_48 : f32 to vector<2x8x8xf32>
    %97 = arith.select %95, %93, %96 : vector<2x8x8xi1>, vector<2x8x8xf32>
    %cst_49 = arith.constant dense<0xFF800000> : vector<2x8xf32>
    %98 = vector.multi_reduction <maximumf>, %97, %cst_49 [2] : vector<2x8x8xf32> to vector<2x8xf32>
    %99 = vector.shape_cast %98 : vector<2x8xf32> to vector<2x8x1xf32>
    %100 = vector.broadcast %99 : vector<2x8x1xf32> to vector<2x8x8xf32>
    %101 = arith.subf %97, %100 : vector<2x8x8xf32>
    %102 = math.exp %101 : vector<2x8x8xf32>
    %cst_50 = arith.constant dense<0.000000e+00> : vector<2x8xf32>
    %103 = vector.multi_reduction <add>, %102, %cst_50 [2] : vector<2x8x8xf32> to vector<2x8xf32>
    %104 = vector.shape_cast %103 : vector<2x8xf32> to vector<2x8x1xf32>
    %105 = tpu.reciprocal %104 {approx = true} : vector<2x8x1xf32> -> vector<2x8x1xf32>
    %106 = vector.broadcast %105 : vector<2x8x1xf32> to vector<2x8x8xf32>
    %107 = arith.mulf %102, %106 : vector<2x8x8xf32>
    %108 = arith.truncf %107 : vector<2x8x8xf32> to vector<2x8x8xbf16>
    "tpu.trace_start"() <{level = 10 : i32, message = "bqk,bkh->bqh"}> : () -> ()
    %cst_51 = arith.constant dense<0.000000e+00> : vector<2x8x128xf32>
    %109 = tpu.matmul %108, %92, %cst_51 {dimension_numbers = #tpu.dot_dimension_numbers<[2], [1], [1], [2], [0, 0, 0, 1, 1, 2], [0], [0]>} : vector<2x8x8xbf16>, vector<2x8x128xbf16>, vector<2x8x128xf32> -> vector<2x8x128xf32>
    "tpu.trace_stop"() : () -> ()
    %110 = arith.truncf %109 : vector<2x8x128xf32> to vector<2x8x128xbf16>
    %c384_52 = arith.constant 384 : index
    %c0_53 = arith.constant 0 : index
    %111 = vector.load %arg5[%c384_52, %c0_53] : memref<512x384xbf16, #tpu.memory_space<vmem>>, vector<128x384xbf16>
    "tpu.trace_start"() <{level = 10 : i32, message = "bqh,hc->bqc"}> : () -> ()
    %cst_54 = arith.constant dense<0.000000e+00> : vector<2x8x384xf32>
    %112 = tpu.matmul %110, %111, %cst_54 {dimension_numbers = #tpu.dot_dimension_numbers<[2], [0], [0, 1], [1], [0, 0, 0, 1, 1, 1], [], []>} : vector<2x8x128xbf16>, vector<128x384xbf16>, vector<2x8x384xf32> -> vector<2x8x384xf32>
    "tpu.trace_stop"() : () -> ()
    %113 = arith.addf %89, %112 : vector<2x8x384xf32>
    %c0_55 = arith.constant 0 : index
    %c0_56 = arith.constant 0 : index
    %114 = vector.load %arg6[%c0_55, %c0_56] : memref<1x384xf32, #tpu.memory_space<vmem>>, vector<1x384xf32>
    %115 = vector.shape_cast %114 : vector<1x384xf32> to vector<1x1x384xf32>
    %116 = vector.broadcast %115 : vector<1x1x384xf32> to vector<2x8x384xf32>
    %117 = arith.addf %113, %116 : vector<2x8x384xf32>
    %c0_57 = arith.constant 0 : index
    %c0_58 = arith.constant 0 : index
    %c0_59 = arith.constant 0 : index
    %118 = vector.load %arg7[%c0_57, %c0_58, %c0_59] : memref<2x8x384xf32, #tpu.memory_space<vmem>>, vector<2x8x384xf32>
    tpu.vector_store %arg7[%c0_57, %c0_58, %c0_59], %117 {strides = array<i32>} : memref<2x8x384xf32, #tpu.memory_space<vmem>>, vector<2x8x384xf32>,
    return
  }
  func.func @transform_0(%arg0: i32, %arg1: i32) -> (i32, i32, i32) {
    %c0_i32 = arith.constant 0 : i32
    %c0_i32_0 = arith.constant 0 : i32
    %c0_i32_1 = arith.constant 0 : i32
    return %arg0, %c0_i32, %c0_i32_0 : i32, i32, i32
  }
  func.func @transform_1(%arg0: i32, %arg1: i32) -> (i32, i32) {
    %c0_i32 = arith.constant 0 : i32
    %c0_i32_0 = arith.constant 0 : i32
    %c0_i32_1 = arith.constant 0 : i32
    return %c0_i32, %c0_i32_0 : i32, i32
  }
  func.func @transform_2(%arg0: i32, %arg1: i32) -> (i32, i32) {
    %c0_i32 = arith.constant 0 : i32
    %c0_i32_0 = arith.constant 0 : i32
    %c0_i32_1 = arith.constant 0 : i32
    return %c0_i32, %c0_i32_0 : i32, i32
  }
  func.func @transform_3(%arg0: i32, %arg1: i32) -> (i32, i32) {
    %c0_i32 = arith.constant 0 : i32
    %c0_i32_0 = arith.constant 0 : i32
    %c0_i32_1 = arith.constant 0 : i32
    return %c0_i32, %c0_i32_0 : i32, i32
  }
  func.func @transform_4(%arg0: i32, %arg1: i32) -> (i32, i32) {
    %c0_i32 = arith.constant 0 : i32
    %c0_i32_0 = arith.constant 0 : i32
    %c0_i32_1 = arith.constant 0 : i32
    return %c0_i32, %c0_i32_0 : i32, i32
  }
  func.func @transform_5(%arg0: i32, %arg1: i32) -> (i32, i32, i32) {
    %c0_i32 = arith.constant 0 : i32
    %c0_i32_0 = arith.constant 0 : i32
    return %arg0, %arg1, %c0_i32 : i32, i32, i32
  }
}

</mosaic_0001>

<llo_original>
// kernel: multi_head_attention.1
$region0: #{multi_head_attention.1}
  #allocation0 [shape = 'u32[]', space=smem, size = 0x4, offset = 0x4, fixed_abs, tag = 'smem constant byte address 0x4 - core index']
  #allocation1 [shape = 'u32[72,128]{1,0:T(1,128)}', space=vmem, size = 0x9000, scoped, tag = 'internal scratch']
  #allocation2 [shape = 'bf16[2,8,1024]{2,1,0:T(8,128)(2,1)}', space=vmem, size = 0x8000, scoped, tag = 'scratch operand']
  %s0 = inlined_call_operand.vmem [shape: bf16[2,8,384], index: 0, kind: input, shape index: {}]
  %s1 = inlined_call_operand.vmem [shape: bf16[384,512], index: 1, kind: input, shape index: {}]
  %s2 = inlined_call_operand.vmem [shape: bf16[384,1024], index: 2, kind: input, shape index: {}]
  %s3 = inlined_call_operand.vmem [shape: bf16[512,384], index: 3, kind: input, shape index: {}]
  %s4 = inlined_call_operand.vmem [shape: f32[1,384], index: 4, kind: input, shape index: {}]
  %s5 = inlined_call_operand.hbm [shape: f32[2,8,384], index: 5, kind: output, shape index: {}]
  %s6 = sld [smem:[#allocation0]]
  $region34: #{multi_head_attention.1} parent=0
    _
  %s8 = ssub.s32 1, %s6
  %s9 = scalar_select 0, %s8, %s6
  $region1: #{multi_head_attention.1} parent=0
    #allocation3 [shape = 'u8[24576]{0}', space=vmem, size = 0x6000, scoped, tag = 'output window, operand 0, single buffered']
    #allocation4 [shape = 's32[1]{0}', space=sflag, size = 0x4, scoped, tag = 'scoped memory for multi_head_attention.1']
    %10 = vsyncpa [#allocation4], 0
    // Predicated region
    $region2: #{multi_head_attention.1} parent=1 // pred_check
      _
    $region3: #{multi_head_attention.1} parent=1 // pred_check_branch
      %12 = sbr.rel (0) target = $region5
    $region4: #{multi_head_attention.1} parent=1 // pred_region
      _
    $region5: #{multi_head_attention.1} parent=1 // pred_fallthru
      _
    // Predicated region
    $region6: #{multi_head_attention.1} parent=1 // pred_check
      _
    $region7: #{multi_head_attention.1} parent=1 // pred_check_branch
      %14 = sbr.rel (0) target = $region9
    $region8: #{multi_head_attention.1} parent=1 // pred_region
      _
    $region9: #{multi_head_attention.1} parent=1 // pred_fallthru
      _
    // Predicated region
    $region10: #{multi_head_attention.1} parent=1 // pred_check
      _
    $region11: #{multi_head_attention.1} parent=1 // pred_check_branch
      %16 = sbr.rel (0) target = $region13
    $region12: #{multi_head_attention.1} parent=1 // pred_region
      _
    $region13: #{multi_head_attention.1} parent=1 // pred_fallthru
      _
    // Predicated region
    $region14: #{multi_head_attention.1} parent=1 // pred_check
      _
    $region15: #{multi_head_attention.1} parent=1 // pred_check_branch
      %18 = sbr.rel (0) target = $region17
    $region16: #{multi_head_attention.1} parent=1 // pred_region
      _
    $region17: #{multi_head_attention.1} parent=1 // pred_fallthru
      _
    // Predicated region
    $region18: #{multi_head_attention.1} parent=1 // pred_check
      _
    $region19: #{multi_head_attention.1} parent=1 // pred_check_branch
      %20 = sbr.rel (0) target = $region21
    $region20: #{multi_head_attention.1} parent=1 // pred_region
      _
    $region21: #{multi_head_attention.1} parent=1 // pred_fallthru
      _
    %p22 = scmp.eq.s32.totalorder 0, 0
    // Predicated region
    $region22: #{multi_head_attention.1} parent=1 // pred_check
      %p23 = pneg %p22
    $region23: #{multi_head_attention.1} parent=1 // pred_check_branch
      %25 = sbr.rel (%p23) target = $region25
    $region24: #{multi_head_attention.1} parent=1 // pred_region
      %v26 = vld [vmem:[%s0] sm:$0xff]
      %v27 = vld [vmem:[%s0 + $0x8] sm:$0xf]
      %v28 = vld [vmem:[%s0 + $0xc] sm:$0xff]
      %v29 = vld [vmem:[%s0 + $0x14] sm:$0xf]
      %v30 = vld [vmem:[%s2] sm:$0xff]
      %v31 = vld [vmem:[%s2 + $0x8] sm:$0xff]
      %v32 = vld [vmem:[%s2 + $0x10] sm:$0xff]
      %v33 = vld [vmem:[%s2 + $0x18] sm:$0xff]
      %v34 = vld [vmem:[%s2 + $0x20] sm:$0xff]
      %v35 = vld [vmem:[%s2 + $0x28] sm:$0xff]
      %v36 = vld [vmem:[%s2 + $0x30] sm:$0xff]
      %v37 = vld [vmem:[%s2 + $0x38] sm:$0xff]
      %v38 = vld [vmem:[%s2 + $0x40] sm:$0xff]
      %v39 = vld [vmem:[%s2 + $0x48] sm:$0xff]
      %v40 = vld [vmem:[%s2 + $0x50] sm:$0xff]
      %v41 = vld [vmem:[%s2 + $0x58] sm:$0xff]
      %v42 = vld [vmem:[%s2 + $0x60] sm:$0xff]
      %v43 = vld [vmem:[%s2 + $0x68] sm:$0xff]
      %v44 = vld [vmem:[%s2 + $0x70] sm:$0xff]
      %v45 = vld [vmem:[%s2 + $0x78] sm:$0xff]
      %v46 = vld [vmem:[%s2 + $0x80] sm:$0xff]
      %v47 = vld [vmem:[%s2 + $0x88] sm:$0xff]
      %v48 = vld [vmem:[%s2 + $0x90] sm:$0xff]
      %v49 = vld [vmem:[%s2 + $0x98] sm:$0xff]
      %v50 = vld [vmem:[%s2 + $0xa0] sm:$0xff]
      %v51 = vld [vmem:[%s2 + $0xa8] sm:$0xff]
      %v52 = vld [vmem:[%s2 + $0xb0] sm:$0xff]
      %v53 = vld [vmem:[%s2 + $0xb8] sm:$0xff]
      %v54 = vld [vmem:[%s2 + $0xc0] sm:$0xff]
      %v55 = vld [vmem:[%s2 + $0xc8] sm:$0xff]
      %v56 = vld [vmem:[%s2 + $0xd0] sm:$0xff]
      %v57 = vld [vmem:[%s2 + $0xd8] sm:$0xff]
      %v58 = vld [vmem:[%s2 + $0xe0] sm:$0xff]
      %v59 = vld [vmem:[%s2 + $0xe8] sm:$0xff]
      %v60 = vld [vmem:[%s2 + $0xf0] sm:$0xff]
      %v61 = vld [vmem:[%s2 + $0xf8] sm:$0xff]
      %v62 = vld [vmem:[%s2 + $0x100] sm:$0xff]
      %v63 = vld [vmem:[%s2 + $0x108] sm:$0xff]
      %v64 = vld [vmem:[%s2 + $0x110] sm:$0xff]
      %v65 = vld [vmem:[%s2 + $0x118] sm:$0xff]
      %v66 = vld [vmem:[%s2 + $0x120] sm:$0xff]
      %v67 = vld [vmem:[%s2 + $0x128] sm:$0xff]
      %v68 = vld [vmem:[%s2 + $0x130] sm:$0xff]
      %v69 = vld [vmem:[%s2 + $0x138] sm:$0xff]
      %v70 = vld [vmem:[%s2 + $0x140] sm:$0xff]
      %v71 = vld [vmem:[%s2 + $0x148] sm:$0xff]
      %v72 = vld [vmem:[%s2 + $0x150] sm:$0xff]
      %v73 = vld [vmem:[%s2 + $0x158] sm:$0xff]
      %v74 = vld [vmem:[%s2 + $0x160] sm:$0xff]
      %v75 = vld [vmem:[%s2 + $0x168] sm:$0xff]
      %v76 = vld [vmem:[%s2 + $0x170] sm:$0xff]
      %v77 = vld [vmem:[%s2 + $0x178] sm:$0xff]
      %v78 = vld [vmem:[%s2 + $0x180] sm:$0xff]
      %v79 = vld [vmem:[%s2 + $0x188] sm:$0xff]
      %v80 = vld [vmem:[%s2 + $0x190] sm:$0xff]
      %v81 = vld [vmem:[%s2 + $0x198] sm:$0xff]
      %v82 = vld [vmem:[%s2 + $0x1a0] sm:$0xff]
      %v83 = vld [vmem:[%s2 + $0x1a8] sm:$0xff]
      %v84 = vld [vmem:[%s2 + $0x1b0] sm:$0xff]
      %v85 = vld [vmem:[%s2 + $0x1b8] sm:$0xff]
      %v86 = vld [vmem:[%s2 + $0x1c0] sm:$0xff]
      %v87 = vld [vmem:[%s2 + $0x1c8] sm:$0xff]
      %v88 = vld [vmem:[%s2 + $0x1d0] sm:$0xff]
      %v89 = vld [vmem:[%s2 + $0x1d8] sm:$0xff]
      %v90 = vld [vmem:[%s2 + $0x1e0] sm:$0xff]
      %v91 = vld [vmem:[%s2 + $0x1e8] sm:$0xff]
      %v92 = vld [vmem:[%s2 + $0x1f0] sm:$0xff]
      %v93 = vld [vmem:[%s2 + $0x1f8] sm:$0xff]
      %v94 = vld [vmem:[%s2 + $0x200] sm:$0xff]
      %v95 = vld [vmem:[%s2 + $0x208] sm:$0xff]
      %v96 = vld [vmem:[%s2 + $0x210] sm:$0xff]
      %v97 = vld [vmem:[%s2 + $0x218] sm:$0xff]
      %v98 = vld [vmem:[%s2 + $0x220] sm:$0xff]
      %v99 = vld [vmem:[%s2 + $0x228] sm:$0xff]
      %v100 = vld [vmem:[%s2 + $0x230] sm:$0xff]
      %v101 = vld [vmem:[%s2 + $0x238] sm:$0xff]
      %v102 = vld [vmem:[%s2 + $0x240] sm:$0xff]
      %v103 = vld [vmem:[%s2 + $0x248] sm:$0xff]
      %v104 = vld [vmem:[%s2 + $0x250] sm:$0xff]
      %v105 = vld [vmem:[%s2 + $0x258] sm:$0xff]
      %v106 = vld [vmem:[%s2 + $0x260] sm:$0xff]
      %v107 = vld [vmem:[%s2 + $0x268] sm:$0xff]
      %v108 = vld [vmem:[%s2 + $0x270] sm:$0xff]
      %v109 = vld [vmem:[%s2 + $0x278] sm:$0xff]
      %v110 = vld [vmem:[%s2 + $0x280] sm:$0xff]
      %v111 = vld [vmem:[%s2 + $0x288] sm:$0xff]
      %v112 = vld [vmem:[%s2 + $0x290] sm:$0xff]
      %v113 = vld [vmem:[%s2 + $0x298] sm:$0xff]
      %v114 = vld [vmem:[%s2 + $0x2a0] sm:$0xff]
      %v115 = vld [vmem:[%s2 + $0x2a8] sm:$0xff]
      %v116 = vld [vmem:[%s2 + $0x2b0] sm:$0xff]
      %v117 = vld [vmem:[%s2 + $0x2b8] sm:$0xff]
      %v118 = vld [vmem:[%s2 + $0x2c0] sm:$0xff]
      %v119 = vld [vmem:[%s2 + $0x2c8] sm:$0xff]
      %v120 = vld [vmem:[%s2 + $0x2d0] sm:$0xff]
      %v121 = vld [vmem:[%s2 + $0x2d8] sm:$0xff]
      %v122 = vld [vmem:[%s2 + $0x2e0] sm:$0xff]
      %v123 = vld [vmem:[%s2 + $0x2e8] sm:$0xff]
      %v124 = vld [vmem:[%s2 + $0x2f0] sm:$0xff]
      %v125 = vld [vmem:[%s2 + $0x2f8] sm:$0xff]
      %v126 = vld [vmem:[%s2 + $0x300] sm:$0xff]
      %v127 = vld [vmem:[%s2 + $0x308] sm:$0xff]
      %v128 = vld [vmem:[%s2 + $0x310] sm:$0xff]
      %v129 = vld [vmem:[%s2 + $0x318] sm:$0xff]
      %v130 = vld [vmem:[%s2 + $0x320] sm:$0xff]
      %v131 = vld [vmem:[%s2 + $0x328] sm:$0xff]
      %v132 = vld [vmem:[%s2 + $0x330] sm:$0xff]
      %v133 = vld [vmem:[%s2 + $0x338] sm:$0xff]
      %v134 = vld [vmem:[%s2 + $0x340] sm:$0xff]
      %v135 = vld [vmem:[%s2 + $0x348] sm:$0xff]
      %v136 = vld [vmem:[%s2 + $0x350] sm:$0xff]
      %v137 = vld [vmem:[%s2 + $0x358] sm:$0xff]
      %v138 = vld [vmem:[%s2 + $0x360] sm:$0xff]
      %v139 = vld [vmem:[%s2 + $0x368] sm:$0xff]
      %v140 = vld [vmem:[%s2 + $0x370] sm:$0xff]
      %v141 = vld [vmem:[%s2 + $0x378] sm:$0xff]
      %v142 = vld [vmem:[%s2 + $0x380] sm:$0xff]
      %v143 = vld [vmem:[%s2 + $0x388] sm:$0xff]
      %v144 = vld [vmem:[%s2 + $0x390] sm:$0xff]
      %v145 = vld [vmem:[%s2 + $0x398] sm:$0xff]
      %v146 = vld [vmem:[%s2 + $0x3a0] sm:$0xff]
      %v147 = vld [vmem:[%s2 + $0x3a8] sm:$0xff]
      %v148 = vld [vmem:[%s2 + $0x3b0] sm:$0xff]
      %v149 = vld [vmem:[%s2 + $0x3b8] sm:$0xff]
      %v150 = vld [vmem:[%s2 + $0x3c0] sm:$0xff]
      %v151 = vld [vmem:[%s2 + $0x3c8] sm:$0xff]
      %v152 = vld [vmem:[%s2 + $0x3d0] sm:$0xff]
      %v153 = vld [vmem:[%s2 + $0x3d8] sm:$0xff]
      %v154 = vld [vmem:[%s2 + $0x3e0] sm:$0xff]
      %v155 = vld [vmem:[%s2 + $0x3e8] sm:$0xff]
      %v156 = vld [vmem:[%s2 + $0x3f0] sm:$0xff]
      %v157 = vld [vmem:[%s2 + $0x3f8] sm:$0xff]
      %v158 = vld [vmem:[%s2 + $0x400] sm:$0xff]
      %v159 = vld [vmem:[%s2 + $0x408] sm:$0xff]
      %v160 = vld [vmem:[%s2 + $0x410] sm:$0xff]
      %v161 = vld [vmem:[%s2 + $0x418] sm:$0xff]
      %v162 = vld [vmem:[%s2 + $0x420] sm:$0xff]
      %v163 = vld [vmem:[%s2 + $0x428] sm:$0xff]
      %v164 = vld [vmem:[%s2 + $0x430] sm:$0xff]
      %v165 = vld [vmem:[%s2 + $0x438] sm:$0xff]
      %v166 = vld [vmem:[%s2 + $0x440] sm:$0xff]
      %v167 = vld [vmem:[%s2 + $0x448] sm:$0xff]
      %v168 = vld [vmem:[%s2 + $0x450] sm:$0xff]
      %v169 = vld [vmem:[%s2 + $0x458] sm:$0xff]
      %v170 = vld [vmem:[%s2 + $0x460] sm:$0xff]
      %v171 = vld [vmem:[%s2 + $0x468] sm:$0xff]
      %v172 = vld [vmem:[%s2 + $0x470] sm:$0xff]
      %v173 = vld [vmem:[%s2 + $0x478] sm:$0xff]
      %v174 = vld [vmem:[%s2 + $0x480] sm:$0xff]
      %v175 = vld [vmem:[%s2 + $0x488] sm:$0xff]
      %v176 = vld [vmem:[%s2 + $0x490] sm:$0xff]
      %v177 = vld [vmem:[%s2 + $0x498] sm:$0xff]
      %v178 = vld [vmem:[%s2 + $0x4a0] sm:$0xff]
      %v179 = vld [vmem:[%s2 + $0x4a8] sm:$0xff]
      %v180 = vld [vmem:[%s2 + $0x4b0] sm:$0xff]
      %v181 = vld [vmem:[%s2 + $0x4b8] sm:$0xff]
      %v182 = vld [vmem:[%s2 + $0x4c0] sm:$0xff]
      %v183 = vld [vmem:[%s2 + $0x4c8] sm:$0xff]
      %v184 = vld [vmem:[%s2 + $0x4d0] sm:$0xff]
      %v185 = vld [vmem:[%s2 + $0x4d8] sm:$0xff]
      %v186 = vld [vmem:[%s2 + $0x4e0] sm:$0xff]
      %v187 = vld [vmem:[%s2 + $0x4e8] sm:$0xff]
      %v188 = vld [vmem:[%s2 + $0x4f0] sm:$0xff]
      %v189 = vld [vmem:[%s2 + $0x4f8] sm:$0xff]
      %v190 = vld [vmem:[%s2 + $0x500] sm:$0xff]
      %v191 = vld [vmem:[%s2 + $0x508] sm:$0xff]
      %v192 = vld [vmem:[%s2 + $0x510] sm:$0xff]
      %v193 = vld [vmem:[%s2 + $0x518] sm:$0xff]
      %v194 = vld [vmem:[%s2 + $0x520] sm:$0xff]
      %v195 = vld [vmem:[%s2 + $0x528] sm:$0xff]
      %v196 = vld [vmem:[%s2 + $0x530] sm:$0xff]
      %v197 = vld [vmem:[%s2 + $0x538] sm:$0xff]
      %v198 = vld [vmem:[%s2 + $0x540] sm:$0xff]
      %v199 = vld [vmem:[%s2 + $0x548] sm:$0xff]
      %v200 = vld [vmem:[%s2 + $0x550] sm:$0xff]
      %v201 = vld [vmem:[%s2 + $0x558] sm:$0xff]
      %v202 = vld [vmem:[%s2 + $0x560] sm:$0xff]
      %v203 = vld [vmem:[%s2 + $0x568] sm:$0xff]
      %v204 = vld [vmem:[%s2 + $0x570] sm:$0xff]
      %v205 = vld [vmem:[%s2 + $0x578] sm:$0xff]
      %v206 = vld [vmem:[%s2 + $0x580] sm:$0xff]
      %v207 = vld [vmem:[%s2 + $0x588] sm:$0xff]
      %v208 = vld [vmem:[%s2 + $0x590] sm:$0xff]
      %v209 = vld [vmem:[%s2 + $0x598] sm:$0xff]
      %v210 = vld [vmem:[%s2 + $0x5a0] sm:$0xff]
      %v211 = vld [vmem:[%s2 + $0x5a8] sm:$0xff]
      %v212 = vld [vmem:[%s2 + $0x5b0] sm:$0xff]
      %v213 = vld [vmem:[%s2 + $0x5b8] sm:$0xff]
      %v214 = vld [vmem:[%s2 + $0x5c0] sm:$0xff]
      %v215 = vld [vmem:[%s2 + $0x5c8] sm:$0xff]
      %v216 = vld [vmem:[%s2 + $0x5d0] sm:$0xff]
      %v217 = vld [vmem:[%s2 + $0x5d8] sm:$0xff]
      %v218 = vld [vmem:[%s2 + $0x5e0] sm:$0xff]
      %v219 = vld [vmem:[%s2 + $0x5e8] sm:$0xff]
      %v220 = vld [vmem:[%s2 + $0x5f0] sm:$0xff]
      %v221 = vld [vmem:[%s2 + $0x5f8] sm:$0xff]
      %v226 = vunpack.c.l.b16 %v26
      %v227 = vunpack.c.h.b16 %v26
      %v228 = vunpack.c.l.b16 %v27
      %v229 = vunpack.c.l.b16 %v28
      %v230 = vunpack.c.h.b16 %v28
      %v231 = vunpack.c.l.b16 %v29
      %v232 = vpack.c.b16 %v229, %v226
      %v233 = vpack.c.b16 %v230, %v227
      %v234 = vpack.c.b16 %v231, %v228
      %v430 = vunpack.c.l.b16 %v30
      %v431 = vunpack.c.h.b16 %v30
      %v432 = vunpack.c.l.b16 %v31
      %v433 = vunpack.c.h.b16 %v31
      %v434 = vunpack.c.l.b16 %v32
      %v435 = vunpack.c.h.b16 %v32
      %v436 = vunpack.c.l.b16 %v33
      %v437 = vunpack.c.h.b16 %v33
      %v438 = vunpack.c.l.b16 %v34
      %v439 = vunpack.c.h.b16 %v34
      %v440 = vunpack.c.l.b16 %v35
      %v441 = vunpack.c.h.b16 %v35
      %v442 = vunpack.c.l.b16 %v36
      %v443 = vunpack.c.h.b16 %v36
      %v444 = vunpack.c.l.b16 %v37
      %v445 = vunpack.c.h.b16 %v37
      %v446 = vunpack.c.l.b16 %v38
      %v447 = vunpack.c.h.b16 %v38
      %v448 = vunpack.c.l.b16 %v39
      %v449 = vunpack.c.h.b16 %v39
      %v450 = vunpack.c.l.b16 %v40
      %v451 = vunpack.c.h.b16 %v40
      %v452 = vunpack.c.l.b16 %v41
      %v453 = vunpack.c.h.b16 %v41
      %v454 = vunpack.c.l.b16 %v42
      %v455 = vunpack.c.h.b16 %v42
      %v456 = vunpack.c.l.b16 %v43
      %v457 = vunpack.c.h.b16 %v43
      %v458 = vunpack.c.l.b16 %v44
      %v459 = vunpack.c.h.b16 %v44
      %v460 = vunpack.c.l.b16 %v45
      %v461 = vunpack.c.h.b16 %v45
      %v462 = vunpack.c.l.b16 %v46
      %v463 = vunpack.c.h.b16 %v46
      %v464 = vunpack.c.l.b16 %v47
      %v465 = vunpack.c.h.b16 %v47
      %v466 = vunpack.c.l.b16 %v48
      %v467 = vunpack.c.h.b16 %v48
      %v468 = vunpack.c.l.b16 %v49
      %v469 = vunpack.c.h.b16 %v49
      %v470 = vunpack.c.l.b16 %v50
      %v471 = vunpack.c.h.b16 %v50
      %v472 = vunpack.c.l.b16 %v51
      %v473 = vunpack.c.h.b16 %v51
      %v474 = vunpack.c.l.b16 %v52
      %v475 = vunpack.c.h.b16 %v52
      %v476 = vunpack.c.l.b16 %v53
      %v477 = vunpack.c.h.b16 %v53
      %v478 = vunpack.c.l.b16 %v54
      %v479 = vunpack.c.h.b16 %v54
      %v480 = vunpack.c.l.b16 %v55
      %v481 = vunpack.c.h.b16 %v55
      %v482 = vunpack.c.l.b16 %v56
      %v483 = vunpack.c.h.b16 %v56
      %v484 = vunpack.c.l.b16 %v57
      %v485 = vunpack.c.h.b16 %v57
      %v486 = vunpack.c.l.b16 %v58
      %v487 = vunpack.c.h.b16 %v58
      %v488 = vunpack.c.l.b16 %v59
      %v489 = vunpack.c.h.b16 %v59
      %v490 = vunpack.c.l.b16 %v60
      %v491 = vunpack.c.h.b16 %v60
      %v492 = vunpack.c.l.b16 %v61
      %v493 = vunpack.c.h.b16 %v61
      %v494 = vunpack.c.l.b16 %v62
      %v495 = vunpack.c.h.b16 %v62
      %v496 = vunpack.c.l.b16 %v63
      %v497 = vunpack.c.h.b16 %v63
      %v498 = vunpack.c.l.b16 %v64
      %v499 = vunpack.c.h.b16 %v64
      %v500 = vunpack.c.l.b16 %v65
      %v501 = vunpack.c.h.b16 %v65
      %v502 = vunpack.c.l.b16 %v66
      %v503 = vunpack.c.h.b16 %v66
      %v504 = vunpack.c.l.b16 %v67
      %v505 = vunpack.c.h.b16 %v67
      %v506 = vunpack.c.l.b16 %v68
      %v507 = vunpack.c.h.b16 %v68
      %v508 = vunpack.c.l.b16 %v69
      %v509 = vunpack.c.h.b16 %v69
      %v510 = vunpack.c.l.b16 %v70
      %v511 = vunpack.c.h.b16 %v70
      %v512 = vunpack.c.l.b16 %v71
      %v513 = vunpack.c.h.b16 %v71
      %v514 = vunpack.c.l.b16 %v72
      %v515 = vunpack.c.h.b16 %v72
      %v516 = vunpack.c.l.b16 %v73
      %v517 = vunpack.c.h.b16 %v73
      %v518 = vunpack.c.l.b16 %v74
      %v519 = vunpack.c.h.b16 %v74
      %v520 = vunpack.c.l.b16 %v75
      %v521 = vunpack.c.h.b16 %v75
      %v522 = vunpack.c.l.b16 %v76
      %v523 = vunpack.c.h.b16 %v76
      %v524 = vunpack.c.l.b16 %v77
      %v525 = vunpack.c.h.b16 %v77
      %v526 = vunpack.c.l.b16 %v78
      %v527 = vunpack.c.h.b16 %v78
      %v528 = vunpack.c.l.b16 %v79
      %v529 = vunpack.c.h.b16 %v79
      %v530 = vunpack.c.l.b16 %v80
      %v531 = vunpack.c.h.b16 %v80
      %v532 = vunpack.c.l.b16 %v81
      %v533 = vunpack.c.h.b16 %v81
      %v534 = vunpack.c.l.b16 %v82
      %v535 = vunpack.c.h.b16 %v82
      %v536 = vunpack.c.l.b16 %v83
      %v537 = vunpack.c.h.b16 %v83
      %v538 = vunpack.c.l.b16 %v84
      %v539 = vunpack.c.h.b16 %v84
      %v540 = vunpack.c.l.b16 %v85
      %v541 = vunpack.c.h.b16 %v85
      %v542 = vunpack.c.l.b16 %v86
      %v543 = vunpack.c.h.b16 %v86
      %v544 = vunpack.c.l.b16 %v87
      %v545 = vunpack.c.h.b16 %v87
      %v546 = vunpack.c.l.b16 %v88
      %v547 = vunpack.c.h.b16 %v88
      %v548 = vunpack.c.l.b16 %v89
      %v549 = vunpack.c.h.b16 %v89
      %v550 = vunpack.c.l.b16 %v90
      %v551 = vunpack.c.h.b16 %v90
      %v552 = vunpack.c.l.b16 %v91
      %v553 = vunpack.c.h.b16 %v91
      %v554 = vunpack.c.l.b16 %v92
      %v555 = vunpack.c.h.b16 %v92
      %v556 = vunpack.c.l.b16 %v93
      %v557 = vunpack.c.h.b16 %v93
      %v558 = vunpack.c.l.b16 %v94
      %v559 = vunpack.c.h.b16 %v94
      %v560 = vunpack.c.l.b16 %v95
      %v561 = vunpack.c.h.b16 %v95
      %v562 = vunpack.c.l.b16 %v96
      %v563 = vunpack.c.h.b16 %v96
      %v564 = vunpack.c.l.b16 %v97
      %v565 = vunpack.c.h.b16 %v97
      %v566 = vunpack.c.l.b16 %v98
      %v567 = vunpack.c.h.b16 %v98
      %v568 = vunpack.c.l.b16 %v99
      %v569 = vunpack.c.h.b16 %v99
      %v570 = vunpack.c.l.b16 %v100
      %v571 = vunpack.c.h.b16 %v100
      %v572 = vunpack.c.l.b16 %v101
      %v573 = vunpack.c.h.b16 %v101
      %v574 = vunpack.c.l.b16 %v102
      %v575 = vunpack.c.h.b16 %v102
      %v576 = vunpack.c.l.b16 %v103
      %v577 = vunpack.c.h.b16 %v103
      %v578 = vunpack.c.l.b16 %v104
      %v579 = vunpack.c.h.b16 %v104
      %v580 = vunpack.c.l.b16 %v105
      %v581 = vunpack.c.h.b16 %v105
      %v582 = vunpack.c.l.b16 %v106
      %v583 = vunpack.c.h.b16 %v106
      %v584 = vunpack.c.l.b16 %v107
      %v585 = vunpack.c.h.b16 %v107
      %v586 = vunpack.c.l.b16 %v108
      %v587 = vunpack.c.h.b16 %v108
      %v588 = vunpack.c.l.b16 %v109
      %v589 = vunpack.c.h.b16 %v109
      %v590 = vunpack.c.l.b16 %v110
      %v591 = vunpack.c.h.b16 %v110
      %v592 = vunpack.c.l.b16 %v111
      %v593 = vunpack.c.h.b16 %v111
      %v594 = vunpack.c.l.b16 %v112
      %v595 = vunpack.c.h.b16 %v112
      %v596 = vunpack.c.l.b16 %v113
      %v597 = vunpack.c.h.b16 %v113
      %v598 = vunpack.c.l.b16 %v114
      %v599 = vunpack.c.h.b16 %v114
      %v600 = vunpack.c.l.b16 %v115
      %v601 = vunpack.c.h.b16 %v115
      %v602 = vunpack.c.l.b16 %v116
      %v603 = vunpack.c.h.b16 %v116
      %v604 = vunpack.c.l.b16 %v117
      %v605 = vunpack.c.h.b16 %v117
      %v606 = vunpack.c.l.b16 %v118
      %v607 = vunpack.c.h.b16 %v118
      %v608 = vunpack.c.l.b16 %v119
      %v609 = vunpack.c.h.b16 %v119
      %v610 = vunpack.c.l.b16 %v120
      %v611 = vunpack.c.h.b16 %v120
      %v612 = vunpack.c.l.b16 %v121
      %v613 = vunpack.c.h.b16 %v121
      %v614 = vunpack.c.l.b16 %v122
      %v615 = vunpack.c.h.b16 %v122
      %v616 = vunpack.c.l.b16 %v123
      %v617 = vunpack.c.h.b16 %v123
      %v618 = vunpack.c.l.b16 %v124
      %v619 = vunpack.c.h.b16 %v124
      %v620 = vunpack.c.l.b16 %v125
      %v621 = vunpack.c.h.b16 %v125
      %v622 = vunpack.c.l.b16 %v126
      %v623 = vunpack.c.h.b16 %v126
      %v624 = vunpack.c.l.b16 %v127
      %v625 = vunpack.c.h.b16 %v127
      %v626 = vunpack.c.l.b16 %v128
      %v627 = vunpack.c.h.b16 %v128
      %v628 = vunpack.c.l.b16 %v129
      %v629 = vunpack.c.h.b16 %v129
      %v630 = vunpack.c.l.b16 %v130
      %v631 = vunpack.c.h.b16 %v130
      %v632 = vunpack.c.l.b16 %v131
      %v633 = vunpack.c.h.b16 %v131
      %v634 = vunpack.c.l.b16 %v132
      %v635 = vunpack.c.h.b16 %v132
      %v636 = vunpack.c.l.b16 %v133
      %v637 = vunpack.c.h.b16 %v133
      %v638 = vunpack.c.l.b16 %v134
      %v639 = vunpack.c.h.b16 %v134
      %v640 = vunpack.c.l.b16 %v135
      %v641 = vunpack.c.h.b16 %v135
      %v642 = vunpack.c.l.b16 %v136
      %v643 = vunpack.c.h.b16 %v136
      %v644 = vunpack.c.l.b16 %v137
      %v645 = vunpack.c.h.b16 %v137
      %v646 = vunpack.c.l.b16 %v138
      %v647 = vunpack.c.h.b16 %v138
      %v648 = vunpack.c.l.b16 %v139
      %v649 = vunpack.c.h.b16 %v139
      %v650 = vunpack.c.l.b16 %v140
      %v651 = vunpack.c.h.b16 %v140
      %v652 = vunpack.c.l.b16 %v141
      %v653 = vunpack.c.h.b16 %v141
      %v654 = vunpack.c.l.b16 %v142
      %v655 = vunpack.c.h.b16 %v142
      %v656 = vunpack.c.l.b16 %v143
      %v657 = vunpack.c.h.b16 %v143
      %v658 = vunpack.c.l.b16 %v144
      %v659 = vunpack.c.h.b16 %v144
      %v660 = vunpack.c.l.b16 %v145
      %v661 = vunpack.c.h.b16 %v145
      %v662 = vunpack.c.l.b16 %v146
      %v663 = vunpack.c.h.b16 %v146
      %v664 = vunpack.c.l.b16 %v147
      %v665 = vunpack.c.h.b16 %v147
      %v666 = vunpack.c.l.b16 %v148
      %v667 = vunpack.c.h.b16 %v148
      %v668 = vunpack.c.l.b16 %v149
      %v669 = vunpack.c.h.b16 %v149
      %v670 = vunpack.c.l.b16 %v150
      %v671 = vunpack.c.h.b16 %v150
      %v672 = vunpack.c.l.b16 %v151
      %v673 = vunpack.c.h.b16 %v151
      %v674 = vunpack.c.l.b16 %v152
      %v675 = vunpack.c.h.b16 %v152
      %v676 = vunpack.c.l.b16 %v153
      %v677 = vunpack.c.h.b16 %v153
      %v678 = vunpack.c.l.b16 %v154
      %v679 = vunpack.c.h.b16 %v154
      %v680 = vunpack.c.l.b16 %v155
      %v681 = vunpack.c.h.b16 %v155
      %v682 = vunpack.c.l.b16 %v156
      %v683 = vunpack.c.h.b16 %v156
      %v684 = vunpack.c.l.b16 %v157
      %v685 = vunpack.c.h.b16 %v157
      %v686 = vunpack.c.l.b16 %v158
      %v687 = vunpack.c.h.b16 %v158
      %v688 = vunpack.c.l.b16 %v159
      %v689 = vunpack.c.h.b16 %v159
      %v690 = vunpack.c.l.b16 %v160
      %v691 = vunpack.c.h.b16 %v160
      %v692 = vunpack.c.l.b16 %v161
      %v693 = vunpack.c.h.b16 %v161
      %v694 = vunpack.c.l.b16 %v162
      %v695 = vunpack.c.h.b16 %v162
      %v696 = vunpack.c.l.b16 %v163
      %v697 = vunpack.c.h.b16 %v163
      %v698 = vunpack.c.l.b16 %v164
      %v699 = vunpack.c.h.b16 %v164
      %v700 = vunpack.c.l.b16 %v165
      %v701 = vunpack.c.h.b16 %v165
      %v702 = vunpack.c.l.b16 %v166
      %v703 = vunpack.c.h.b16 %v166
      %v704 = vunpack.c.l.b16 %v167
      %v705 = vunpack.c.h.b16 %v167
      %v706 = vunpack.c.l.b16 %v168
      %v707 = vunpack.c.h.b16 %v168
      %v708 = vunpack.c.l.b16 %v169
      %v709 = vunpack.c.h.b16 %v169
      %v710 = vunpack.c.l.b16 %v170
      %v711 = vunpack.c.h.b16 %v170
      %v712 = vunpack.c.l.b16 %v171
      %v713 = vunpack.c.h.b16 %v171
      %v714 = vunpack.c.l.b16 %v172
      %v715 = vunpack.c.h.b16 %v172
      %v716 = vunpack.c.l.b16 %v173
      %v717 = vunpack.c.h.b16 %v173
      %v718 = vunpack.c.l.b16 %v174
      %v719 = vunpack.c.h.b16 %v174
      %v720 = vunpack.c.l.b16 %v175
      %v721 = vunpack.c.h.b16 %v175
      %v722 = vunpack.c.l.b16 %v176
      %v723 = vunpack.c.h.b16 %v176
      %v724 = vunpack.c.l.b16 %v177
      %v725 = vunpack.c.h.b16 %v177
      %v726 = vunpack.c.l.b16 %v178
      %v727 = vunpack.c.h.b16 %v178
      %v728 = vunpack.c.l.b16 %v179
      %v729 = vunpack.c.h.b16 %v179
      %v730 = vunpack.c.l.b16 %v180
      %v731 = vunpack.c.h.b16 %v180
      %v732 = vunpack.c.l.b16 %v181
      %v733 = vunpack.c.h.b16 %v181
      %v734 = vunpack.c.l.b16 %v182
      %v735 = vunpack.c.h.b16 %v182
      %v736 = vunpack.c.l.b16 %v183
      %v737 = vunpack.c.h.b16 %v183
      %v738 = vunpack.c.l.b16 %v184
      %v739 = vunpack.c.h.b16 %v184
      %v740 = vunpack.c.l.b16 %v185
      %v741 = vunpack.c.h.b16 %v185
      %v742 = vunpack.c.l.b16 %v186
      %v743 = vunpack.c.h.b16 %v186
      %v744 = vunpack.c.l.b16 %v187
      %v745 = vunpack.c.h.b16 %v187
      %v746 = vunpack.c.l.b16 %v188
      %v747 = vunpack.c.h.b16 %v188
      %v748 = vunpack.c.l.b16 %v189
      %v749 = vunpack.c.h.b16 %v189
      %v750 = vunpack.c.l.b16 %v190
      %v751 = vunpack.c.h.b16 %v190
      %v752 = vunpack.c.l.b16 %v191
      %v753 = vunpack.c.h.b16 %v191
      %v754 = vunpack.c.l.b16 %v192
      %v755 = vunpack.c.h.b16 %v192
      %v756 = vunpack.c.l.b16 %v193
      %v757 = vunpack.c.h.b16 %v193
      %v758 = vunpack.c.l.b16 %v194
      %v759 = vunpack.c.h.b16 %v194
      %v760 = vunpack.c.l.b16 %v195
      %v761 = vunpack.c.h.b16 %v195
      %v762 = vunpack.c.l.b16 %v196
      %v763 = vunpack.c.h.b16 %v196
      %v764 = vunpack.c.l.b16 %v197
      %v765 = vunpack.c.h.b16 %v197
      %v766 = vunpack.c.l.b16 %v198
      %v767 = vunpack.c.h.b16 %v198
      %v768 = vunpack.c.l.b16 %v199
      %v769 = vunpack.c.h.b16 %v199
      %v770 = vunpack.c.l.b16 %v200
      %v771 = vunpack.c.h.b16 %v200
      %v772 = vunpack.c.l.b16 %v201
      %v773 = vunpack.c.h.b16 %v201
      %v774 = vunpack.c.l.b16 %v202
      %v775 = vunpack.c.h.b16 %v202
      %v776 = vunpack.c.l.b16 %v203
      %v777 = vunpack.c.h.b16 %v203
      %v778 = vunpack.c.l.b16 %v204
      %v779 = vunpack.c.h.b16 %v204
      %v780 = vunpack.c.l.b16 %v205
      %v781 = vunpack.c.h.b16 %v205
      %v782 = vunpack.c.l.b16 %v206
      %v783 = vunpack.c.h.b16 %v206
      %v784 = vunpack.c.l.b16 %v207
      %v785 = vunpack.c.h.b16 %v207
      %v786 = vunpack.c.l.b16 %v208
      %v787 = vunpack.c.h.b16 %v208
      %v788 = vunpack.c.l.b16 %v209
      %v789 = vunpack.c.h.b16 %v209
      %v790 = vunpack.c.l.b16 %v210
      %v791 = vunpack.c.h.b16 %v210
      %v792 = vunpack.c.l.b16 %v211
      %v793 = vunpack.c.h.b16 %v211
      %v794 = vunpack.c.l.b16 %v212
      %v795 = vunpack.c.h.b16 %v212
      %v796 = vunpack.c.l.b16 %v213
      %v797 = vunpack.c.h.b16 %v213
      %v798 = vunpack.c.l.b16 %v214
      %v799 = vunpack.c.h.b16 %v214
      %v800 = vunpack.c.l.b16 %v215
      %v801 = vunpack.c.h.b16 %v215
      %v802 = vunpack.c.l.b16 %v216
      %v803 = vunpack.c.h.b16 %v216
      %v804 = vunpack.c.l.b16 %v217
      %v805 = vunpack.c.h.b16 %v217
      %v806 = vunpack.c.l.b16 %v218
      %v807 = vunpack.c.h.b16 %v218
      %v808 = vunpack.c.l.b16 %v219
      %v809 = vunpack.c.h.b16 %v219
      %v810 = vunpack.c.l.b16 %v220
      %v811 = vunpack.c.h.b16 %v220
      %v812 = vunpack.c.l.b16 %v221
      %v813 = vunpack.c.h.b16 %v221
      %v814 = vpack.c.b16 %v438, %v430
      %v815 = vpack.c.b16 %v439, %v431
      %v816 = vpack.c.b16 %v440, %v432
      %v817 = vpack.c.b16 %v441, %v433
      %v818 = vpack.c.b16 %v442, %v434
      %v819 = vpack.c.b16 %v443, %v435
      %v820 = vpack.c.b16 %v444, %v436
      %v821 = vpack.c.b16 %v445, %v437
      %v822 = vpack.c.b16 %v454, %v446
      %v823 = vpack.c.b16 %v455, %v447
      %v824 = vpack.c.b16 %v456, %v448
      %v825 = vpack.c.b16 %v457, %v449
      %v826 = vpack.c.b16 %v458, %v450
      %v827 = vpack.c.b16 %v459, %v451
      %v828 = vpack.c.b16 %v460, %v452
      %v829 = vpack.c.b16 %v461, %v453
      %v830 = vpack.c.b16 %v470, %v462
      %v831 = vpack.c.b16 %v471, %v463
      %v832 = vpack.c.b16 %v472, %v464
      %v833 = vpack.c.b16 %v473, %v465
      %v834 = vpack.c.b16 %v474, %v466
      %v835 = vpack.c.b16 %v475, %v467
      %v836 = vpack.c.b16 %v476, %v468
      %v837 = vpack.c.b16 %v477, %v469
      %v838 = vpack.c.b16 %v486, %v478
      %v839 = vpack.c.b16 %v487, %v479
      %v840 = vpack.c.b16 %v488, %v480
      %v841 = vpack.c.b16 %v489, %v481
      %v842 = vpack.c.b16 %v490, %v482
      %v843 = vpack.c.b16 %v491, %v483
      %v844 = vpack.c.b16 %v492, %v484
      %v845 = vpack.c.b16 %v493, %v485
      %v846 = vpack.c.b16 %v502, %v494
      %v847 = vpack.c.b16 %v503, %v495
      %v848 = vpack.c.b16 %v504, %v496
      %v849 = vpack.c.b16 %v505, %v497
      %v850 = vpack.c.b16 %v506, %v498
      %v851 = vpack.c.b16 %v507, %v499
      %v852 = vpack.c.b16 %v508, %v500
      %v853 = vpack.c.b16 %v509, %v501
      %v854 = vpack.c.b16 %v518, %v510
      %v855 = vpack.c.b16 %v519, %v511
      %v856 = vpack.c.b16 %v520, %v512
      %v857 = vpack.c.b16 %v521, %v513
      %v858 = vpack.c.b16 %v522, %v514
      %v859 = vpack.c.b16 %v523, %v515
      %v860 = vpack.c.b16 %v524, %v516
      %v861 = vpack.c.b16 %v525, %v517
      %v862 = vpack.c.b16 %v534, %v526
      %v863 = vpack.c.b16 %v535, %v527
      %v864 = vpack.c.b16 %v536, %v528
      %v865 = vpack.c.b16 %v537, %v529
      %v866 = vpack.c.b16 %v538, %v530
      %v867 = vpack.c.b16 %v539, %v531
      %v868 = vpack.c.b16 %v540, %v532
      %v869 = vpack.c.b16 %v541, %v533
      %v870 = vpack.c.b16 %v550, %v542
      %v871 = vpack.c.b16 %v551, %v543
      %v872 = vpack.c.b16 %v552, %v544
      %v873 = vpack.c.b16 %v553, %v545
      %v874 = vpack.c.b16 %v554, %v546
      %v875 = vpack.c.b16 %v555, %v547
      %v876 = vpack.c.b16 %v556, %v548
      %v877 = vpack.c.b16 %v557, %v549
      %v878 = vpack.c.b16 %v566, %v558
      %v879 = vpack.c.b16 %v567, %v559
      %v880 = vpack.c.b16 %v568, %v560
      %v881 = vpack.c.b16 %v569, %v561
      %v882 = vpack.c.b16 %v570, %v562
      %v883 = vpack.c.b16 %v571, %v563
      %v884 = vpack.c.b16 %v572, %v564
      %v885 = vpack.c.b16 %v573, %v565
      %v886 = vpack.c.b16 %v582, %v574
      %v887 = vpack.c.b16 %v583, %v575
      %v888 = vpack.c.b16 %v584, %v576
      %v889 = vpack.c.b16 %v585, %v577
      %v890 = vpack.c.b16 %v586, %v578
      %v891 = vpack.c.b16 %v587, %v579
      %v892 = vpack.c.b16 %v588, %v580
      %v893 = vpack.c.b16 %v589, %v581
      %v894 = vpack.c.b16 %v598, %v590
      %v895 = vpack.c.b16 %v599, %v591
      %v896 = vpack.c.b16 %v600, %v592
      %v897 = vpack.c.b16 %v601, %v593
      %v898 = vpack.c.b16 %v602, %v594
      %v899 = vpack.c.b16 %v603, %v595
      %v900 = vpack.c.b16 %v604, %v596
      %v901 = vpack.c.b16 %v605, %v597
      %v902 = vpack.c.b16 %v614, %v606
      %v903 = vpack.c.b16 %v615, %v607
      %v904 = vpack.c.b16 %v616, %v608
      %v905 = vpack.c.b16 %v617, %v609
      %v906 = vpack.c.b16 %v618, %v610
      %v907 = vpack.c.b16 %v619, %v611
      %v908 = vpack.c.b16 %v620, %v612
      %v909 = vpack.c.b16 %v621, %v613
      %v910 = vpack.c.b16 %v630, %v622
      %v911 = vpack.c.b16 %v631, %v623
      %v912 = vpack.c.b16 %v632, %v624
      %v913 = vpack.c.b16 %v633, %v625
      %v914 = vpack.c.b16 %v634, %v626
      %v915 = vpack.c.b16 %v635, %v627
      %v916 = vpack.c.b16 %v636, %v628
      %v917 = vpack.c.b16 %v637, %v629
      %v918 = vpack.c.b16 %v646, %v638
      %v919 = vpack.c.b16 %v647, %v639
      %v920 = vpack.c.b16 %v648, %v640
      %v921 = vpack.c.b16 %v649, %v641
      %v922 = vpack.c.b16 %v650, %v642
      %v923 = vpack.c.b16 %v651, %v643
      %v924 = vpack.c.b16 %v652, %v644
      %v925 = vpack.c.b16 %v653, %v645
      %v926 = vpack.c.b16 %v662, %v654
      %v927 = vpack.c.b16 %v663, %v655
      %v928 = vpack.c.b16 %v664, %v656
      %v929 = vpack.c.b16 %v665, %v657
      %v930 = vpack.c.b16 %v666, %v658
      %v931 = vpack.c.b16 %v667, %v659
      %v932 = vpack.c.b16 %v668, %v660
      %v933 = vpack.c.b16 %v669, %v661
      %v934 = vpack.c.b16 %v678, %v670
      %v935 = vpack.c.b16 %v679, %v671
      %v936 = vpack.c.b16 %v680, %v672
      %v937 = vpack.c.b16 %v681, %v673
      %v938 = vpack.c.b16 %v682, %v674
      %v939 = vpack.c.b16 %v683, %v675
      %v940 = vpack.c.b16 %v684, %v676
      %v941 = vpack.c.b16 %v685, %v677
      %v942 = vpack.c.b16 %v694, %v686
      %v943 = vpack.c.b16 %v695, %v687
      %v944 = vpack.c.b16 %v696, %v688
      %v945 = vpack.c.b16 %v697, %v689
      %v946 = vpack.c.b16 %v698, %v690
      %v947 = vpack.c.b16 %v699, %v691
      %v948 = vpack.c.b16 %v700, %v692
      %v949 = vpack.c.b16 %v701, %v693
      %v950 = vpack.c.b16 %v710, %v702
      %v951 = vpack.c.b16 %v711, %v703
      %v952 = vpack.c.b16 %v712, %v704
      %v953 = vpack.c.b16 %v713, %v705
      %v954 = vpack.c.b16 %v714, %v706
      %v955 = vpack.c.b16 %v715, %v707
      %v956 = vpack.c.b16 %v716, %v708
      %v957 = vpack.c.b16 %v717, %v709
      %v958 = vpack.c.b16 %v726, %v718
      %v959 = vpack.c.b16 %v727, %v719
      %v960 = vpack.c.b16 %v728, %v720
      %v961 = vpack.c.b16 %v729, %v721
      %v962 = vpack.c.b16 %v730, %v722
      %v963 = vpack.c.b16 %v731, %v723
      %v964 = vpack.c.b16 %v732, %v724
      %v965 = vpack.c.b16 %v733, %v725
      %v966 = vpack.c.b16 %v742, %v734
      %v967 = vpack.c.b16 %v743, %v735
      %v968 = vpack.c.b16 %v744, %v736
      %v969 = vpack.c.b16 %v745, %v737
      %v970 = vpack.c.b16 %v746, %v738
      %v971 = vpack.c.b16 %v747, %v739
      %v972 = vpack.c.b16 %v748, %v740
      %v973 = vpack.c.b16 %v749, %v741
      %v974 = vpack.c.b16 %v758, %v750
      %v975 = vpack.c.b16 %v759, %v751
      %v976 = vpack.c.b16 %v760, %v752
      %v977 = vpack.c.b16 %v761, %v753
      %v978 = vpack.c.b16 %v762, %v754
      %v979 = vpack.c.b16 %v763, %v755
      %v980 = vpack.c.b16 %v764, %v756
      %v981 = vpack.c.b16 %v765, %v757
      %v982 = vpack.c.b16 %v774, %v766
      %v983 = vpack.c.b16 %v775, %v767
      %v984 = vpack.c.b16 %v776, %v768
      %v985 = vpack.c.b16 %v777, %v769
      %v986 = vpack.c.b16 %v778, %v770
      %v987 = vpack.c.b16 %v779, %v771
      %v988 = vpack.c.b16 %v780, %v772
      %v989 = vpack.c.b16 %v781, %v773
      %v990 = vpack.c.b16 %v790, %v782
      %v991 = vpack.c.b16 %v791, %v783
      %v992 = vpack.c.b16 %v792, %v784
      %v993 = vpack.c.b16 %v793, %v785
      %v994 = vpack.c.b16 %v794, %v786
      %v995 = vpack.c.b16 %v795, %v787
      %v996 = vpack.c.b16 %v796, %v788
      %v997 = vpack.c.b16 %v797, %v789
      %v998 = vpack.c.b16 %v806, %v798
      %v999 = vpack.c.b16 %v807, %v799
      %v1000 = vpack.c.b16 %v808, %v800
      %v1001 = vpack.c.b16 %v809, %v801
      %v1002 = vpack.c.b16 %v810, %v802
      %v1003 = vpack.c.b16 %v811, %v803
      %v1004 = vpack.c.b16 %v812, %v804
      %v1005 = vpack.c.b16 %v813, %v805
      %1198 = vmatpush.bf16.msra.mxu0 %v870
      %1199 = vmatpush.bf16.msra.mxu0 %v862
      %1200 = vmatpush.bf16.msra.mxu0 %v854
      %1201 = vmatpush.bf16.msra.mxu0 %v846
      %1202 = vmatpush.bf16.msra.mxu0 %v838
      %1203 = vmatpush.bf16.msra.mxu0 %v830
      %1204 = vmatpush.bf16.msra.mxu0 %v822
      %1205 = vmatpush.bf16.msra.mxu0 %v814
      %1206 = vmatmul.bf16.gmra.mxu0 %v232
      %v1207 = vpop.f32.mrf.mxu0
      %v1208 = vadd.f32 0.0, %v1207
      %v1209 = vpop.f32.mrf.mxu0
      %v1210 = vadd.f32 0.0, %v1209
      %1211 = vdwg.mxu0
      %1212 = vmatpush.bf16.msra.mxu0 %v934
      %1213 = vmatpush.bf16.msra.mxu0 %v926
      %1214 = vmatpush.bf16.msra.mxu0 %v918
      %1215 = vmatpush.bf16.msra.mxu0 %v910
      %1216 = vmatpush.bf16.msra.mxu0 %v902
      %1217 = vmatpush.bf16.msra.mxu0 %v894
      %1218 = vmatpush.bf16.msra.mxu0 %v886
      %1219 = vmatpush.bf16.msra.mxu0 %v878
      %1220 = vmatmul.bf16.gmra.mxu0 %v233
      %v1221 = vpop.f32.mrf.mxu0
      %v1222 = vadd.f32 %v1208, %v1221
      %v1223 = vpop.f32.mrf.mxu0
      %v1224 = vadd.f32 %v1210, %v1223
      %1225 = vdwg.mxu0
      %1226 = vmatpush.bf16.msra.mxu0 %v998
      %1227 = vmatpush.bf16.msra.mxu0 %v990
      %1228 = vmatpush.bf16.msra.mxu0 %v982
      %1229 = vmatpush.bf16.msra.mxu0 %v974
      %1230 = vmatpush.bf16.msra.mxu0 %v966
      %1231 = vmatpush.bf16.msra.mxu0 %v958
      %1232 = vmatpush.bf16.msra.mxu0 %v950
      %1233 = vmatpush.bf16.msra.mxu0 %v942
      %1234 = vmatmul.bf16.gmra.mxu0 %v234
      %v1235 = vpop.f32.mrf.mxu0
      %v1236 = vadd.f32 %v1222, %v1235
      %v1237 = vpop.f32.mrf.mxu0
      %v1238 = vadd.f32 %v1224, %v1237
      %1239 = vdwg.mxu0
      %1240 = vmatpush.bf16.msra.mxu0 %v871
      %1241 = vmatpush.bf16.msra.mxu0 %v863
      %1242 = vmatpush.bf16.msra.mxu0 %v855
      %1243 = vmatpush.bf16.msra.mxu0 %v847
      %1244 = vmatpush.bf16.msra.mxu0 %v839
      %1245 = vmatpush.bf16.msra.mxu0 %v831
      %1246 = vmatpush.bf16.msra.mxu0 %v823
      %1247 = vmatpush.bf16.msra.mxu0 %v815
      %1248 = vmatmul.bf16.gmra.mxu0 %v232
      %v1249 = vpop.f32.mrf.mxu0
      %v1250 = vadd.f32 0.0, %v1249
      %v1251 = vpop.f32.mrf.mxu0
      %v1252 = vadd.f32 0.0, %v1251
      %1253 = vdwg.mxu0
      %1254 = vmatpush.bf16.msra.mxu0 %v935
      %1255 = vmatpush.bf16.msra.mxu0 %v927
      %1256 = vmatpush.bf16.msra.mxu0 %v919
      %1257 = vmatpush.bf16.msra.mxu0 %v911
      %1258 = vmatpush.bf16.msra.mxu0 %v903
      %1259 = vmatpush.bf16.msra.mxu0 %v895
      %1260 = vmatpush.bf16.msra.mxu0 %v887
      %1261 = vmatpush.bf16.msra.mxu0 %v879
      %1262 = vmatmul.bf16.gmra.mxu0 %v233
      %v1263 = vpop.f32.mrf.mxu0
      %v1264 = vadd.f32 %v1250, %v1263
      %v1265 = vpop.f32.mrf.mxu0
      %v1266 = vadd.f32 %v1252, %v1265
      %1267 = vdwg.mxu0
      %1268 = vmatpush.bf16.msra.mxu0 %v999
      %1269 = vmatpush.bf16.msra.mxu0 %v991
      %1270 = vmatpush.bf16.msra.mxu0 %v983
      %1271 = vmatpush.bf16.msra.mxu0 %v975
      %1272 = vmatpush.bf16.msra.mxu0 %v967
      %1273 = vmatpush.bf16.msra.mxu0 %v959
      %1274 = vmatpush.bf16.msra.mxu0 %v951
      %1275 = vmatpush.bf16.msra.mxu0 %v943
      %1276 = vmatmul.bf16.gmra.mxu0 %v234
      %v1277 = vpop.f32.mrf.mxu0
      %v1278 = vadd.f32 %v1264, %v1277
      %v1279 = vpop.f32.mrf.mxu0
      %v1280 = vadd.f32 %v1266, %v1279
      %1281 = vdwg.mxu0
      %1282 = vmatpush.bf16.msra.mxu0 %v872
      %1283 = vmatpush.bf16.msra.mxu0 %v864
      %1284 = vmatpush.bf16.msra.mxu0 %v856
      %1285 = vmatpush.bf16.msra.mxu0 %v848
      %1286 = vmatpush.bf16.msra.mxu0 %v840
      %1287 = vmatpush.bf16.msra.mxu0 %v832
      %1288 = vmatpush.bf16.msra.mxu0 %v824
      %1289 = vmatpush.bf16.msra.mxu0 %v816
      %1290 = vmatmul.bf16.gmra.mxu0 %v232
      %v1291 = vpop.f32.mrf.mxu0
      %v1292 = vadd.f32 0.0, %v1291
      %v1293 = vpop.f32.mrf.mxu0
      %v1294 = vadd.f32 0.0, %v1293
      %1295 = vdwg.mxu0
      %1296 = vmatpush.bf16.msra.mxu0 %v936
      %1297 = vmatpush.bf16.msra.mxu0 %v928
      %1298 = vmatpush.bf16.msra.mxu0 %v920
      %1299 = vmatpush.bf16.msra.mxu0 %v912
      %1300 = vmatpush.bf16.msra.mxu0 %v904
      %1301 = vmatpush.bf16.msra.mxu0 %v896
      %1302 = vmatpush.bf16.msra.mxu0 %v888
      %1303 = vmatpush.bf16.msra.mxu0 %v880
      %1304 = vmatmul.bf16.gmra.mxu0 %v233
      %v1305 = vpop.f32.mrf.mxu0
      %v1306 = vadd.f32 %v1292, %v1305
      %v1307 = vpop.f32.mrf.mxu0
      %v1308 = vadd.f32 %v1294, %v1307
      %1309 = vdwg.mxu0
      %1310 = vmatpush.bf16.msra.mxu0 %v1000
      %1311 = vmatpush.bf16.msra.mxu0 %v992
      %1312 = vmatpush.bf16.msra.mxu0 %v984
      %1313 = vmatpush.bf16.msra.mxu0 %v976
      %1314 = vmatpush.bf16.msra.mxu0 %v968
      %1315 = vmatpush.bf16.msra.mxu0 %v960
      %1316 = vmatpush.bf16.msra.mxu0 %v952
      %1317 = vmatpush.bf16.msra.mxu0 %v944
      %1318 = vmatmul.bf16.gmra.mxu0 %v234
      %v1319 = vpop.f32.mrf.mxu0
      %v1320 = vadd.f32 %v1306, %v1319
      %v1321 = vpop.f32.mrf.mxu0
      %v1322 = vadd.f32 %v1308, %v1321
      %1323 = vdwg.mxu0
      %1324 = vmatpush.bf16.msra.mxu0 %v873
      %1325 = vmatpush.bf16.msra.mxu0 %v865
      %1326 = vmatpush.bf16.msra.mxu0 %v857
      %1327 = vmatpush.bf16.msra.mxu0 %v849
      %1328 = vmatpush.bf16.msra.mxu0 %v841
      %1329 = vmatpush.bf16.msra.mxu0 %v833
      %1330 = vmatpush.bf16.msra.mxu0 %v825
      %1331 = vmatpush.bf16.msra.mxu0 %v817
      %1332 = vmatmul.bf16.gmra.mxu0 %v232
      %v1333 = vpop.f32.mrf.mxu0
      %v1334 = vadd.f32 0.0, %v1333
      %v1335 = vpop.f32.mrf.mxu0
      %v1336 = vadd.f32 0.0, %v1335
      %1337 = vdwg.mxu0
      %1338 = vmatpush.bf16.msra.mxu0 %v937
      %1339 = vmatpush.bf16.msra.mxu0 %v929
      %1340 = vmatpush.bf16.msra.mxu0 %v921
      %1341 = vmatpush.bf16.msra.mxu0 %v913
      %1342 = vmatpush.bf16.msra.mxu0 %v905
      %1343 = vmatpush.bf16.msra.mxu0 %v897
      %1344 = vmatpush.bf16.msra.mxu0 %v889
      %1345 = vmatpush.bf16.msra.mxu0 %v881
      %1346 = vmatmul.bf16.gmra.mxu0 %v233
      %v1347 = vpop.f32.mrf.mxu0
      %v1348 = vadd.f32 %v1334, %v1347
      %v1349 = vpop.f32.mrf.mxu0
      %v1350 = vadd.f32 %v1336, %v1349
      %1351 = vdwg.mxu0
      %1352 = vmatpush.bf16.msra.mxu0 %v1001
      %1353 = vmatpush.bf16.msra.mxu0 %v993
      %1354 = vmatpush.bf16.msra.mxu0 %v985
      %1355 = vmatpush.bf16.msra.mxu0 %v977
      %1356 = vmatpush.bf16.msra.mxu0 %v969
      %1357 = vmatpush.bf16.msra.mxu0 %v961
      %1358 = vmatpush.bf16.msra.mxu0 %v953
      %1359 = vmatpush.bf16.msra.mxu0 %v945
      %1360 = vmatmul.bf16.gmra.mxu0 %v234
      %v1361 = vpop.f32.mrf.mxu0
      %v1362 = vadd.f32 %v1348, %v1361
      %v1363 = vpop.f32.mrf.mxu0
      %v1364 = vadd.f32 %v1350, %v1363
      %1365 = vdwg.mxu0
      %1366 = vmatpush.bf16.msra.mxu0 %v874
      %1367 = vmatpush.bf16.msra.mxu0 %v866
      %1368 = vmatpush.bf16.msra.mxu0 %v858
      %1369 = vmatpush.bf16.msra.mxu0 %v850
      %1370 = vmatpush.bf16.msra.mxu0 %v842
      %1371 = vmatpush.bf16.msra.mxu0 %v834
      %1372 = vmatpush.bf16.msra.mxu0 %v826
      %1373 = vmatpush.bf16.msra.mxu0 %v818
      %1374 = vmatmul.bf16.gmra.mxu0 %v232
      %v1375 = vpop.f32.mrf.mxu0
      %v1376 = vadd.f32 0.0, %v1375
      %v1377 = vpop.f32.mrf.mxu0
      %v1378 = vadd.f32 0.0, %v1377
      %1379 = vdwg.mxu0
      %1380 = vmatpush.bf16.msra.mxu0 %v938
      %1381 = vmatpush.bf16.msra.mxu0 %v930
      %1382 = vmatpush.bf16.msra.mxu0 %v922
      %1383 = vmatpush.bf16.msra.mxu0 %v914
      %1384 = vmatpush.bf16.msra.mxu0 %v906
      %1385 = vmatpush.bf16.msra.mxu0 %v898
      %1386 = vmatpush.bf16.msra.mxu0 %v890
      %1387 = vmatpush.bf16.msra.mxu0 %v882
      %1388 = vmatmul.bf16.gmra.mxu0 %v233
      %v1389 = vpop.f32.mrf.mxu0
      %v1390 = vadd.f32 %v1376, %v1389
      %v1391 = vpop.f32.mrf.mxu0
      %v1392 = vadd.f32 %v1378, %v1391
      %1393 = vdwg.mxu0
      %1394 = vmatpush.bf16.msra.mxu0 %v1002
      %1395 = vmatpush.bf16.msra.mxu0 %v994
      %1396 = vmatpush.bf16.msra.mxu0 %v986
      %1397 = vmatpush.bf16.msra.mxu0 %v978
      %1398 = vmatpush.bf16.msra.mxu0 %v970
      %1399 = vmatpush.bf16.msra.mxu0 %v962
      %1400 = vmatpush.bf16.msra.mxu0 %v954
      %1401 = vmatpush.bf16.msra.mxu0 %v946
      %1402 = vmatmul.bf16.gmra.mxu0 %v234
      %v1403 = vpop.f32.mrf.mxu0
      %v1404 = vadd.f32 %v1390, %v1403
      %v1405 = vpop.f32.mrf.mxu0
      %v1406 = vadd.f32 %v1392, %v1405
      %1407 = vdwg.mxu0
      %1408 = vmatpush.bf16.msra.mxu0 %v875
      %1409 = vmatpush.bf16.msra.mxu0 %v867
      %1410 = vmatpush.bf16.msra.mxu0 %v859
      %1411 = vmatpush.bf16.msra.mxu0 %v851
      %1412 = vmatpush.bf16.msra.mxu0 %v843
      %1413 = vmatpush.bf16.msra.mxu0 %v835
      %1414 = vmatpush.bf16.msra.mxu0 %v827
      %1415 = vmatpush.bf16.msra.mxu0 %v819
      %1416 = vmatmul.bf16.gmra.mxu0 %v232
      %v1417 = vpop.f32.mrf.mxu0
      %v1418 = vadd.f32 0.0, %v1417
      %v1419 = vpop.f32.mrf.mxu0
      %v1420 = vadd.f32 0.0, %v1419
      %1421 = vdwg.mxu0
      %1422 = vmatpush.bf16.msra.mxu0 %v939
      %1423 = vmatpush.bf16.msra.mxu0 %v931
      %1424 = vmatpush.bf16.msra.mxu0 %v923
      %1425 = vmatpush.bf16.msra.mxu0 %v915
      %1426 = vmatpush.bf16.msra.mxu0 %v907
      %1427 = vmatpush.bf16.msra.mxu0 %v899
      %1428 = vmatpush.bf16.msra.mxu0 %v891
      %1429 = vmatpush.bf16.msra.mxu0 %v883
      %1430 = vmatmul.bf16.gmra.mxu0 %v233
      %v1431 = vpop.f32.mrf.mxu0
      %v1432 = vadd.f32 %v1418, %v1431
      %v1433 = vpop.f32.mrf.mxu0
      %v1434 = vadd.f32 %v1420, %v1433
      %1435 = vdwg.mxu0
      %1436 = vmatpush.bf16.msra.mxu0 %v1003
      %1437 = vmatpush.bf16.msra.mxu0 %v995
      %1438 = vmatpush.bf16.msra.mxu0 %v987
      %1439 = vmatpush.bf16.msra.mxu0 %v979
      %1440 = vmatpush.bf16.msra.mxu0 %v971
      %1441 = vmatpush.bf16.msra.mxu0 %v963
      %1442 = vmatpush.bf16.msra.mxu0 %v955
      %1443 = vmatpush.bf16.msra.mxu0 %v947
      %1444 = vmatmul.bf16.gmra.mxu0 %v234
      %v1445 = vpop.f32.mrf.mxu0
      %v1446 = vadd.f32 %v1432, %v1445
      %v1447 = vpop.f32.mrf.mxu0
      %v1448 = vadd.f32 %v1434, %v1447
      %1449 = vdwg.mxu0
      %1450 = vmatpush.bf16.msra.mxu0 %v876
      %1451 = vmatpush.bf16.msra.mxu0 %v868
      %1452 = vmatpush.bf16.msra.mxu0 %v860
      %1453 = vmatpush.bf16.msra.mxu0 %v852
      %1454 = vmatpush.bf16.msra.mxu0 %v844
      %1455 = vmatpush.bf16.msra.mxu0 %v836
      %1456 = vmatpush.bf16.msra.mxu0 %v828
      %1457 = vmatpush.bf16.msra.mxu0 %v820
      %1458 = vmatmul.bf16.gmra.mxu0 %v232
      %v1459 = vpop.f32.mrf.mxu0
      %v1460 = vadd.f32 0.0, %v1459
      %v1461 = vpop.f32.mrf.mxu0
      %v1462 = vadd.f32 0.0, %v1461
      %1463 = vdwg.mxu0
      %1464 = vmatpush.bf16.msra.mxu0 %v940
      %1465 = vmatpush.bf16.msra.mxu0 %v932
      %1466 = vmatpush.bf16.msra.mxu0 %v924
      %1467 = vmatpush.bf16.msra.mxu0 %v916
      %1468 = vmatpush.bf16.msra.mxu0 %v908
      %1469 = vmatpush.bf16.msra.mxu0 %v900
      %1470 = vmatpush.bf16.msra.mxu0 %v892
      %1471 = vmatpush.bf16.msra.mxu0 %v884
      %1472 = vmatmul.bf16.gmra.mxu0 %v233
      %v1473 = vpop.f32.mrf.mxu0
      %v1474 = vadd.f32 %v1460, %v1473
      %v1475 = vpop.f32.mrf.mxu0
      %v1476 = vadd.f32 %v1462, %v1475
      %1477 = vdwg.mxu0
      %1478 = vmatpush.bf16.msra.mxu0 %v1004
      %1479 = vmatpush.bf16.msra.mxu0 %v996
      %1480 = vmatpush.bf16.msra.mxu0 %v988
      %1481 = vmatpush.bf16.msra.mxu0 %v980
      %1482 = vmatpush.bf16.msra.mxu0 %v972
      %1483 = vmatpush.bf16.msra.mxu0 %v964
      %1484 = vmatpush.bf16.msra.mxu0 %v956
      %1485 = vmatpush.bf16.msra.mxu0 %v948
      %1486 = vmatmul.bf16.gmra.mxu0 %v234
      %v1487 = vpop.f32.mrf.mxu0
      %v1488 = vadd.f32 %v1474, %v1487
      %v1489 = vpop.f32.mrf.mxu0
      %v1490 = vadd.f32 %v1476, %v1489
      %1491 = vdwg.mxu0
      %1492 = vmatpush.bf16.msra.mxu0 %v877
      %1493 = vmatpush.bf16.msra.mxu0 %v869
      %1494 = vmatpush.bf16.msra.mxu0 %v861
      %1495 = vmatpush.bf16.msra.mxu0 %v853
      %1496 = vmatpush.bf16.msra.mxu0 %v845
      %1497 = vmatpush.bf16.msra.mxu0 %v837
      %1498 = vmatpush.bf16.msra.mxu0 %v829
      %1499 = vmatpush.bf16.msra.mxu0 %v821
      %1500 = vmatmul.bf16.gmra.mxu0 %v232
      %v1501 = vpop.f32.mrf.mxu0
      %v1502 = vadd.f32 0.0, %v1501
      %v1503 = vpop.f32.mrf.mxu0
      %v1504 = vadd.f32 0.0, %v1503
      %1505 = vdwg.mxu0
      %1506 = vmatpush.bf16.msra.mxu0 %v941
      %1507 = vmatpush.bf16.msra.mxu0 %v933
      %1508 = vmatpush.bf16.msra.mxu0 %v925
      %1509 = vmatpush.bf16.msra.mxu0 %v917
      %1510 = vmatpush.bf16.msra.mxu0 %v909
      %1511 = vmatpush.bf16.msra.mxu0 %v901
      %1512 = vmatpush.bf16.msra.mxu0 %v893
      %1513 = vmatpush.bf16.msra.mxu0 %v885
      %1514 = vmatmul.bf16.gmra.mxu0 %v233
      %v1515 = vpop.f32.mrf.mxu0
      %v1516 = vadd.f32 %v1502, %v1515
      %v1517 = vpop.f32.mrf.mxu0
      %v1518 = vadd.f32 %v1504, %v1517
      %1519 = vdwg.mxu0
      %1520 = vmatpush.bf16.msra.mxu0 %v1005
      %1521 = vmatpush.bf16.msra.mxu0 %v997
      %1522 = vmatpush.bf16.msra.mxu0 %v989
      %1523 = vmatpush.bf16.msra.mxu0 %v981
      %1524 = vmatpush.bf16.msra.mxu0 %v973
      %1525 = vmatpush.bf16.msra.mxu0 %v965
      %1526 = vmatpush.bf16.msra.mxu0 %v957
      %1527 = vmatpush.bf16.msra.mxu0 %v949
      %1528 = vmatmul.bf16.gmra.mxu0 %v234
      %v1529 = vpop.f32.mrf.mxu0
      %v1530 = vadd.f32 %v1516, %v1529
      %v1531 = vpop.f32.mrf.mxu0
      %v1532 = vadd.f32 %v1518, %v1531
      %1533 = vdwg.mxu0
      %v1534 = vpack.c.bf16 %v1278, %v1236
      %v1535 = vpack.c.bf16 %v1362, %v1320
      %v1536 = vpack.c.bf16 %v1446, %v1404
      %v1537 = vpack.c.bf16 %v1530, %v1488
      %v1538 = vpack.c.bf16 %v1280, %v1238
      %v1539 = vpack.c.bf16 %v1364, %v1322
      %v1540 = vpack.c.bf16 %v1448, %v1406
      %v1541 = vpack.c.bf16 %v1532, %v1490
      %1542 = vst [vmem:[#allocation2] sm:$0xff] %v1534
      %1543 = vst [vmem:[#allocation2 + $0x8] sm:$0xff] %v1535
      %1544 = vst [vmem:[#allocation2 + $0x10] sm:$0xff] %v1536
      %1545 = vst [vmem:[#allocation2 + $0x18] sm:$0xff] %v1537
      %1546 = vst [vmem:[#allocation2 + $0x20] sm:$0xff] %v1538
      %1547 = vst [vmem:[#allocation2 + $0x28] sm:$0xff] %v1539
      %1548 = vst [vmem:[#allocation2 + $0x30] sm:$0xff] %v1540
      %1549 = vst [vmem:[#allocation2 + $0x38] sm:$0xff] %v1541
    $region25: #{multi_head_attention.1} parent=1 // pred_fallthru
      _
    %s1550 = smul.u32 0, 8
    %s1551 = sshra.s32 %s1550, 3
    %s1552 = sand.u32 %s1550, 7
    %s1553 = smul.u32 %s1551, 3
    %s1554 = smul.addr %s1553, 4
    %s1555 = scalar_lea.vmem %s0, %s1554
    %v1556 = vld [vmem:[%s1555] sm:$0xff]
    %v1557 = vld [vmem:[%s1555 + $0x8] sm:$0xf]
    %v1558 = vld [vmem:[%s1555 + $0xc] sm:$0xff]
    %v1559 = vld [vmem:[%s1555 + $0x14] sm:$0xf]
    %v1560 = vld [vmem:[%s1] sm:$0xff]
    %v1561 = vld [vmem:[%s1 + $0x8] sm:$0xff]
    %v1562 = vld [vmem:[%s1 + $0x10] sm:$0xff]
    %v1563 = vld [vmem:[%s1 + $0x18] sm:$0xff]
    %v1564 = vld [vmem:[%s1 + $0x20] sm:$0xff]
    %v1565 = vld [vmem:[%s1 + $0x28] sm:$0xff]
    %v1566 = vld [vmem:[%s1 + $0x30] sm:$0xff]
    %v1567 = vld [vmem:[%s1 + $0x38] sm:$0xff]
    %v1568 = vld [vmem:[%s1 + $0x40] sm:$0xff]
    %v1569 = vld [vmem:[%s1 + $0x48] sm:$0xff]
    %v1570 = vld [vmem:[%s1 + $0x50] sm:$0xff]
    %v1571 = vld [vmem:[%s1 + $0x58] sm:$0xff]
    %v1572 = vld [vmem:[%s1 + $0x60] sm:$0xff]
    %v1573 = vld [vmem:[%s1 + $0x68] sm:$0xff]
    %v1574 = vld [vmem:[%s1 + $0x70] sm:$0xff]
    %v1575 = vld [vmem:[%s1 + $0x78] sm:$0xff]
    %v1576 = vld [vmem:[%s1 + $0x80] sm:$0xff]
    %v1577 = vld [vmem:[%s1 + $0x88] sm:$0xff]
    %v1578 = vld [vmem:[%s1 + $0x90] sm:$0xff]
    %v1579 = vld [vmem:[%s1 + $0x98] sm:$0xff]
    %v1580 = vld [vmem:[%s1 + $0xa0] sm:$0xff]
    %v1581 = vld [vmem:[%s1 + $0xa8] sm:$0xff]
    %v1582 = vld [vmem:[%s1 + $0xb0] sm:$0xff]
    %v1583 = vld [vmem:[%s1 + $0xb8] sm:$0xff]
    %v1584 = vld [vmem:[%s1 + $0xc0] sm:$0xff]
    %v1585 = vld [vmem:[%s1 + $0xc8] sm:$0xff]
    %v1586 = vld [vmem:[%s1 + $0xd0] sm:$0xff]
    %v1587 = vld [vmem:[%s1 + $0xd8] sm:$0xff]
    %v1588 = vld [vmem:[%s1 + $0xe0] sm:$0xff]
    %v1589 = vld [vmem:[%s1 + $0xe8] sm:$0xff]
    %v1590 = vld [vmem:[%s1 + $0xf0] sm:$0xff]
    %v1591 = vld [vmem:[%s1 + $0xf8] sm:$0xff]
    %v1592 = vld [vmem:[%s1 + $0x100] sm:$0xff]
    %v1593 = vld [vmem:[%s1 + $0x108] sm:$0xff]
    %v1594 = vld [vmem:[%s1 + $0x110] sm:$0xff]
    %v1595 = vld [vmem:[%s1 + $0x118] sm:$0xff]
    %v1596 = vld [vmem:[%s1 + $0x120] sm:$0xff]
    %v1597 = vld [vmem:[%s1 + $0x128] sm:$0xff]
    %v1598 = vld [vmem:[%s1 + $0x130] sm:$0xff]
    %v1599 = vld [vmem:[%s1 + $0x138] sm:$0xff]
    %v1600 = vld [vmem:[%s1 + $0x140] sm:$0xff]
    %v1601 = vld [vmem:[%s1 + $0x148] sm:$0xff]
    %v1602 = vld [vmem:[%s1 + $0x150] sm:$0xff]
    %v1603 = vld [vmem:[%s1 + $0x158] sm:$0xff]
    %v1604 = vld [vmem:[%s1 + $0x160] sm:$0xff]
    %v1605 = vld [vmem:[%s1 + $0x168] sm:$0xff]
    %v1606 = vld [vmem:[%s1 + $0x170] sm:$0xff]
    %v1607 = vld [vmem:[%s1 + $0x178] sm:$0xff]
    %v1608 = vld [vmem:[%s1 + $0x180] sm:$0xff]
    %v1609 = vld [vmem:[%s1 + $0x188] sm:$0xff]
    %v1610 = vld [vmem:[%s1 + $0x190] sm:$0xff]
    %v1611 = vld [vmem:[%s1 + $0x198] sm:$0xff]
    %v1612 = vld [vmem:[%s1 + $0x1a0] sm:$0xff]
    %v1613 = vld [vmem:[%s1 + $0x1a8] sm:$0xff]
    %v1614 = vld [vmem:[%s1 + $0x1b0] sm:$0xff]
    %v1615 = vld [vmem:[%s1 + $0x1b8] sm:$0xff]
    %v1616 = vld [vmem:[%s1 + $0x1c0] sm:$0xff]
    %v1617 = vld [vmem:[%s1 + $0x1c8] sm:$0xff]
    %v1618 = vld [vmem:[%s1 + $0x1d0] sm:$0xff]
    %v1619 = vld [vmem:[%s1 + $0x1d8] sm:$0xff]
    %v1620 = vld [vmem:[%s1 + $0x1e0] sm:$0xff]
    %v1621 = vld [vmem:[%s1 + $0x1e8] sm:$0xff]
    %v1622 = vld [vmem:[%s1 + $0x1f0] sm:$0xff]
    %v1623 = vld [vmem:[%s1 + $0x1f8] sm:$0xff]
    %v1624 = vld [vmem:[%s1 + $0x200] sm:$0xff]
    %v1625 = vld [vmem:[%s1 + $0x208] sm:$0xff]
    %v1626 = vld [vmem:[%s1 + $0x210] sm:$0xff]
    %v1627 = vld [vmem:[%s1 + $0x218] sm:$0xff]
    %v1628 = vld [vmem:[%s1 + $0x220] sm:$0xff]
    %v1629 = vld [vmem:[%s1 + $0x228] sm:$0xff]
    %v1630 = vld [vmem:[%s1 + $0x230] sm:$0xff]
    %v1631 = vld [vmem:[%s1 + $0x238] sm:$0xff]
    %v1632 = vld [vmem:[%s1 + $0x240] sm:$0xff]
    %v1633 = vld [vmem:[%s1 + $0x248] sm:$0xff]
    %v1634 = vld [vmem:[%s1 + $0x250] sm:$0xff]
    %v1635 = vld [vmem:[%s1 + $0x258] sm:$0xff]
    %v1636 = vld [vmem:[%s1 + $0x260] sm:$0xff]
    %v1637 = vld [vmem:[%s1 + $0x268] sm:$0xff]
    %v1638 = vld [vmem:[%s1 + $0x270] sm:$0xff]
    %v1639 = vld [vmem:[%s1 + $0x278] sm:$0xff]
    %v1640 = vld [vmem:[%s1 + $0x280] sm:$0xff]
    %v1641 = vld [vmem:[%s1 + $0x288] sm:$0xff]
    %v1642 = vld [vmem:[%s1 + $0x290] sm:$0xff]
    %v1643 = vld [vmem:[%s1 + $0x298] sm:$0xff]
    %v1644 = vld [vmem:[%s1 + $0x2a0] sm:$0xff]
    %v1645 = vld [vmem:[%s1 + $0x2a8] sm:$0xff]
    %v1646 = vld [vmem:[%s1 + $0x2b0] sm:$0xff]
    %v1647 = vld [vmem:[%s1 + $0x2b8] sm:$0xff]
    %v1648 = vld [vmem:[%s1 + $0x2c0] sm:$0xff]
    %v1649 = vld [vmem:[%s1 + $0x2c8] sm:$0xff]
    %v1650 = vld [vmem:[%s1 + $0x2d0] sm:$0xff]
    %v1651 = vld [vmem:[%s1 + $0x2d8] sm:$0xff]
    %v1652 = vld [vmem:[%s1 + $0x2e0] sm:$0xff]
    %v1653 = vld [vmem:[%s1 + $0x2e8] sm:$0xff]
    %v1654 = vld [vmem:[%s1 + $0x2f0] sm:$0xff]
    %v1655 = vld [vmem:[%s1 + $0x2f8] sm:$0xff]
    %v1660 = vunpack.c.l.b16 %v1556
    %v1661 = vunpack.c.h.b16 %v1556
    %v1662 = vunpack.c.l.b16 %v1557
    %v1663 = vunpack.c.l.b16 %v1558
    %v1664 = vunpack.c.h.b16 %v1558
    %v1665 = vunpack.c.l.b16 %v1559
    %v1666 = vpack.c.b16 %v1663, %v1660
    %v1667 = vpack.c.b16 %v1664, %v1661
    %v1668 = vpack.c.b16 %v1665, %v1662
    %v1768 = vunpack.c.l.b16 %v1560
    %v1769 = vunpack.c.h.b16 %v1560
    %v1770 = vunpack.c.l.b16 %v1561
    %v1771 = vunpack.c.h.b16 %v1561
    %v1772 = vunpack.c.l.b16 %v1562
    %v1773 = vunpack.c.h.b16 %v1562
    %v1774 = vunpack.c.l.b16 %v1563
    %v1775 = vunpack.c.h.b16 %v1563
    %v1776 = vunpack.c.l.b16 %v1564
    %v1777 = vunpack.c.h.b16 %v1564
    %v1778 = vunpack.c.l.b16 %v1565
    %v1779 = vunpack.c.h.b16 %v1565
    %v1780 = vunpack.c.l.b16 %v1566
    %v1781 = vunpack.c.h.b16 %v1566
    %v1782 = vunpack.c.l.b16 %v1567
    %v1783 = vunpack.c.h.b16 %v1567
    %v1784 = vunpack.c.l.b16 %v1568
    %v1785 = vunpack.c.h.b16 %v1568
    %v1786 = vunpack.c.l.b16 %v1569
    %v1787 = vunpack.c.h.b16 %v1569
    %v1788 = vunpack.c.l.b16 %v1570
    %v1789 = vunpack.c.h.b16 %v1570
    %v1790 = vunpack.c.l.b16 %v1571
    %v1791 = vunpack.c.h.b16 %v1571
    %v1792 = vunpack.c.l.b16 %v1572
    %v1793 = vunpack.c.h.b16 %v1572
    %v1794 = vunpack.c.l.b16 %v1573
    %v1795 = vunpack.c.h.b16 %v1573
    %v1796 = vunpack.c.l.b16 %v1574
    %v1797 = vunpack.c.h.b16 %v1574
    %v1798 = vunpack.c.l.b16 %v1575
    %v1799 = vunpack.c.h.b16 %v1575
    %v1800 = vunpack.c.l.b16 %v1576
    %v1801 = vunpack.c.h.b16 %v1576
    %v1802 = vunpack.c.l.b16 %v1577
    %v1803 = vunpack.c.h.b16 %v1577
    %v1804 = vunpack.c.l.b16 %v1578
    %v1805 = vunpack.c.h.b16 %v1578
    %v1806 = vunpack.c.l.b16 %v1579
    %v1807 = vunpack.c.h.b16 %v1579
    %v1808 = vunpack.c.l.b16 %v1580
    %v1809 = vunpack.c.h.b16 %v1580
    %v1810 = vunpack.c.l.b16 %v1581
    %v1811 = vunpack.c.h.b16 %v1581
    %v1812 = vunpack.c.l.b16 %v1582
    %v1813 = vunpack.c.h.b16 %v1582
    %v1814 = vunpack.c.l.b16 %v1583
    %v1815 = vunpack.c.h.b16 %v1583
    %v1816 = vunpack.c.l.b16 %v1584
    %v1817 = vunpack.c.h.b16 %v1584
    %v1818 = vunpack.c.l.b16 %v1585
    %v1819 = vunpack.c.h.b16 %v1585
    %v1820 = vunpack.c.l.b16 %v1586
    %v1821 = vunpack.c.h.b16 %v1586
    %v1822 = vunpack.c.l.b16 %v1587
    %v1823 = vunpack.c.h.b16 %v1587
    %v1824 = vunpack.c.l.b16 %v1588
    %v1825 = vunpack.c.h.b16 %v1588
    %v1826 = vunpack.c.l.b16 %v1589
    %v1827 = vunpack.c.h.b16 %v1589
    %v1828 = vunpack.c.l.b16 %v1590
    %v1829 = vunpack.c.h.b16 %v1590
    %v1830 = vunpack.c.l.b16 %v1591
    %v1831 = vunpack.c.h.b16 %v1591
    %v1832 = vunpack.c.l.b16 %v1592
    %v1833 = vunpack.c.h.b16 %v1592
    %v1834 = vunpack.c.l.b16 %v1593
    %v1835 = vunpack.c.h.b16 %v1593
    %v1836 = vunpack.c.l.b16 %v1594
    %v1837 = vunpack.c.h.b16 %v1594
    %v1838 = vunpack.c.l.b16 %v1595
    %v1839 = vunpack.c.h.b16 %v1595
    %v1840 = vunpack.c.l.b16 %v1596
    %v1841 = vunpack.c.h.b16 %v1596
    %v1842 = vunpack.c.l.b16 %v1597
    %v1843 = vunpack.c.h.b16 %v1597
    %v1844 = vunpack.c.l.b16 %v1598
    %v1845 = vunpack.c.h.b16 %v1598
    %v1846 = vunpack.c.l.b16 %v1599
    %v1847 = vunpack.c.h.b16 %v1599
    %v1848 = vunpack.c.l.b16 %v1600
    %v1849 = vunpack.c.h.b16 %v1600
    %v1850 = vunpack.c.l.b16 %v1601
    %v1851 = vunpack.c.h.b16 %v1601
    %v1852 = vunpack.c.l.b16 %v1602
    %v1853 = vunpack.c.h.b16 %v1602
    %v1854 = vunpack.c.l.b16 %v1603
    %v1855 = vunpack.c.h.b16 %v1603
    %v1856 = vunpack.c.l.b16 %v1604
    %v1857 = vunpack.c.h.b16 %v1604
    %v1858 = vunpack.c.l.b16 %v1605
    %v1859 = vunpack.c.h.b16 %v1605
    %v1860 = vunpack.c.l.b16 %v1606
    %v1861 = vunpack.c.h.b16 %v1606
    %v1862 = vunpack.c.l.b16 %v1607
    %v1863 = vunpack.c.h.b16 %v1607
    %v1864 = vunpack.c.l.b16 %v1608
    %v1865 = vunpack.c.h.b16 %v1608
    %v1866 = vunpack.c.l.b16 %v1609
    %v1867 = vunpack.c.h.b16 %v1609
    %v1868 = vunpack.c.l.b16 %v1610
    %v1869 = vunpack.c.h.b16 %v1610
    %v1870 = vunpack.c.l.b16 %v1611
    %v1871 = vunpack.c.h.b16 %v1611
    %v1872 = vunpack.c.l.b16 %v1612
    %v1873 = vunpack.c.h.b16 %v1612
    %v1874 = vunpack.c.l.b16 %v1613
    %v1875 = vunpack.c.h.b16 %v1613
    %v1876 = vunpack.c.l.b16 %v1614
    %v1877 = vunpack.c.h.b16 %v1614
    %v1878 = vunpack.c.l.b16 %v1615
    %v1879 = vunpack.c.h.b16 %v1615
    %v1880 = vunpack.c.l.b16 %v1616
    %v1881 = vunpack.c.h.b16 %v1616
    %v1882 = vunpack.c.l.b16 %v1617
    %v1883 = vunpack.c.h.b16 %v1617
    %v1884 = vunpack.c.l.b16 %v1618
    %v1885 = vunpack.c.h.b16 %v1618
    %v1886 = vunpack.c.l.b16 %v1619
    %v1887 = vunpack.c.h.b16 %v1619
    %v1888 = vunpack.c.l.b16 %v1620
    %v1889 = vunpack.c.h.b16 %v1620
    %v1890 = vunpack.c.l.b16 %v1621
    %v1891 = vunpack.c.h.b16 %v1621
    %v1892 = vunpack.c.l.b16 %v1622
    %v1893 = vunpack.c.h.b16 %v1622
    %v1894 = vunpack.c.l.b16 %v1623
    %v1895 = vunpack.c.h.b16 %v1623
    %v1896 = vunpack.c.l.b16 %v1624
    %v1897 = vunpack.c.h.b16 %v1624
    %v1898 = vunpack.c.l.b16 %v1625
    %v1899 = vunpack.c.h.b16 %v1625
    %v1900 = vunpack.c.l.b16 %v1626
    %v1901 = vunpack.c.h.b16 %v1626
    %v1902 = vunpack.c.l.b16 %v1627
    %v1903 = vunpack.c.h.b16 %v1627
    %v1904 = vunpack.c.l.b16 %v1628
    %v1905 = vunpack.c.h.b16 %v1628
    %v1906 = vunpack.c.l.b16 %v1629
    %v1907 = vunpack.c.h.b16 %v1629
    %v1908 = vunpack.c.l.b16 %v1630
    %v1909 = vunpack.c.h.b16 %v1630
    %v1910 = vunpack.c.l.b16 %v1631
    %v1911 = vunpack.c.h.b16 %v1631
    %v1912 = vunpack.c.l.b16 %v1632
    %v1913 = vunpack.c.h.b16 %v1632
    %v1914 = vunpack.c.l.b16 %v1633
    %v1915 = vunpack.c.h.b16 %v1633
    %v1916 = vunpack.c.l.b16 %v1634
    %v1917 = vunpack.c.h.b16 %v1634
    %v1918 = vunpack.c.l.b16 %v1635
    %v1919 = vunpack.c.h.b16 %v1635
    %v1920 = vunpack.c.l.b16 %v1636
    %v1921 = vunpack.c.h.b16 %v1636
    %v1922 = vunpack.c.l.b16 %v1637
    %v1923 = vunpack.c.h.b16 %v1637
    %v1924 = vunpack.c.l.b16 %v1638
    %v1925 = vunpack.c.h.b16 %v1638
    %v1926 = vunpack.c.l.b16 %v1639
    %v1927 = vunpack.c.h.b16 %v1639
    %v1928 = vunpack.c.l.b16 %v1640
    %v1929 = vunpack.c.h.b16 %v1640
    %v1930 = vunpack.c.l.b16 %v1641
    %v1931 = vunpack.c.h.b16 %v1641
    %v1932 = vunpack.c.l.b16 %v1642
    %v1933 = vunpack.c.h.b16 %v1642
    %v1934 = vunpack.c.l.b16 %v1643
    %v1935 = vunpack.c.h.b16 %v1643
    %v1936 = vunpack.c.l.b16 %v1644
    %v1937 = vunpack.c.h.b16 %v1644
    %v1938 = vunpack.c.l.b16 %v1645
    %v1939 = vunpack.c.h.b16 %v1645
    %v1940 = vunpack.c.l.b16 %v1646
    %v1941 = vunpack.c.h.b16 %v1646
    %v1942 = vunpack.c.l.b16 %v1647
    %v1943 = vunpack.c.h.b16 %v1647
    %v1944 = vunpack.c.l.b16 %v1648
    %v1945 = vunpack.c.h.b16 %v1648
    %v1946 = vunpack.c.l.b16 %v1649
    %v1947 = vunpack.c.h.b16 %v1649
    %v1948 = vunpack.c.l.b16 %v1650
    %v1949 = vunpack.c.h.b16 %v1650
    %v1950 = vunpack.c.l.b16 %v1651
    %v1951 = vunpack.c.h.b16 %v1651
    %v1952 = vunpack.c.l.b16 %v1652
    %v1953 = vunpack.c.h.b16 %v1652
    %v1954 = vunpack.c.l.b16 %v1653
    %v1955 = vunpack.c.h.b16 %v1653
    %v1956 = vunpack.c.l.b16 %v1654
    %v1957 = vunpack.c.h.b16 %v1654
    %v1958 = vunpack.c.l.b16 %v1655
    %v1959 = vunpack.c.h.b16 %v1655
    %v1960 = vpack.c.b16 %v1772, %v1768
    %v1961 = vpack.c.b16 %v1773, %v1769
    %v1962 = vpack.c.b16 %v1774, %v1770
    %v1963 = vpack.c.b16 %v1775, %v1771
    %v1964 = vpack.c.b16 %v1780, %v1776
    %v1965 = vpack.c.b16 %v1781, %v1777
    %v1966 = vpack.c.b16 %v1782, %v1778
    %v1967 = vpack.c.b16 %v1783, %v1779
    %v1968 = vpack.c.b16 %v1788, %v1784
    %v1969 = vpack.c.b16 %v1789, %v1785
    %v1970 = vpack.c.b16 %v1790, %v1786
    %v1971 = vpack.c.b16 %v1791, %v1787
    %v1972 = vpack.c.b16 %v1796, %v1792
    %v1973 = vpack.c.b16 %v1797, %v1793
    %v1974 = vpack.c.b16 %v1798, %v1794
    %v1975 = vpack.c.b16 %v1799, %v1795
    %v1976 = vpack.c.b16 %v1804, %v1800
    %v1977 = vpack.c.b16 %v1805, %v1801
    %v1978 = vpack.c.b16 %v1806, %v1802
    %v1979 = vpack.c.b16 %v1807, %v1803
    %v1980 = vpack.c.b16 %v1812, %v1808
    %v1981 = vpack.c.b16 %v1813, %v1809
    %v1982 = vpack.c.b16 %v1814, %v1810
    %v1983 = vpack.c.b16 %v1815, %v1811
    %v1984 = vpack.c.b16 %v1820, %v1816
    %v1985 = vpack.c.b16 %v1821, %v1817
    %v1986 = vpack.c.b16 %v1822, %v1818
    %v1987 = vpack.c.b16 %v1823, %v1819
    %v1988 = vpack.c.b16 %v1828, %v1824
    %v1989 = vpack.c.b16 %v1829, %v1825
    %v1990 = vpack.c.b16 %v1830, %v1826
    %v1991 = vpack.c.b16 %v1831, %v1827
    %v1992 = vpack.c.b16 %v1836, %v1832
    %v1993 = vpack.c.b16 %v1837, %v1833
    %v1994 = vpack.c.b16 %v1838, %v1834
    %v1995 = vpack.c.b16 %v1839, %v1835
    %v1996 = vpack.c.b16 %v1844, %v1840
    %v1997 = vpack.c.b16 %v1845, %v1841
    %v1998 = vpack.c.b16 %v1846, %v1842
    %v1999 = vpack.c.b16 %v1847, %v1843
    %v2000 = vpack.c.b16 %v1852, %v1848
    %v2001 = vpack.c.b16 %v1853, %v1849
    %v2002 = vpack.c.b16 %v1854, %v1850
    %v2003 = vpack.c.b16 %v1855, %v1851
    %v2004 = vpack.c.b16 %v1860, %v1856
    %v2005 = vpack.c.b16 %v1861, %v1857
    %v2006 = vpack.c.b16 %v1862, %v1858
    %v2007 = vpack.c.b16 %v1863, %v1859
    %v2008 = vpack.c.b16 %v1868, %v1864
    %v2009 = vpack.c.b16 %v1869, %v1865
    %v2010 = vpack.c.b16 %v1870, %v1866
    %v2011 = vpack.c.b16 %v1871, %v1867
    %v2012 = vpack.c.b16 %v1876, %v1872
    %v2013 = vpack.c.b16 %v1877, %v1873
    %v2014 = vpack.c.b16 %v1878, %v1874
    %v2015 = vpack.c.b16 %v1879, %v1875
    %v2016 = vpack.c.b16 %v1884, %v1880
    %v2017 = vpack.c.b16 %v1885, %v1881
    %v2018 = vpack.c.b16 %v1886, %v1882
    %v2019 = vpack.c.b16 %v1887, %v1883
    %v2020 = vpack.c.b16 %v1892, %v1888
    %v2021 = vpack.c.b16 %v1893, %v1889
    %v2022 = vpack.c.b16 %v1894, %v1890
    %v2023 = vpack.c.b16 %v1895, %v1891
    %v2024 = vpack.c.b16 %v1900, %v1896
    %v2025 = vpack.c.b16 %v1901, %v1897
    %v2026 = vpack.c.b16 %v1902, %v1898
    %v2027 = vpack.c.b16 %v1903, %v1899
    %v2028 = vpack.c.b16 %v1908, %v1904
    %v2029 = vpack.c.b16 %v1909, %v1905
    %v2030 = vpack.c.b16 %v1910, %v1906
    %v2031 = vpack.c.b16 %v1911, %v1907
    %v2032 = vpack.c.b16 %v1916, %v1912
    %v2033 = vpack.c.b16 %v1917, %v1913
    %v2034 = vpack.c.b16 %v1918, %v1914
    %v2035 = vpack.c.b16 %v1919, %v1915
    %v2036 = vpack.c.b16 %v1924, %v1920
    %v2037 = vpack.c.b16 %v1925, %v1921
    %v2038 = vpack.c.b16 %v1926, %v1922
    %v2039 = vpack.c.b16 %v1927, %v1923
    %v2040 = vpack.c.b16 %v1932, %v1928
    %v2041 = vpack.c.b16 %v1933, %v1929
    %v2042 = vpack.c.b16 %v1934, %v1930
    %v2043 = vpack.c.b16 %v1935, %v1931
    %v2044 = vpack.c.b16 %v1940, %v1936
    %v2045 = vpack.c.b16 %v1941, %v1937
    %v2046 = vpack.c.b16 %v1942, %v1938
    %v2047 = vpack.c.b16 %v1943, %v1939
    %v2048 = vpack.c.b16 %v1948, %v1944
    %v2049 = vpack.c.b16 %v1949, %v1945
    %v2050 = vpack.c.b16 %v1950, %v1946
    %v2051 = vpack.c.b16 %v1951, %v1947
    %v2052 = vpack.c.b16 %v1956, %v1952
    %v2053 = vpack.c.b16 %v1957, %v1953
    %v2054 = vpack.c.b16 %v1958, %v1954
    %v2055 = vpack.c.b16 %v1959, %v1955
    %2152 = vmatpush.bf16.msra.mxu0 %v1988
    %2153 = vmatpush.bf16.msra.mxu0 %v1984
    %2154 = vmatpush.bf16.msra.mxu0 %v1980
    %2155 = vmatpush.bf16.msra.mxu0 %v1976
    %2156 = vmatpush.bf16.msra.mxu0 %v1972
    %2157 = vmatpush.bf16.msra.mxu0 %v1968
    %2158 = vmatpush.bf16.msra.mxu0 %v1964
    %2159 = vmatpush.bf16.msra.mxu0 %v1960
    %2160 = vmatmul.bf16.gmra.mxu0 %v1666
    %v2161 = vpop.f32.mrf.mxu0
    %v2162 = vadd.f32 0.0, %v2161
    %v2163 = vpop.f32.mrf.mxu0
    %v2164 = vadd.f32 0.0, %v2163
    %2165 = vdwg.mxu0
    %2166 = vmatpush.bf16.msra.mxu0 %v2020
    %2167 = vmatpush.bf16.msra.mxu0 %v2016
    %2168 = vmatpush.bf16.msra.mxu0 %v2012
    %2169 = vmatpush.bf16.msra.mxu0 %v2008
    %2170 = vmatpush.bf16.msra.mxu0 %v2004
    %2171 = vmatpush.bf16.msra.mxu0 %v2000
    %2172 = vmatpush.bf16.msra.mxu0 %v1996
    %2173 = vmatpush.bf16.msra.mxu0 %v1992
    %2174 = vmatmul.bf16.gmra.mxu0 %v1667
    %v2175 = vpop.f32.mrf.mxu0
    %v2176 = vadd.f32 %v2162, %v2175
    %v2177 = vpop.f32.mrf.mxu0
    %v2178 = vadd.f32 %v2164, %v2177
    %2179 = vdwg.mxu0
    %2180 = vmatpush.bf16.msra.mxu0 %v2052
    %2181 = vmatpush.bf16.msra.mxu0 %v2048
    %2182 = vmatpush.bf16.msra.mxu0 %v2044
    %2183 = vmatpush.bf16.msra.mxu0 %v2040
    %2184 = vmatpush.bf16.msra.mxu0 %v2036
    %2185 = vmatpush.bf16.msra.mxu0 %v2032
    %2186 = vmatpush.bf16.msra.mxu0 %v2028
    %2187 = vmatpush.bf16.msra.mxu0 %v2024
    %2188 = vmatmul.bf16.gmra.mxu0 %v1668
    %v2189 = vpop.f32.mrf.mxu0
    %v2190 = vadd.f32 %v2176, %v2189
    %v2191 = vpop.f32.mrf.mxu0
    %v2192 = vadd.f32 %v2178, %v2191
    %2193 = vdwg.mxu0
    %2194 = vmatpush.bf16.msra.mxu0 %v1989
    %2195 = vmatpush.bf16.msra.mxu0 %v1985
    %2196 = vmatpush.bf16.msra.mxu0 %v1981
    %2197 = vmatpush.bf16.msra.mxu0 %v1977
    %2198 = vmatpush.bf16.msra.mxu0 %v1973
    %2199 = vmatpush.bf16.msra.mxu0 %v1969
    %2200 = vmatpush.bf16.msra.mxu0 %v1965
    %2201 = vmatpush.bf16.msra.mxu0 %v1961
    %2202 = vmatmul.bf16.gmra.mxu0 %v1666
    %v2203 = vpop.f32.mrf.mxu0
    %v2204 = vadd.f32 0.0, %v2203
    %v2205 = vpop.f32.mrf.mxu0
    %v2206 = vadd.f32 0.0, %v2205
    %2207 = vdwg.mxu0
    %2208 = vmatpush.bf16.msra.mxu0 %v2021
    %2209 = vmatpush.bf16.msra.mxu0 %v2017
    %2210 = vmatpush.bf16.msra.mxu0 %v2013
    %2211 = vmatpush.bf16.msra.mxu0 %v2009
    %2212 = vmatpush.bf16.msra.mxu0 %v2005
    %2213 = vmatpush.bf16.msra.mxu0 %v2001
    %2214 = vmatpush.bf16.msra.mxu0 %v1997
    %2215 = vmatpush.bf16.msra.mxu0 %v1993
    %2216 = vmatmul.bf16.gmra.mxu0 %v1667
    %v2217 = vpop.f32.mrf.mxu0
    %v2218 = vadd.f32 %v2204, %v2217
    %v2219 = vpop.f32.mrf.mxu0
    %v2220 = vadd.f32 %v2206, %v2219
    %2221 = vdwg.mxu0
    %2222 = vmatpush.bf16.msra.mxu0 %v2053
    %2223 = vmatpush.bf16.msra.mxu0 %v2049
    %2224 = vmatpush.bf16.msra.mxu0 %v2045
    %2225 = vmatpush.bf16.msra.mxu0 %v2041
    %2226 = vmatpush.bf16.msra.mxu0 %v2037
    %2227 = vmatpush.bf16.msra.mxu0 %v2033
    %2228 = vmatpush.bf16.msra.mxu0 %v2029
    %2229 = vmatpush.bf16.msra.mxu0 %v2025
    %2230 = vmatmul.bf16.gmra.mxu0 %v1668
    %v2231 = vpop.f32.mrf.mxu0
    %v2232 = vadd.f32 %v2218, %v2231
    %v2233 = vpop.f32.mrf.mxu0
    %v2234 = vadd.f32 %v2220, %v2233
    %2235 = vdwg.mxu0
    %2236 = vmatpush.bf16.msra.mxu0 %v1990
    %2237 = vmatpush.bf16.msra.mxu0 %v1986
    %2238 = vmatpush.bf16.msra.mxu0 %v1982
    %2239 = vmatpush.bf16.msra.mxu0 %v1978
    %2240 = vmatpush.bf16.msra.mxu0 %v1974
    %2241 = vmatpush.bf16.msra.mxu0 %v1970
    %2242 = vmatpush.bf16.msra.mxu0 %v1966
    %2243 = vmatpush.bf16.msra.mxu0 %v1962
    %2244 = vmatmul.bf16.gmra.mxu0 %v1666
    %v2245 = vpop.f32.mrf.mxu0
    %v2246 = vadd.f32 0.0, %v2245
    %v2247 = vpop.f32.mrf.mxu0
    %v2248 = vadd.f32 0.0, %v2247
    %2249 = vdwg.mxu0
    %2250 = vmatpush.bf16.msra.mxu0 %v2022
    %2251 = vmatpush.bf16.msra.mxu0 %v2018
    %2252 = vmatpush.bf16.msra.mxu0 %v2014
    %2253 = vmatpush.bf16.msra.mxu0 %v2010
    %2254 = vmatpush.bf16.msra.mxu0 %v2006
    %2255 = vmatpush.bf16.msra.mxu0 %v2002
    %2256 = vmatpush.bf16.msra.mxu0 %v1998
    %2257 = vmatpush.bf16.msra.mxu0 %v1994
    %2258 = vmatmul.bf16.gmra.mxu0 %v1667
    %v2259 = vpop.f32.mrf.mxu0
    %v2260 = vadd.f32 %v2246, %v2259
    %v2261 = vpop.f32.mrf.mxu0
    %v2262 = vadd.f32 %v2248, %v2261
    %2263 = vdwg.mxu0
    %2264 = vmatpush.bf16.msra.mxu0 %v2054
    %2265 = vmatpush.bf16.msra.mxu0 %v2050
    %2266 = vmatpush.bf16.msra.mxu0 %v2046
    %2267 = vmatpush.bf16.msra.mxu0 %v2042
    %2268 = vmatpush.bf16.msra.mxu0 %v2038
    %2269 = vmatpush.bf16.msra.mxu0 %v2034
    %2270 = vmatpush.bf16.msra.mxu0 %v2030
    %2271 = vmatpush.bf16.msra.mxu0 %v2026
    %2272 = vmatmul.bf16.gmra.mxu0 %v1668
    %v2273 = vpop.f32.mrf.mxu0
    %v2274 = vadd.f32 %v2260, %v2273
    %v2275 = vpop.f32.mrf.mxu0
    %v2276 = vadd.f32 %v2262, %v2275
    %2277 = vdwg.mxu0
    %2278 = vmatpush.bf16.msra.mxu0 %v1991
    %2279 = vmatpush.bf16.msra.mxu0 %v1987
    %2280 = vmatpush.bf16.msra.mxu0 %v1983
    %2281 = vmatpush.bf16.msra.mxu0 %v1979
    %2282 = vmatpush.bf16.msra.mxu0 %v1975
    %2283 = vmatpush.bf16.msra.mxu0 %v1971
    %2284 = vmatpush.bf16.msra.mxu0 %v1967
    %2285 = vmatpush.bf16.msra.mxu0 %v1963
    %2286 = vmatmul.bf16.gmra.mxu0 %v1666
    %v2287 = vpop.f32.mrf.mxu0
    %v2288 = vadd.f32 0.0, %v2287
    %v2289 = vpop.f32.mrf.mxu0
    %v2290 = vadd.f32 0.0, %v2289
    %2291 = vdwg.mxu0
    %2292 = vmatpush.bf16.msra.mxu0 %v2023
    %2293 = vmatpush.bf16.msra.mxu0 %v2019
    %2294 = vmatpush.bf16.msra.mxu0 %v2015
    %2295 = vmatpush.bf16.msra.mxu0 %v2011
    %2296 = vmatpush.bf16.msra.mxu0 %v2007
    %2297 = vmatpush.bf16.msra.mxu0 %v2003
    %2298 = vmatpush.bf16.msra.mxu0 %v1999
    %2299 = vmatpush.bf16.msra.mxu0 %v1995
    %2300 = vmatmul.bf16.gmra.mxu0 %v1667
    %v2301 = vpop.f32.mrf.mxu0
    %v2302 = vadd.f32 %v2288, %v2301
    %v2303 = vpop.f32.mrf.mxu0
    %v2304 = vadd.f32 %v2290, %v2303
    %2305 = vdwg.mxu0
    %2306 = vmatpush.bf16.msra.mxu0 %v2055
    %2307 = vmatpush.bf16.msra.mxu0 %v2051
    %2308 = vmatpush.bf16.msra.mxu0 %v2047
    %2309 = vmatpush.bf16.msra.mxu0 %v2043
    %2310 = vmatpush.bf16.msra.mxu0 %v2039
    %2311 = vmatpush.bf16.msra.mxu0 %v2035
    %2312 = vmatpush.bf16.msra.mxu0 %v2031
    %2313 = vmatpush.bf16.msra.mxu0 %v2027
    %2314 = vmatmul.bf16.gmra.mxu0 %v1668
    %v2315 = vpop.f32.mrf.mxu0
    %v2316 = vadd.f32 %v2302, %v2315
    %v2317 = vpop.f32.mrf.mxu0
    %v2318 = vadd.f32 %v2304, %v2317
    %2319 = vdwg.mxu0
    %v2320 = vpack.c.bf16 %v2232, %v2190
    %v2321 = vpack.c.bf16 %v2316, %v2274
    %v2322 = vpack.c.bf16 %v2234, %v2192
    %v2323 = vpack.c.bf16 %v2318, %v2276
    %v2324 = vlaneseq
    %v2325 = vshrl.u32 %v2324, 7
    %v2326 = vstv %s1550
    %v2327 = vadd.s32 %v2326, %v2325
    %v2328 = vlaneseq
    %v2329 = vand.u32 %v2328, 127
    %vm2330 = vcmp.le.s32.totalorder %v2329, %v2327
    %v2331 = vld [vmem:[#allocation2] sm:$0xf]
    %v2332 = vld [vmem:[#allocation2 + $0x20] sm:$0xf]
    %v2333 = vld [vmem:[#allocation2 + $0x10] sm:$0xf]
    %v2334 = vld [vmem:[#allocation2 + $0x30] sm:$0xf]
    %2335 = vmatpush.bf16.xpose.msra.mxu0 0
    %2336 = vmatpush.bf16.xpose.msra.mxu0 0
    %2337 = vmatpush.bf16.xpose.msra.mxu0 0
    %2338 = vmatpush.bf16.xpose.msra.mxu0 0
    %2339 = vmatpush.bf16.xpose.msra.mxu0 0
    %2340 = vmatpush.bf16.xpose.msra.mxu0 0
    %2341 = vmatpush.bf16.xpose.msra.mxu0 0
    %2342 = vmatpush.bf16.xpose.msra.mxu0 %v2331
    %2343 = vmatmul.bf16.gmra.mxu0 %v2320
    %v2344 = vpop.f32.mrf.mxu0
    %v2345 = vadd.f32 0.0, %v2344
    %v2346 = vpop.f32.mrf.mxu0
    %2347 = vdwg.mxu0
    %2348 = vmatpush.bf16.xpose.msra.mxu0 0
    %2349 = vmatpush.bf16.xpose.msra.mxu0 0
    %2350 = vmatpush.bf16.xpose.msra.mxu0 0
    %2351 = vmatpush.bf16.xpose.msra.mxu0 0
    %2352 = vmatpush.bf16.xpose.msra.mxu0 0
    %2353 = vmatpush.bf16.xpose.msra.mxu0 0
    %2354 = vmatpush.bf16.xpose.msra.mxu0 0
    %2355 = vmatpush.bf16.xpose.msra.mxu0 %v2332
    %2356 = vmatmul.bf16.gmra.mxu0 %v2322
    %v2357 = vpop.f32.mrf.mxu0
    %v2358 = vadd.f32 0.0, %v2357
    %v2359 = vpop.f32.mrf.mxu0
    %2360 = vdwg.mxu0
    %v2361 = vsel %vm2330, 1, 0
    %vm2362 = vcmp.eq.s32.totalorder %v2361, 1
    %v2363 = vsel %vm2362, %v2345, -1e+30
    %v2364 = vsel %vm2362, %v2358, -1e+30
    %vm2365 = vcmask 64512
    %v2366 = vsel %vm2365, %v2363, -inf
    %2367 = vmax.xlane.f32.xlu0 %v2366
    %v2368 = vpop.xlane.xlu0 %2367
    %v2369 = vsel %vm2365, %v2364, -inf
    %2370 = vmax.xlane.f32.xlu0 %v2369
    %v2371 = vpop.xlane.xlu0 %2370
    %v2372 = vsub.f32 %v2363, %v2368
    %v2373 = vsub.f32 %v2364, %v2371
    %v2374 = vmul.f32 %v2372, 1.442695
    %v2375 = vpow.pop %v2374
    %v2376 = vmul.f32 %v2373, 1.442695
    %v2377 = vpow.pop %v2376
    %v2378 = vsel %vm2365, %v2375, 0.0
    %2379 = vadd.xlane.f32.xlu0 %v2378
    %v2380 = vpop.xlane.xlu0 %2379
    %v2381 = vsel %vm2365, %v2377, 0.0
    %2382 = vadd.xlane.f32.xlu0 %v2381
    %v2383 = vpop.xlane.xlu0 %2382
    %v2384 = vrcp.pop %v2380
    %v2385 = vrcp.pop %v2383
    %v2386 = vmul.f32 %v2375, %v2384
    %v2387 = vmul.f32 %v2377, %v2385
    %v2388 = vpack.c.bf16 %v2386, %v2386
    %v2389 = vpack.c.bf16 %v2387, %v2387
    %v2391 = vsel %vm2365, %v2388, 0
    %vm2393 = vcmask 1043456
    %v2395 = vsel %vm2393, %v2333, 0
    %2397 = vmatpush.bf16.msra.mxu0 0
    %2398 = vmatpush.bf16.msra.mxu0 0
    %2399 = vmatpush.bf16.msra.mxu0 0
    %2400 = vmatpush.bf16.msra.mxu0 0
    %2401 = vmatpush.bf16.msra.mxu0 0
    %2402 = vmatpush.bf16.msra.mxu0 0
    %2403 = vmatpush.bf16.msra.mxu0 0
    %2404 = vmatpush.bf16.msra.mxu0 %v2395
    %2405 = vmatmul.bf16.gmra.mxu0 %v2391
    %v2406 = vpop.f32.mrf.mxu0
    %v2407 = vadd.f32 0.0, %v2406
    %v2408 = vpop.f32.mrf.mxu0
    %2409 = vdwg.mxu0
    %v2411 = vsel %vm2365, %v2389, 0
    %v2414 = vsel %vm2393, %v2334, 0
    %2416 = vmatpush.bf16.msra.mxu0 0
    %2417 = vmatpush.bf16.msra.mxu0 0
    %2418 = vmatpush.bf16.msra.mxu0 0
    %2419 = vmatpush.bf16.msra.mxu0 0
    %2420 = vmatpush.bf16.msra.mxu0 0
    %2421 = vmatpush.bf16.msra.mxu0 0
    %2422 = vmatpush.bf16.msra.mxu0 0
    %2423 = vmatpush.bf16.msra.mxu0 %v2414
    %2424 = vmatmul.bf16.gmra.mxu0 %v2411
    %v2425 = vpop.f32.mrf.mxu0
    %v2426 = vadd.f32 0.0, %v2425
    %v2427 = vpop.f32.mrf.mxu0
    %2428 = vdwg.mxu0
    %v2429 = vpack.c.bf16 %v2407, %v2407
    %v2430 = vpack.c.bf16 %v2426, %v2426
    %v2431 = vld [vmem:[%s3] sm:$0xff]
    %v2432 = vld [vmem:[%s3 + $0x8] sm:$0xf]
    %v2433 = vld [vmem:[%s3 + $0xc] sm:$0xff]
    %v2434 = vld [vmem:[%s3 + $0x14] sm:$0xf]
    %v2435 = vld [vmem:[%s3 + $0x18] sm:$0xff]
    %v2436 = vld [vmem:[%s3 + $0x20] sm:$0xf]
    %v2437 = vld [vmem:[%s3 + $0x24] sm:$0xff]
    %v2438 = vld [vmem:[%s3 + $0x2c] sm:$0xf]
    %v2439 = vld [vmem:[%s3 + $0x30] sm:$0xff]
    %v2440 = vld [vmem:[%s3 + $0x38] sm:$0xf]
    %v2441 = vld [vmem:[%s3 + $0x3c] sm:$0xff]
    %v2442 = vld [vmem:[%s3 + $0x44] sm:$0xf]
    %v2443 = vld [vmem:[%s3 + $0x48] sm:$0xff]
    %v2444 = vld [vmem:[%s3 + $0x50] sm:$0xf]
    %v2445 = vld [vmem:[%s3 + $0x54] sm:$0xff]
    %v2446 = vld [vmem:[%s3 + $0x5c] sm:$0xf]
    %v2447 = vld [vmem:[%s3 + $0x60] sm:$0xff]
    %v2448 = vld [vmem:[%s3 + $0x68] sm:$0xf]
    %v2449 = vld [vmem:[%s3 + $0x6c] sm:$0xff]
    %v2450 = vld [vmem:[%s3 + $0x74] sm:$0xf]
    %v2451 = vld [vmem:[%s3 + $0x78] sm:$0xff]
    %v2452 = vld [vmem:[%s3 + $0x80] sm:$0xf]
    %v2453 = vld [vmem:[%s3 + $0x84] sm:$0xff]
    %v2454 = vld [vmem:[%s3 + $0x8c] sm:$0xf]
    %v2455 = vld [vmem:[%s3 + $0x90] sm:$0xff]
    %v2456 = vld [vmem:[%s3 + $0x98] sm:$0xf]
    %v2457 = vld [vmem:[%s3 + $0x9c] sm:$0xff]
    %v2458 = vld [vmem:[%s3 + $0xa4] sm:$0xf]
    %v2459 = vld [vmem:[%s3 + $0xa8] sm:$0xff]
    %v2460 = vld [vmem:[%s3 + $0xb0] sm:$0xf]
    %v2461 = vld [vmem:[%s3 + $0xb4] sm:$0xff]
    %v2462 = vld [vmem:[%s3 + $0xbc] sm:$0xf]
    %v2463 = vld [vmem:[#allocation2 + $0x4] sm:$0xf]
    %v2464 = vld [vmem:[#allocation2 + $0x24] sm:$0xf]
    %v2465 = vld [vmem:[#allocation2 + $0x14] sm:$0xf]
    %v2466 = vld [vmem:[#allocation2 + $0x34] sm:$0xf]
    %v2468 = vrot.slane %v2320, 4
    %2470 = vmatpush.bf16.xpose.msra.mxu0 0
    %2471 = vmatpush.bf16.xpose.msra.mxu0 0
    %2472 = vmatpush.bf16.xpose.msra.mxu0 0
    %2473 = vmatpush.bf16.xpose.msra.mxu0 0
    %2474 = vmatpush.bf16.xpose.msra.mxu0 0
    %2475 = vmatpush.bf16.xpose.msra.mxu0 0
    %2476 = vmatpush.bf16.xpose.msra.mxu0 0
    %2477 = vmatpush.bf16.xpose.msra.mxu0 %v2463
    %2478 = vmatmul.bf16.gmra.mxu0 %v2468
    %v2479 = vpop.f32.mrf.mxu0
    %v2480 = vadd.f32 0.0, %v2479
    %v2481 = vpop.f32.mrf.mxu0
    %2482 = vdwg.mxu0
    %v2484 = vrot.slane %v2322, 4
    %2486 = vmatpush.bf16.xpose.msra.mxu0 0
    %2487 = vmatpush.bf16.xpose.msra.mxu0 0
    %2488 = vmatpush.bf16.xpose.msra.mxu0 0
    %2489 = vmatpush.bf16.xpose.msra.mxu0 0
    %2490 = vmatpush.bf16.xpose.msra.mxu0 0
    %2491 = vmatpush.bf16.xpose.msra.mxu0 0
    %2492 = vmatpush.bf16.xpose.msra.mxu0 0
    %2493 = vmatpush.bf16.xpose.msra.mxu0 %v2464
    %2494 = vmatmul.bf16.gmra.mxu0 %v2484
    %v2495 = vpop.f32.mrf.mxu0
    %v2496 = vadd.f32 0.0, %v2495
    %v2497 = vpop.f32.mrf.mxu0
    %2498 = vdwg.mxu0
    %v2499 = vsel %vm2362, %v2480, -1e+30
    %v2500 = vsel %vm2362, %v2496, -1e+30
    %v2501 = vsel %vm2365, %v2499, -inf
    %2502 = vmax.xlane.f32.xlu0 %v2501
    %v2503 = vpop.xlane.xlu0 %2502
    %v2504 = vsel %vm2365, %v2500, -inf
    %2505 = vmax.xlane.f32.xlu0 %v2504
    %v2506 = vpop.xlane.xlu0 %2505
    %v2507 = vsub.f32 %v2499, %v2503
    %v2508 = vsub.f32 %v2500, %v2506
    %v2509 = vmul.f32 %v2507, 1.442695
    %v2510 = vpow.pop %v2509
    %v2511 = vmul.f32 %v2508, 1.442695
    %v2512 = vpow.pop %v2511
    %v2513 = vsel %vm2365, %v2510, 0.0
    %2514 = vadd.xlane.f32.xlu0 %v2513
    %v2515 = vpop.xlane.xlu0 %2514
    %v2516 = vsel %vm2365, %v2512, 0.0
    %2517 = vadd.xlane.f32.xlu0 %v2516
    %v2518 = vpop.xlane.xlu0 %2517
    %v2519 = vrcp.pop %v2515
    %v2520 = vrcp.pop %v2518
    %v2521 = vmul.f32 %v2510, %v2519
    %v2522 = vmul.f32 %v2512, %v2520
    %v2523 = vpack.c.bf16 %v2521, %v2521
    %v2524 = vpack.c.bf16 %v2522, %v2522
    %v2526 = vsel %vm2365, %v2523, 0
    %v2529 = vsel %vm2393, %v2465, 0
    %2531 = vmatpush.bf16.msra.mxu0 0
    %2532 = vmatpush.bf16.msra.mxu0 0
    %2533 = vmatpush.bf16.msra.mxu0 0
    %2534 = vmatpush.bf16.msra.mxu0 0
    %2535 = vmatpush.bf16.msra.mxu0 0
    %2536 = vmatpush.bf16.msra.mxu0 0
    %2537 = vmatpush.bf16.msra.mxu0 0
    %2538 = vmatpush.bf16.msra.mxu0 %v2529
    %2539 = vmatmul.bf16.gmra.mxu0 %v2526
    %v2540 = vpop.f32.mrf.mxu0
    %v2541 = vadd.f32 0.0, %v2540
    %v2542 = vpop.f32.mrf.mxu0
    %2543 = vdwg.mxu0
    %v2545 = vsel %vm2365, %v2524, 0
    %v2548 = vsel %vm2393, %v2466, 0
    %2550 = vmatpush.bf16.msra.mxu0 0
    %2551 = vmatpush.bf16.msra.mxu0 0
    %2552 = vmatpush.bf16.msra.mxu0 0
    %2553 = vmatpush.bf16.msra.mxu0 0
    %2554 = vmatpush.bf16.msra.mxu0 0
    %2555 = vmatpush.bf16.msra.mxu0 0
    %2556 = vmatpush.bf16.msra.mxu0 0
    %2557 = vmatpush.bf16.msra.mxu0 %v2548
    %2558 = vmatmul.bf16.gmra.mxu0 %v2545
    %v2559 = vpop.f32.mrf.mxu0
    %v2560 = vadd.f32 0.0, %v2559
    %v2561 = vpop.f32.mrf.mxu0
    %2562 = vdwg.mxu0
    %v2563 = vpack.c.bf16 %v2541, %v2541
    %v2564 = vpack.c.bf16 %v2560, %v2560
    %v2565 = vld [vmem:[%s3 + $0xc0] sm:$0xff]
    %v2566 = vld [vmem:[%s3 + $0xc8] sm:$0xf]
    %v2567 = vld [vmem:[%s3 + $0xcc] sm:$0xff]
    %v2568 = vld [vmem:[%s3 + $0xd4] sm:$0xf]
    %v2569 = vld [vmem:[%s3 + $0xd8] sm:$0xff]
    %v2570 = vld [vmem:[%s3 + $0xe0] sm:$0xf]
    %v2571 = vld [vmem:[%s3 + $0xe4] sm:$0xff]
    %v2572 = vld [vmem:[%s3 + $0xec] sm:$0xf]
    %v2573 = vld [vmem:[%s3 + $0xf0] sm:$0xff]
    %v2574 = vld [vmem:[%s3 + $0xf8] sm:$0xf]
    %v2575 = vld [vmem:[%s3 + $0xfc] sm:$0xff]
    %v2576 = vld [vmem:[%s3 + $0x104] sm:$0xf]
    %v2577 = vld [vmem:[%s3 + $0x108] sm:$0xff]
    %v2578 = vld [vmem:[%s3 + $0x110] sm:$0xf]
    %v2579 = vld [vmem:[%s3 + $0x114] sm:$0xff]
    %v2580 = vld [vmem:[%s3 + $0x11c] sm:$0xf]
    %v2581 = vld [vmem:[%s3 + $0x120] sm:$0xff]
    %v2582 = vld [vmem:[%s3 + $0x128] sm:$0xf]
    %v2583 = vld [vmem:[%s3 + $0x12c] sm:$0xff]
    %v2584 = vld [vmem:[%s3 + $0x134] sm:$0xf]
    %v2585 = vld [vmem:[%s3 + $0x138] sm:$0xff]
    %v2586 = vld [vmem:[%s3 + $0x140] sm:$0xf]
    %v2587 = vld [vmem:[%s3 + $0x144] sm:$0xff]
    %v2588 = vld [vmem:[%s3 + $0x14c] sm:$0xf]
    %v2589 = vld [vmem:[%s3 + $0x150] sm:$0xff]
    %v2590 = vld [vmem:[%s3 + $0x158] sm:$0xf]
    %v2591 = vld [vmem:[%s3 + $0x15c] sm:$0xff]
    %v2592 = vld [vmem:[%s3 + $0x164] sm:$0xf]
    %v2593 = vld [vmem:[%s3 + $0x168] sm:$0xff]
    %v2594 = vld [vmem:[%s3 + $0x170] sm:$0xf]
    %v2595 = vld [vmem:[%s3 + $0x174] sm:$0xff]
    %v2596 = vld [vmem:[%s3 + $0x17c] sm:$0xf]
    %v2599 = vunpack.c.l.b16 %v2563
    %v2600 = vunpack.c.l.b16 %v2564
    %v2601 = vpack.c.b16 %v2600, %v2599
    %v2635 = vunpack.c.l.b16 %v2565
    %v2636 = vunpack.c.h.b16 %v2565
    %v2637 = vunpack.c.l.b16 %v2566
    %v2638 = vunpack.c.l.b16 %v2567
    %v2639 = vunpack.c.h.b16 %v2567
    %v2640 = vunpack.c.l.b16 %v2568
    %v2641 = vunpack.c.l.b16 %v2569
    %v2642 = vunpack.c.h.b16 %v2569
    %v2643 = vunpack.c.l.b16 %v2570
    %v2644 = vunpack.c.l.b16 %v2571
    %v2645 = vunpack.c.h.b16 %v2571
    %v2646 = vunpack.c.l.b16 %v2572
    %v2647 = vunpack.c.l.b16 %v2573
    %v2648 = vunpack.c.h.b16 %v2573
    %v2649 = vunpack.c.l.b16 %v2574
    %v2650 = vunpack.c.l.b16 %v2575
    %v2651 = vunpack.c.h.b16 %v2575
    %v2652 = vunpack.c.l.b16 %v2576
    %v2653 = vunpack.c.l.b16 %v2577
    %v2654 = vunpack.c.h.b16 %v2577
    %v2655 = vunpack.c.l.b16 %v2578
    %v2656 = vunpack.c.l.b16 %v2579
    %v2657 = vunpack.c.h.b16 %v2579
    %v2658 = vunpack.c.l.b16 %v2580
    %v2659 = vunpack.c.l.b16 %v2581
    %v2660 = vunpack.c.h.b16 %v2581
    %v2661 = vunpack.c.l.b16 %v2582
    %v2662 = vunpack.c.l.b16 %v2583
    %v2663 = vunpack.c.h.b16 %v2583
    %v2664 = vunpack.c.l.b16 %v2584
    %v2665 = vunpack.c.l.b16 %v2585
    %v2666 = vunpack.c.h.b16 %v2585
    %v2667 = vunpack.c.l.b16 %v2586
    %v2668 = vunpack.c.l.b16 %v2587
    %v2669 = vunpack.c.h.b16 %v2587
    %v2670 = vunpack.c.l.b16 %v2588
    %v2671 = vunpack.c.l.b16 %v2589
    %v2672 = vunpack.c.h.b16 %v2589
    %v2673 = vunpack.c.l.b16 %v2590
    %v2674 = vunpack.c.l.b16 %v2591
    %v2675 = vunpack.c.h.b16 %v2591
    %v2676 = vunpack.c.l.b16 %v2592
    %v2677 = vunpack.c.l.b16 %v2593
    %v2678 = vunpack.c.h.b16 %v2593
    %v2679 = vunpack.c.l.b16 %v2594
    %v2680 = vunpack.c.l.b16 %v2595
    %v2681 = vunpack.c.h.b16 %v2595
    %v2682 = vunpack.c.l.b16 %v2596
    %v2683 = vpack.c.b16 %v2638, %v2635
    %v2684 = vpack.c.b16 %v2639, %v2636
    %v2685 = vpack.c.b16 %v2640, %v2637
    %v2686 = vpack.c.b16 %v2644, %v2641
    %v2687 = vpack.c.b16 %v2645, %v2642
    %v2688 = vpack.c.b16 %v2646, %v2643
    %v2689 = vpack.c.b16 %v2650, %v2647
    %v2690 = vpack.c.b16 %v2651, %v2648
    %v2691 = vpack.c.b16 %v2652, %v2649
    %v2692 = vpack.c.b16 %v2656, %v2653
    %v2693 = vpack.c.b16 %v2657, %v2654
    %v2694 = vpack.c.b16 %v2658, %v2655
    %v2695 = vpack.c.b16 %v2662, %v2659
    %v2696 = vpack.c.b16 %v2663, %v2660
    %v2697 = vpack.c.b16 %v2664, %v2661
    %v2698 = vpack.c.b16 %v2668, %v2665
    %v2699 = vpack.c.b16 %v2669, %v2666
    %v2700 = vpack.c.b16 %v2670, %v2667
    %v2701 = vpack.c.b16 %v2674, %v2671
    %v2702 = vpack.c.b16 %v2675, %v2672
    %v2703 = vpack.c.b16 %v2676, %v2673
    %v2704 = vpack.c.b16 %v2680, %v2677
    %v2705 = vpack.c.b16 %v2681, %v2678
    %v2706 = vpack.c.b16 %v2682, %v2679
    %2731 = vmatpush.bf16.msra.mxu0 %v2704
    %2732 = vmatpush.bf16.msra.mxu0 %v2701
    %2733 = vmatpush.bf16.msra.mxu0 %v2698
    %2734 = vmatpush.bf16.msra.mxu0 %v2695
    %2735 = vmatpush.bf16.msra.mxu0 %v2692
    %2736 = vmatpush.bf16.msra.mxu0 %v2689
    %2737 = vmatpush.bf16.msra.mxu0 %v2686
    %2738 = vmatpush.bf16.msra.mxu0 %v2683
    %2739 = vmatmul.bf16.gmra.mxu0 %v2601
    %v2740 = vpop.f32.mrf.mxu0
    %v2741 = vadd.f32 0.0, %v2740
    %v2742 = vpop.f32.mrf.mxu0
    %v2743 = vadd.f32 0.0, %v2742
    %2744 = vdwg.mxu0
    %2745 = vmatpush.bf16.msra.mxu0 %v2705
    %2746 = vmatpush.bf16.msra.mxu0 %v2702
    %2747 = vmatpush.bf16.msra.mxu0 %v2699
    %2748 = vmatpush.bf16.msra.mxu0 %v2696
    %2749 = vmatpush.bf16.msra.mxu0 %v2693
    %2750 = vmatpush.bf16.msra.mxu0 %v2690
    %2751 = vmatpush.bf16.msra.mxu0 %v2687
    %2752 = vmatpush.bf16.msra.mxu0 %v2684
    %2753 = vmatmul.bf16.gmra.mxu0 %v2601
    %v2754 = vpop.f32.mrf.mxu0
    %v2755 = vadd.f32 0.0, %v2754
    %v2756 = vpop.f32.mrf.mxu0
    %v2757 = vadd.f32 0.0, %v2756
    %2758 = vdwg.mxu0
    %2759 = vmatpush.bf16.msra.mxu0 %v2706
    %2760 = vmatpush.bf16.msra.mxu0 %v2703
    %2761 = vmatpush.bf16.msra.mxu0 %v2700
    %2762 = vmatpush.bf16.msra.mxu0 %v2697
    %2763 = vmatpush.bf16.msra.mxu0 %v2694
    %2764 = vmatpush.bf16.msra.mxu0 %v2691
    %2765 = vmatpush.bf16.msra.mxu0 %v2688
    %2766 = vmatpush.bf16.msra.mxu0 %v2685
    %2767 = vmatmul.bf16.gmra.mxu0 %v2601
    %v2768 = vpop.f32.mrf.mxu0
    %v2769 = vadd.f32 0.0, %v2768
    %v2770 = vpop.f32.mrf.mxu0
    %v2771 = vadd.f32 0.0, %v2770
    %2772 = vdwg.mxu0
    %v2775 = vunpack.c.l.b16 %v2429
    %v2776 = vunpack.c.l.b16 %v2430
    %v2777 = vpack.c.b16 %v2776, %v2775
    %v2811 = vunpack.c.l.b16 %v2431
    %v2812 = vunpack.c.h.b16 %v2431
    %v2813 = vunpack.c.l.b16 %v2432
    %v2814 = vunpack.c.l.b16 %v2433
    %v2815 = vunpack.c.h.b16 %v2433
    %v2816 = vunpack.c.l.b16 %v2434
    %v2817 = vunpack.c.l.b16 %v2435
    %v2818 = vunpack.c.h.b16 %v2435
    %v2819 = vunpack.c.l.b16 %v2436
    %v2820 = vunpack.c.l.b16 %v2437
    %v2821 = vunpack.c.h.b16 %v2437
    %v2822 = vunpack.c.l.b16 %v2438
    %v2823 = vunpack.c.l.b16 %v2439
    %v2824 = vunpack.c.h.b16 %v2439
    %v2825 = vunpack.c.l.b16 %v2440
    %v2826 = vunpack.c.l.b16 %v2441
    %v2827 = vunpack.c.h.b16 %v2441
    %v2828 = vunpack.c.l.b16 %v2442
    %v2829 = vunpack.c.l.b16 %v2443
    %v2830 = vunpack.c.h.b16 %v2443
    %v2831 = vunpack.c.l.b16 %v2444
    %v2832 = vunpack.c.l.b16 %v2445
    %v2833 = vunpack.c.h.b16 %v2445
    %v2834 = vunpack.c.l.b16 %v2446
    %v2835 = vunpack.c.l.b16 %v2447
    %v2836 = vunpack.c.h.b16 %v2447
    %v2837 = vunpack.c.l.b16 %v2448
    %v2838 = vunpack.c.l.b16 %v2449
    %v2839 = vunpack.c.h.b16 %v2449
    %v2840 = vunpack.c.l.b16 %v2450
    %v2841 = vunpack.c.l.b16 %v2451
    %v2842 = vunpack.c.h.b16 %v2451
    %v2843 = vunpack.c.l.b16 %v2452
    %v2844 = vunpack.c.l.b16 %v2453
    %v2845 = vunpack.c.h.b16 %v2453
    %v2846 = vunpack.c.l.b16 %v2454
    %v2847 = vunpack.c.l.b16 %v2455
    %v2848 = vunpack.c.h.b16 %v2455
    %v2849 = vunpack.c.l.b16 %v2456
    %v2850 = vunpack.c.l.b16 %v2457
    %v2851 = vunpack.c.h.b16 %v2457
    %v2852 = vunpack.c.l.b16 %v2458
    %v2853 = vunpack.c.l.b16 %v2459
    %v2854 = vunpack.c.h.b16 %v2459
    %v2855 = vunpack.c.l.b16 %v2460
    %v2856 = vunpack.c.l.b16 %v2461
    %v2857 = vunpack.c.h.b16 %v2461
    %v2858 = vunpack.c.l.b16 %v2462
    %v2859 = vpack.c.b16 %v2814, %v2811
    %v2860 = vpack.c.b16 %v2815, %v2812
    %v2861 = vpack.c.b16 %v2816, %v2813
    %v2862 = vpack.c.b16 %v2820, %v2817
    %v2863 = vpack.c.b16 %v2821, %v2818
    %v2864 = vpack.c.b16 %v2822, %v2819
    %v2865 = vpack.c.b16 %v2826, %v2823
    %v2866 = vpack.c.b16 %v2827, %v2824
    %v2867 = vpack.c.b16 %v2828, %v2825
    %v2868 = vpack.c.b16 %v2832, %v2829
    %v2869 = vpack.c.b16 %v2833, %v2830
    %v2870 = vpack.c.b16 %v2834, %v2831
    %v2871 = vpack.c.b16 %v2838, %v2835
    %v2872 = vpack.c.b16 %v2839, %v2836
    %v2873 = vpack.c.b16 %v2840, %v2837
    %v2874 = vpack.c.b16 %v2844, %v2841
    %v2875 = vpack.c.b16 %v2845, %v2842
    %v2876 = vpack.c.b16 %v2846, %v2843
    %v2877 = vpack.c.b16 %v2850, %v2847
    %v2878 = vpack.c.b16 %v2851, %v2848
    %v2879 = vpack.c.b16 %v2852, %v2849
    %v2880 = vpack.c.b16 %v2856, %v2853
    %v2881 = vpack.c.b16 %v2857, %v2854
    %v2882 = vpack.c.b16 %v2858, %v2855
    %2907 = vmatpush.bf16.msra.mxu0 %v2880
    %2908 = vmatpush.bf16.msra.mxu0 %v2877
    %2909 = vmatpush.bf16.msra.mxu0 %v2874
    %2910 = vmatpush.bf16.msra.mxu0 %v2871
    %2911 = vmatpush.bf16.msra.mxu0 %v2868
    %2912 = vmatpush.bf16.msra.mxu0 %v2865
    %2913 = vmatpush.bf16.msra.mxu0 %v2862
    %2914 = vmatpush.bf16.msra.mxu0 %v2859
    %2915 = vmatmul.bf16.gmra.mxu0 %v2777
    %v2916 = vpop.f32.mrf.mxu0
    %v2917 = vadd.f32 %v2741, %v2916
    %v2918 = vpop.f32.mrf.mxu0
    %v2919 = vadd.f32 %v2743, %v2918
    %2920 = vdwg.mxu0
    %2921 = vmatpush.bf16.msra.mxu0 %v2881
    %2922 = vmatpush.bf16.msra.mxu0 %v2878
    %2923 = vmatpush.bf16.msra.mxu0 %v2875
    %2924 = vmatpush.bf16.msra.mxu0 %v2872
    %2925 = vmatpush.bf16.msra.mxu0 %v2869
    %2926 = vmatpush.bf16.msra.mxu0 %v2866
    %2927 = vmatpush.bf16.msra.mxu0 %v2863
    %2928 = vmatpush.bf16.msra.mxu0 %v2860
    %2929 = vmatmul.bf16.gmra.mxu0 %v2777
    %v2930 = vpop.f32.mrf.mxu0
    %v2931 = vadd.f32 %v2755, %v2930
    %v2932 = vpop.f32.mrf.mxu0
    %v2933 = vadd.f32 %v2757, %v2932
    %2934 = vdwg.mxu0
    %2935 = vmatpush.bf16.msra.mxu0 %v2882
    %2936 = vmatpush.bf16.msra.mxu0 %v2879
    %2937 = vmatpush.bf16.msra.mxu0 %v2876
    %2938 = vmatpush.bf16.msra.mxu0 %v2873
    %2939 = vmatpush.bf16.msra.mxu0 %v2870
    %2940 = vmatpush.bf16.msra.mxu0 %v2867
    %2941 = vmatpush.bf16.msra.mxu0 %v2864
    %2942 = vmatpush.bf16.msra.mxu0 %v2861
    %2943 = vmatmul.bf16.gmra.mxu0 %v2777
    %v2944 = vpop.f32.mrf.mxu0
    %v2945 = vadd.f32 %v2769, %v2944
    %v2946 = vpop.f32.mrf.mxu0
    %v2947 = vadd.f32 %v2771, %v2946
    %2948 = vdwg.mxu0
    %v2949 = vld [vmem:[#allocation2 + $0x8] sm:$0xf]
    %v2950 = vld [vmem:[#allocation2 + $0x28] sm:$0xf]
    %v2951 = vld [vmem:[#allocation2 + $0x18] sm:$0xf]
    %v2952 = vld [vmem:[#allocation2 + $0x38] sm:$0xf]
    %2953 = vmatpush.bf16.xpose.msra.mxu0 0
    %2954 = vmatpush.bf16.xpose.msra.mxu0 0
    %2955 = vmatpush.bf16.xpose.msra.mxu0 0
    %2956 = vmatpush.bf16.xpose.msra.mxu0 0
    %2957 = vmatpush.bf16.xpose.msra.mxu0 0
    %2958 = vmatpush.bf16.xpose.msra.mxu0 0
    %2959 = vmatpush.bf16.xpose.msra.mxu0 0
    %2960 = vmatpush.bf16.xpose.msra.mxu0 %v2949
    %2961 = vmatmul.bf16.gmra.mxu0 %v2321
    %v2962 = vpop.f32.mrf.mxu0
    %v2963 = vadd.f32 0.0, %v2962
    %v2964 = vpop.f32.mrf.mxu0
    %2965 = vdwg.mxu0
    %2966 = vmatpush.bf16.xpose.msra.mxu0 0
    %2967 = vmatpush.bf16.xpose.msra.mxu0 0
    %2968 = vmatpush.bf16.xpose.msra.mxu0 0
    %2969 = vmatpush.bf16.xpose.msra.mxu0 0
    %2970 = vmatpush.bf16.xpose.msra.mxu0 0
    %2971 = vmatpush.bf16.xpose.msra.mxu0 0
    %2972 = vmatpush.bf16.xpose.msra.mxu0 0
    %2973 = vmatpush.bf16.xpose.msra.mxu0 %v2950
    %2974 = vmatmul.bf16.gmra.mxu0 %v2323
    %v2975 = vpop.f32.mrf.mxu0
    %v2976 = vadd.f32 0.0, %v2975
    %v2977 = vpop.f32.mrf.mxu0
    %2978 = vdwg.mxu0
    %v2979 = vsel %vm2362, %v2963, -1e+30
    %v2980 = vsel %vm2362, %v2976, -1e+30
    %v2981 = vsel %vm2365, %v2979, -inf
    %2982 = vmax.xlane.f32.xlu0 %v2981
    %v2983 = vpop.xlane.xlu0 %2982
    %v2984 = vsel %vm2365, %v2980, -inf
    %2985 = vmax.xlane.f32.xlu0 %v2984
    %v2986 = vpop.xlane.xlu0 %2985
    %v2987 = vsub.f32 %v2979, %v2983
    %v2988 = vsub.f32 %v2980, %v2986
    %v2989 = vmul.f32 %v2987, 1.442695
    %v2990 = vpow.pop %v2989
    %v2991 = vmul.f32 %v2988, 1.442695
    %v2992 = vpow.pop %v2991
    %v2993 = vsel %vm2365, %v2990, 0.0
    %2994 = vadd.xlane.f32.xlu0 %v2993
    %v2995 = vpop.xlane.xlu0 %2994
    %v2996 = vsel %vm2365, %v2992, 0.0
    %2997 = vadd.xlane.f32.xlu0 %v2996
    %v2998 = vpop.xlane.xlu0 %2997
    %v2999 = vrcp.pop %v2995
    %v3000 = vrcp.pop %v2998
    %v3001 = vmul.f32 %v2990, %v2999
    %v3002 = vmul.f32 %v2992, %v3000
    %v3003 = vpack.c.bf16 %v3001, %v3001
    %v3004 = vpack.c.bf16 %v3002, %v3002
    %v3006 = vsel %vm2365, %v3003, 0
    %v3009 = vsel %vm2393, %v2951, 0
    %3011 = vmatpush.bf16.msra.mxu0 0
    %3012 = vmatpush.bf16.msra.mxu0 0
    %3013 = vmatpush.bf16.msra.mxu0 0
    %3014 = vmatpush.bf16.msra.mxu0 0
    %3015 = vmatpush.bf16.msra.mxu0 0
    %3016 = vmatpush.bf16.msra.mxu0 0
    %3017 = vmatpush.bf16.msra.mxu0 0
    %3018 = vmatpush.bf16.msra.mxu0 %v3009
    %3019 = vmatmul.bf16.gmra.mxu0 %v3006
    %v3020 = vpop.f32.mrf.mxu0
    %v3021 = vadd.f32 0.0, %v3020
    %v3022 = vpop.f32.mrf.mxu0
    %3023 = vdwg.mxu0
    %v3025 = vsel %vm2365, %v3004, 0
    %v3028 = vsel %vm2393, %v2952, 0
    %3030 = vmatpush.bf16.msra.mxu0 0
    %3031 = vmatpush.bf16.msra.mxu0 0
    %3032 = vmatpush.bf16.msra.mxu0 0
    %3033 = vmatpush.bf16.msra.mxu0 0
    %3034 = vmatpush.bf16.msra.mxu0 0
    %3035 = vmatpush.bf16.msra.mxu0 0
    %3036 = vmatpush.bf16.msra.mxu0 0
    %3037 = vmatpush.bf16.msra.mxu0 %v3028
    %3038 = vmatmul.bf16.gmra.mxu0 %v3025
    %v3039 = vpop.f32.mrf.mxu0
    %v3040 = vadd.f32 0.0, %v3039
    %v3041 = vpop.f32.mrf.mxu0
    %3042 = vdwg.mxu0
    %v3043 = vpack.c.bf16 %v3021, %v3021
    %v3044 = vpack.c.bf16 %v3040, %v3040
    %v3045 = vld [vmem:[%s3 + $0x180] sm:$0xff]
    %v3046 = vld [vmem:[%s3 + $0x188] sm:$0xf]
    %v3047 = vld [vmem:[%s3 + $0x18c] sm:$0xff]
    %v3048 = vld [vmem:[%s3 + $0x194] sm:$0xf]
    %v3049 = vld [vmem:[%s3 + $0x198] sm:$0xff]
    %v3050 = vld [vmem:[%s3 + $0x1a0] sm:$0xf]
    %v3051 = vld [vmem:[%s3 + $0x1a4] sm:$0xff]
    %v3052 = vld [vmem:[%s3 + $0x1ac] sm:$0xf]
    %v3053 = vld [vmem:[%s3 + $0x1b0] sm:$0xff]
    %v3054 = vld [vmem:[%s3 + $0x1b8] sm:$0xf]
    %v3055 = vld [vmem:[%s3 + $0x1bc] sm:$0xff]
    %v3056 = vld [vmem:[%s3 + $0x1c4] sm:$0xf]
    %v3057 = vld [vmem:[%s3 + $0x1c8] sm:$0xff]
    %v3058 = vld [vmem:[%s3 + $0x1d0] sm:$0xf]
    %v3059 = vld [vmem:[%s3 + $0x1d4] sm:$0xff]
    %v3060 = vld [vmem:[%s3 + $0x1dc] sm:$0xf]
    %v3061 = vld [vmem:[%s3 + $0x1e0] sm:$0xff]
    %v3062 = vld [vmem:[%s3 + $0x1e8] sm:$0xf]
    %v3063 = vld [vmem:[%s3 + $0x1ec] sm:$0xff]
    %v3064 = vld [vmem:[%s3 + $0x1f4] sm:$0xf]
    %v3065 = vld [vmem:[%s3 + $0x1f8] sm:$0xff]
    %v3066 = vld [vmem:[%s3 + $0x200] sm:$0xf]
    %v3067 = vld [vmem:[%s3 + $0x204] sm:$0xff]
    %v3068 = vld [vmem:[%s3 + $0x20c] sm:$0xf]
    %v3069 = vld [vmem:[%s3 + $0x210] sm:$0xff]
    %v3070 = vld [vmem:[%s3 + $0x218] sm:$0xf]
    %v3071 = vld [vmem:[%s3 + $0x21c] sm:$0xff]
    %v3072 = vld [vmem:[%s3 + $0x224] sm:$0xf]
    %v3073 = vld [vmem:[%s3 + $0x228] sm:$0xff]
    %v3074 = vld [vmem:[%s3 + $0x230] sm:$0xf]
    %v3075 = vld [vmem:[%s3 + $0x234] sm:$0xff]
    %v3076 = vld [vmem:[%s3 + $0x23c] sm:$0xf]
    %v3079 = vunpack.c.l.b16 %v3043
    %v3080 = vunpack.c.l.b16 %v3044
    %v3081 = vpack.c.b16 %v3080, %v3079
    %v3115 = vunpack.c.l.b16 %v3045
    %v3116 = vunpack.c.h.b16 %v3045
    %v3117 = vunpack.c.l.b16 %v3046
    %v3118 = vunpack.c.l.b16 %v3047
    %v3119 = vunpack.c.h.b16 %v3047
    %v3120 = vunpack.c.l.b16 %v3048
    %v3121 = vunpack.c.l.b16 %v3049
    %v3122 = vunpack.c.h.b16 %v3049
    %v3123 = vunpack.c.l.b16 %v3050
    %v3124 = vunpack.c.l.b16 %v3051
    %v3125 = vunpack.c.h.b16 %v3051
    %v3126 = vunpack.c.l.b16 %v3052
    %v3127 = vunpack.c.l.b16 %v3053
    %v3128 = vunpack.c.h.b16 %v3053
    %v3129 = vunpack.c.l.b16 %v3054
    %v3130 = vunpack.c.l.b16 %v3055
    %v3131 = vunpack.c.h.b16 %v3055
    %v3132 = vunpack.c.l.b16 %v3056
    %v3133 = vunpack.c.l.b16 %v3057
    %v3134 = vunpack.c.h.b16 %v3057
    %v3135 = vunpack.c.l.b16 %v3058
    %v3136 = vunpack.c.l.b16 %v3059
    %v3137 = vunpack.c.h.b16 %v3059
    %v3138 = vunpack.c.l.b16 %v3060
    %v3139 = vunpack.c.l.b16 %v3061
    %v3140 = vunpack.c.h.b16 %v3061
    %v3141 = vunpack.c.l.b16 %v3062
    %v3142 = vunpack.c.l.b16 %v3063
    %v3143 = vunpack.c.h.b16 %v3063
    %v3144 = vunpack.c.l.b16 %v3064
    %v3145 = vunpack.c.l.b16 %v3065
    %v3146 = vunpack.c.h.b16 %v3065
    %v3147 = vunpack.c.l.b16 %v3066
    %v3148 = vunpack.c.l.b16 %v3067
    %v3149 = vunpack.c.h.b16 %v3067
    %v3150 = vunpack.c.l.b16 %v3068
    %v3151 = vunpack.c.l.b16 %v3069
    %v3152 = vunpack.c.h.b16 %v3069
    %v3153 = vunpack.c.l.b16 %v3070
    %v3154 = vunpack.c.l.b16 %v3071
    %v3155 = vunpack.c.h.b16 %v3071
    %v3156 = vunpack.c.l.b16 %v3072
    %v3157 = vunpack.c.l.b16 %v3073
    %v3158 = vunpack.c.h.b16 %v3073
    %v3159 = vunpack.c.l.b16 %v3074
    %v3160 = vunpack.c.l.b16 %v3075
    %v3161 = vunpack.c.h.b16 %v3075
    %v3162 = vunpack.c.l.b16 %v3076
    %v3163 = vpack.c.b16 %v3118, %v3115
    %v3164 = vpack.c.b16 %v3119, %v3116
    %v3165 = vpack.c.b16 %v3120, %v3117
    %v3166 = vpack.c.b16 %v3124, %v3121
    %v3167 = vpack.c.b16 %v3125, %v3122
    %v3168 = vpack.c.b16 %v3126, %v3123
    %v3169 = vpack.c.b16 %v3130, %v3127
    %v3170 = vpack.c.b16 %v3131, %v3128
    %v3171 = vpack.c.b16 %v3132, %v3129
    %v3172 = vpack.c.b16 %v3136, %v3133
    %v3173 = vpack.c.b16 %v3137, %v3134
    %v3174 = vpack.c.b16 %v3138, %v3135
    %v3175 = vpack.c.b16 %v3142, %v3139
    %v3176 = vpack.c.b16 %v3143, %v3140
    %v3177 = vpack.c.b16 %v3144, %v3141
    %v3178 = vpack.c.b16 %v3148, %v3145
    %v3179 = vpack.c.b16 %v3149, %v3146
    %v3180 = vpack.c.b16 %v3150, %v3147
    %v3181 = vpack.c.b16 %v3154, %v3151
    %v3182 = vpack.c.b16 %v3155, %v3152
    %v3183 = vpack.c.b16 %v3156, %v3153
    %v3184 = vpack.c.b16 %v3160, %v3157
    %v3185 = vpack.c.b16 %v3161, %v3158
    %v3186 = vpack.c.b16 %v3162, %v3159
    %3211 = vmatpush.bf16.msra.mxu0 %v3184
    %3212 = vmatpush.bf16.msra.mxu0 %v3181
    %3213 = vmatpush.bf16.msra.mxu0 %v3178
    %3214 = vmatpush.bf16.msra.mxu0 %v3175
    %3215 = vmatpush.bf16.msra.mxu0 %v3172
    %3216 = vmatpush.bf16.msra.mxu0 %v3169
    %3217 = vmatpush.bf16.msra.mxu0 %v3166
    %3218 = vmatpush.bf16.msra.mxu0 %v3163
    %3219 = vmatmul.bf16.gmra.mxu0 %v3081
    %v3220 = vpop.f32.mrf.mxu0
    %v3221 = vadd.f32 0.0, %v3220
    %v3222 = vpop.f32.mrf.mxu0
    %v3223 = vadd.f32 0.0, %v3222
    %3224 = vdwg.mxu0
    %3225 = vmatpush.bf16.msra.mxu0 %v3185
    %3226 = vmatpush.bf16.msra.mxu0 %v3182
    %3227 = vmatpush.bf16.msra.mxu0 %v3179
    %3228 = vmatpush.bf16.msra.mxu0 %v3176
    %3229 = vmatpush.bf16.msra.mxu0 %v3173
    %3230 = vmatpush.bf16.msra.mxu0 %v3170
    %3231 = vmatpush.bf16.msra.mxu0 %v3167
    %3232 = vmatpush.bf16.msra.mxu0 %v3164
    %3233 = vmatmul.bf16.gmra.mxu0 %v3081
    %v3234 = vpop.f32.mrf.mxu0
    %v3235 = vadd.f32 0.0, %v3234
    %v3236 = vpop.f32.mrf.mxu0
    %v3237 = vadd.f32 0.0, %v3236
    %3238 = vdwg.mxu0
    %3239 = vmatpush.bf16.msra.mxu0 %v3186
    %3240 = vmatpush.bf16.msra.mxu0 %v3183
    %3241 = vmatpush.bf16.msra.mxu0 %v3180
    %3242 = vmatpush.bf16.msra.mxu0 %v3177
    %3243 = vmatpush.bf16.msra.mxu0 %v3174
    %3244 = vmatpush.bf16.msra.mxu0 %v3171
    %3245 = vmatpush.bf16.msra.mxu0 %v3168
    %3246 = vmatpush.bf16.msra.mxu0 %v3165
    %3247 = vmatmul.bf16.gmra.mxu0 %v3081
    %v3248 = vpop.f32.mrf.mxu0
    %v3249 = vadd.f32 0.0, %v3248
    %v3250 = vpop.f32.mrf.mxu0
    %v3251 = vadd.f32 0.0, %v3250
    %3252 = vdwg.mxu0
    %v3253 = vadd.f32 %v2917, %v3221
    %v3254 = vadd.f32 %v2931, %v3235
    %v3255 = vadd.f32 %v2945, %v3249
    %v3256 = vadd.f32 %v2919, %v3223
    %v3257 = vadd.f32 %v2933, %v3237
    %v3258 = vadd.f32 %v2947, %v3251
    %v3259 = vld [vmem:[#allocation2 + $0xc] sm:$0xf]
    %v3260 = vld [vmem:[#allocation2 + $0x2c] sm:$0xf]
    %v3261 = vld [vmem:[#allocation2 + $0x1c] sm:$0xf]
    %v3262 = vld [vmem:[#allocation2 + $0x3c] sm:$0xf]
    %v3264 = vrot.slane %v2321, 4
    %3266 = vmatpush.bf16.xpose.msra.mxu0 0
    %3267 = vmatpush.bf16.xpose.msra.mxu0 0
    %3268 = vmatpush.bf16.xpose.msra.mxu0 0
    %3269 = vmatpush.bf16.xpose.msra.mxu0 0
    %3270 = vmatpush.bf16.xpose.msra.mxu0 0
    %3271 = vmatpush.bf16.xpose.msra.mxu0 0
    %3272 = vmatpush.bf16.xpose.msra.mxu0 0
    %3273 = vmatpush.bf16.xpose.msra.mxu0 %v3259
    %3274 = vmatmul.bf16.gmra.mxu0 %v3264
    %v3275 = vpop.f32.mrf.mxu0
    %v3276 = vadd.f32 0.0, %v3275
    %v3277 = vpop.f32.mrf.mxu0
    %3278 = vdwg.mxu0
    %v3280 = vrot.slane %v2323, 4
    %3282 = vmatpush.bf16.xpose.msra.mxu0 0
    %3283 = vmatpush.bf16.xpose.msra.mxu0 0
    %3284 = vmatpush.bf16.xpose.msra.mxu0 0
    %3285 = vmatpush.bf16.xpose.msra.mxu0 0
    %3286 = vmatpush.bf16.xpose.msra.mxu0 0
    %3287 = vmatpush.bf16.xpose.msra.mxu0 0
    %3288 = vmatpush.bf16.xpose.msra.mxu0 0
    %3289 = vmatpush.bf16.xpose.msra.mxu0 %v3260
    %3290 = vmatmul.bf16.gmra.mxu0 %v3280
    %v3291 = vpop.f32.mrf.mxu0
    %v3292 = vadd.f32 0.0, %v3291
    %v3293 = vpop.f32.mrf.mxu0
    %3294 = vdwg.mxu0
    %v3295 = vsel %vm2362, %v3276, -1e+30
    %v3296 = vsel %vm2362, %v3292, -1e+30
    %v3297 = vsel %vm2365, %v3295, -inf
    %3298 = vmax.xlane.f32.xlu0 %v3297
    %v3299 = vpop.xlane.xlu0 %3298
    %v3300 = vsel %vm2365, %v3296, -inf
    %3301 = vmax.xlane.f32.xlu0 %v3300
    %v3302 = vpop.xlane.xlu0 %3301
    %v3303 = vsub.f32 %v3295, %v3299
    %v3304 = vsub.f32 %v3296, %v3302
    %v3305 = vmul.f32 %v3303, 1.442695
    %v3306 = vpow.pop %v3305
    %v3307 = vmul.f32 %v3304, 1.442695
    %v3308 = vpow.pop %v3307
    %v3309 = vsel %vm2365, %v3306, 0.0
    %3310 = vadd.xlane.f32.xlu0 %v3309
    %v3311 = vpop.xlane.xlu0 %3310
    %v3312 = vsel %vm2365, %v3308, 0.0
    %3313 = vadd.xlane.f32.xlu0 %v3312
    %v3314 = vpop.xlane.xlu0 %3313
    %v3315 = vrcp.pop %v3311
    %v3316 = vrcp.pop %v3314
    %v3317 = vmul.f32 %v3306, %v3315
    %v3318 = vmul.f32 %v3308, %v3316
    %v3319 = vpack.c.bf16 %v3317, %v3317
    %v3320 = vpack.c.bf16 %v3318, %v3318
    %v3322 = vsel %vm2365, %v3319, 0
    %v3325 = vsel %vm2393, %v3261, 0
    %3327 = vmatpush.bf16.msra.mxu0 0
    %3328 = vmatpush.bf16.msra.mxu0 0
    %3329 = vmatpush.bf16.msra.mxu0 0
    %3330 = vmatpush.bf16.msra.mxu0 0
    %3331 = vmatpush.bf16.msra.mxu0 0
    %3332 = vmatpush.bf16.msra.mxu0 0
    %3333 = vmatpush.bf16.msra.mxu0 0
    %3334 = vmatpush.bf16.msra.mxu0 %v3325
    %3335 = vmatmul.bf16.gmra.mxu0 %v3322
    %v3336 = vpop.f32.mrf.mxu0
    %v3337 = vadd.f32 0.0, %v3336
    %v3338 = vpop.f32.mrf.mxu0
    %3339 = vdwg.mxu0
    %v3341 = vsel %vm2365, %v3320, 0
    %v3344 = vsel %vm2393, %v3262, 0
    %3346 = vmatpush.bf16.msra.mxu0 0
    %3347 = vmatpush.bf16.msra.mxu0 0
    %3348 = vmatpush.bf16.msra.mxu0 0
    %3349 = vmatpush.bf16.msra.mxu0 0
    %3350 = vmatpush.bf16.msra.mxu0 0
    %3351 = vmatpush.bf16.msra.mxu0 0
    %3352 = vmatpush.bf16.msra.mxu0 0
    %3353 = vmatpush.bf16.msra.mxu0 %v3344
    %3354 = vmatmul.bf16.gmra.mxu0 %v3341
    %v3355 = vpop.f32.mrf.mxu0
    %v3356 = vadd.f32 0.0, %v3355
    %v3357 = vpop.f32.mrf.mxu0
    %3358 = vdwg.mxu0
    %v3359 = vpack.c.bf16 %v3337, %v3337
    %v3360 = vpack.c.bf16 %v3356, %v3356
    %v3361 = vld [vmem:[%s3 + $0x240] sm:$0xff]
    %v3362 = vld [vmem:[%s3 + $0x248] sm:$0xf]
    %v3363 = vld [vmem:[%s3 + $0x24c] sm:$0xff]
    %v3364 = vld [vmem:[%s3 + $0x254] sm:$0xf]
    %v3365 = vld [vmem:[%s3 + $0x258] sm:$0xff]
    %v3366 = vld [vmem:[%s3 + $0x260] sm:$0xf]
    %v3367 = vld [vmem:[%s3 + $0x264] sm:$0xff]
    %v3368 = vld [vmem:[%s3 + $0x26c] sm:$0xf]
    %v3369 = vld [vmem:[%s3 + $0x270] sm:$0xff]
    %v3370 = vld [vmem:[%s3 + $0x278] sm:$0xf]
    %v3371 = vld [vmem:[%s3 + $0x27c] sm:$0xff]
    %v3372 = vld [vmem:[%s3 + $0x284] sm:$0xf]
    %v3373 = vld [vmem:[%s3 + $0x288] sm:$0xff]
    %v3374 = vld [vmem:[%s3 + $0x290] sm:$0xf]
    %v3375 = vld [vmem:[%s3 + $0x294] sm:$0xff]
    %v3376 = vld [vmem:[%s3 + $0x29c] sm:$0xf]
    %v3377 = vld [vmem:[%s3 + $0x2a0] sm:$0xff]
    %v3378 = vld [vmem:[%s3 + $0x2a8] sm:$0xf]
    %v3379 = vld [vmem:[%s3 + $0x2ac] sm:$0xff]
    %v3380 = vld [vmem:[%s3 + $0x2b4] sm:$0xf]
    %v3381 = vld [vmem:[%s3 + $0x2b8] sm:$0xff]
    %v3382 = vld [vmem:[%s3 + $0x2c0] sm:$0xf]
    %v3383 = vld [vmem:[%s3 + $0x2c4] sm:$0xff]
    %v3384 = vld [vmem:[%s3 + $0x2cc] sm:$0xf]
    %v3385 = vld [vmem:[%s3 + $0x2d0] sm:$0xff]
    %v3386 = vld [vmem:[%s3 + $0x2d8] sm:$0xf]
    %v3387 = vld [vmem:[%s3 + $0x2dc] sm:$0xff]
    %v3388 = vld [vmem:[%s3 + $0x2e4] sm:$0xf]
    %v3389 = vld [vmem:[%s3 + $0x2e8] sm:$0xff]
    %v3390 = vld [vmem:[%s3 + $0x2f0] sm:$0xf]
    %v3391 = vld [vmem:[%s3 + $0x2f4] sm:$0xff]
    %v3392 = vld [vmem:[%s3 + $0x2fc] sm:$0xf]
    %v3395 = vunpack.c.l.b16 %v3359
    %v3396 = vunpack.c.l.b16 %v3360
    %v3397 = vpack.c.b16 %v3396, %v3395
    %v3431 = vunpack.c.l.b16 %v3361
    %v3432 = vunpack.c.h.b16 %v3361
    %v3433 = vunpack.c.l.b16 %v3362
    %v3434 = vunpack.c.l.b16 %v3363
    %v3435 = vunpack.c.h.b16 %v3363
    %v3436 = vunpack.c.l.b16 %v3364
    %v3437 = vunpack.c.l.b16 %v3365
    %v3438 = vunpack.c.h.b16 %v3365
    %v3439 = vunpack.c.l.b16 %v3366
    %v3440 = vunpack.c.l.b16 %v3367
    %v3441 = vunpack.c.h.b16 %v3367
    %v3442 = vunpack.c.l.b16 %v3368
    %v3443 = vunpack.c.l.b16 %v3369
    %v3444 = vunpack.c.h.b16 %v3369
    %v3445 = vunpack.c.l.b16 %v3370
    %v3446 = vunpack.c.l.b16 %v3371
    %v3447 = vunpack.c.h.b16 %v3371
    %v3448 = vunpack.c.l.b16 %v3372
    %v3449 = vunpack.c.l.b16 %v3373
    %v3450 = vunpack.c.h.b16 %v3373
    %v3451 = vunpack.c.l.b16 %v3374
    %v3452 = vunpack.c.l.b16 %v3375
    %v3453 = vunpack.c.h.b16 %v3375
    %v3454 = vunpack.c.l.b16 %v3376
    %v3455 = vunpack.c.l.b16 %v3377
    %v3456 = vunpack.c.h.b16 %v3377
    %v3457 = vunpack.c.l.b16 %v3378
    %v3458 = vunpack.c.l.b16 %v3379
    %v3459 = vunpack.c.h.b16 %v3379
    %v3460 = vunpack.c.l.b16 %v3380
    %v3461 = vunpack.c.l.b16 %v3381
    %v3462 = vunpack.c.h.b16 %v3381
    %v3463 = vunpack.c.l.b16 %v3382
    %v3464 = vunpack.c.l.b16 %v3383
    %v3465 = vunpack.c.h.b16 %v3383
    %v3466 = vunpack.c.l.b16 %v3384
    %v3467 = vunpack.c.l.b16 %v3385
    %v3468 = vunpack.c.h.b16 %v3385
    %v3469 = vunpack.c.l.b16 %v3386
    %v3470 = vunpack.c.l.b16 %v3387
    %v3471 = vunpack.c.h.b16 %v3387
    %v3472 = vunpack.c.l.b16 %v3388
    %v3473 = vunpack.c.l.b16 %v3389
    %v3474 = vunpack.c.h.b16 %v3389
    %v3475 = vunpack.c.l.b16 %v3390
    %v3476 = vunpack.c.l.b16 %v3391
    %v3477 = vunpack.c.h.b16 %v3391
    %v3478 = vunpack.c.l.b16 %v3392
    %v3479 = vpack.c.b16 %v3434, %v3431
    %v3480 = vpack.c.b16 %v3435, %v3432
    %v3481 = vpack.c.b16 %v3436, %v3433
    %v3482 = vpack.c.b16 %v3440, %v3437
    %v3483 = vpack.c.b16 %v3441, %v3438
    %v3484 = vpack.c.b16 %v3442, %v3439
    %v3485 = vpack.c.b16 %v3446, %v3443
    %v3486 = vpack.c.b16 %v3447, %v3444
    %v3487 = vpack.c.b16 %v3448, %v3445
    %v3488 = vpack.c.b16 %v3452, %v3449
    %v3489 = vpack.c.b16 %v3453, %v3450
    %v3490 = vpack.c.b16 %v3454, %v3451
    %v3491 = vpack.c.b16 %v3458, %v3455
    %v3492 = vpack.c.b16 %v3459, %v3456
    %v3493 = vpack.c.b16 %v3460, %v3457
    %v3494 = vpack.c.b16 %v3464, %v3461
    %v3495 = vpack.c.b16 %v3465, %v3462
    %v3496 = vpack.c.b16 %v3466, %v3463
    %v3497 = vpack.c.b16 %v3470, %v3467
    %v3498 = vpack.c.b16 %v3471, %v3468
    %v3499 = vpack.c.b16 %v3472, %v3469
    %v3500 = vpack.c.b16 %v3476, %v3473
    %v3501 = vpack.c.b16 %v3477, %v3474
    %v3502 = vpack.c.b16 %v3478, %v3475
    %3527 = vmatpush.bf16.msra.mxu0 %v3500
    %3528 = vmatpush.bf16.msra.mxu0 %v3497
    %3529 = vmatpush.bf16.msra.mxu0 %v3494
    %3530 = vmatpush.bf16.msra.mxu0 %v3491
    %3531 = vmatpush.bf16.msra.mxu0 %v3488
    %3532 = vmatpush.bf16.msra.mxu0 %v3485
    %3533 = vmatpush.bf16.msra.mxu0 %v3482
    %3534 = vmatpush.bf16.msra.mxu0 %v3479
    %3535 = vmatmul.bf16.gmra.mxu0 %v3397
    %v3536 = vpop.f32.mrf.mxu0
    %v3537 = vadd.f32 0.0, %v3536
    %v3538 = vpop.f32.mrf.mxu0
    %v3539 = vadd.f32 0.0, %v3538
    %3540 = vdwg.mxu0
    %3541 = vmatpush.bf16.msra.mxu0 %v3501
    %3542 = vmatpush.bf16.msra.mxu0 %v3498
    %3543 = vmatpush.bf16.msra.mxu0 %v3495
    %3544 = vmatpush.bf16.msra.mxu0 %v3492
    %3545 = vmatpush.bf16.msra.mxu0 %v3489
    %3546 = vmatpush.bf16.msra.mxu0 %v3486
    %3547 = vmatpush.bf16.msra.mxu0 %v3483
    %3548 = vmatpush.bf16.msra.mxu0 %v3480
    %3549 = vmatmul.bf16.gmra.mxu0 %v3397
    %v3550 = vpop.f32.mrf.mxu0
    %v3551 = vadd.f32 0.0, %v3550
    %v3552 = vpop.f32.mrf.mxu0
    %v3553 = vadd.f32 0.0, %v3552
    %3554 = vdwg.mxu0
    %3555 = vmatpush.bf16.msra.mxu0 %v3502
    %3556 = vmatpush.bf16.msra.mxu0 %v3499
    %3557 = vmatpush.bf16.msra.mxu0 %v3496
    %3558 = vmatpush.bf16.msra.mxu0 %v3493
    %3559 = vmatpush.bf16.msra.mxu0 %v3490
    %3560 = vmatpush.bf16.msra.mxu0 %v3487
    %3561 = vmatpush.bf16.msra.mxu0 %v3484
    %3562 = vmatpush.bf16.msra.mxu0 %v3481
    %3563 = vmatmul.bf16.gmra.mxu0 %v3397
    %v3564 = vpop.f32.mrf.mxu0
    %v3565 = vadd.f32 0.0, %v3564
    %v3566 = vpop.f32.mrf.mxu0
    %v3567 = vadd.f32 0.0, %v3566
    %3568 = vdwg.mxu0
    %v3569 = vadd.f32 %v3253, %v3537
    %v3570 = vadd.f32 %v3254, %v3551
    %v3571 = vadd.f32 %v3255, %v3565
    %v3572 = vadd.f32 %v3256, %v3539
    %v3573 = vadd.f32 %v3257, %v3553
    %v3574 = vadd.f32 %v3258, %v3567
    %v3575 = vld [vmem:[%s4] sm:$0x7]
    %v3577 = vperm.slane %v3575, 0
    %v3578 = vperm.slane %v3575, 1
    %v3579 = vperm.slane %v3575, 2
    %v3583 = vadd.f32 %v3569, %v3577
    %v3584 = vadd.f32 %v3570, %v3578
    %v3585 = vadd.f32 %v3571, %v3579
    %v3586 = vadd.f32 %v3572, %v3577
    %v3587 = vadd.f32 %v3573, %v3578
    %v3588 = vadd.f32 %v3574, %v3579
    %3589 = vst [vmem:[#allocation3] sm:$0xff] %v3583
    %3590 = vst [vmem:[#allocation3 + $0x8] sm:$0xff] %v3584
    %3591 = vst [vmem:[#allocation3 + $0x10] sm:$0xff] %v3585
    %3592 = vst [vmem:[#allocation3 + $0x18] sm:$0xff] %v3586
    %3593 = vst [vmem:[#allocation3 + $0x20] sm:$0xff] %v3587
    %3594 = vst [vmem:[#allocation3 + $0x28] sm:$0xff] %v3588
    // Predicated region
    $region26: #{multi_head_attention.1} parent=1 // pred_check
      _
    $region27: #{multi_head_attention.1} parent=1 // pred_check_branch
      %3596 = sbr.rel (0) target = $region29
    $region28: #{multi_head_attention.1} parent=1 // pred_region
      %3598 = vsyncadd [#allocation4], 0
      %s3599 = sshll.u32 [#allocation3], 4
      %s3600 = int_to_ptr.vmem [resolvable:$true] %s3599
      %s3601 = sshll.u32 %s5, 4
      %s3602 = int_to_ptr.hbm [resolvable:$true] %s3601
      %3607 = dma.vmem_to_hbm [thread:$0]  %s3600, 768, %s3602, [#allocation4], 384, 384, 24
    $region29: #{multi_head_attention.1} parent=1 // pred_fallthru
      _
    // Predicated region
    $region30: #{multi_head_attention.1} parent=1 // pred_check
      _
    $region31: #{multi_head_attention.1} parent=1 // pred_check_branch
      %3609 = sbr.rel (0) target = $region33
    $region32: #{multi_head_attention.1} parent=1 // pred_region
      %3611 = dma.done [#allocation4], 768
    $region33: #{multi_head_attention.1} parent=1 // pred_fallthru
      _
    %3612 = vsyncpa [#allocation4], 1

</llo_original>
